<compile_context>
chip_gen: v7x
topology: tpu7x:2x2x1
jax: 0.10.0
libtpu: 0.0.40
codegen_flags: <defaults>
</compile_context>

<pallas_src>
import jax
import jax.numpy as jnp
from jax.experimental import pallas as pl
from jax.experimental.pallas import tpu as pltpu

FEATURE_DIM = 512        # embedding dim (module default)
NUM_CLASSES = 751        # Market-1501 identities (module default)
NUM_CLASSES_PAD = 768    # 6 * 128, lane-dense classifier width inside kernel
BACKBONE_C = 2048        # ResNet-50 layer4 output channels
EPS = 1e-12              # F.normalize default eps


def _round_up(x, m):
    return (x + m - 1) // m * m


# --------------------------------------------------------------------------
# Kernels
# --------------------------------------------------------------------------
def _embed_normalize(x_ref, w_emb_ref, b_emb_ref):
    """Linear(2048, feature_dim) + F.normalize(p=2, dim=1), f32 accumulation."""
    emb = jnp.dot(x_ref[...], w_emb_ref[...],
                  preferred_element_type=jnp.float32)          # (bn, 512) f32
    emb = emb + b_emb_ref[...].astype(jnp.float32)
    sq_norm = jnp.sum(emb * emb, axis=1, keepdims=True)        # (bn, 1)
    # x / max(||x||, eps)  ==  x * rsqrt(max(||x||^2, eps^2))
    inv = jax.lax.rsqrt(jnp.maximum(sq_norm, EPS * EPS))
    return emb * inv


def reid_feats_kernel(x_ref, w_emb_ref, b_emb_ref, feat_ref):
    """Features-only path: skips the classifier matmul and its weight DMA."""
    feat_ref[...] = _embed_normalize(x_ref, w_emb_ref, b_emb_ref).astype(
        feat_ref.dtype)


def reid_fused_kernel(x_ref, w_emb_ref, b_emb_ref, w_cls_ref, b_cls_ref,
                      feat_ref, logits_ref):
    """Fused path: one embedding matmul feeds both outputs."""
    feats = _embed_normalize(x_ref, w_emb_ref, b_emb_ref)      # (bn, 512) f32
    feat_ref[...] = feats.astype(feat_ref.dtype)
    logits = jnp.dot(feats.astype(w_cls_ref.dtype), w_cls_ref[...],
                     preferred_element_type=jnp.float32)
    logits = logits + b_cls_ref[...].astype(jnp.float32)
    logits_ref[...] = logits.astype(logits_ref.dtype)


# --------------------------------------------------------------------------
# Wrappers
# --------------------------------------------------------------------------
def _pool_pad_tile(x_nchw):
    """Global-average-pool (XLA, fused mean+cast to bf16), pad batch, pick tile."""
    n, c, h, w = x_nchw.shape
    assert c == BACKBONE_C
    # AdaptiveAvgPool2d((1,1)) + view(N, -1): mean over spatial dims, cast to
    # bf16 in the same expression so only a bf16 (N, 2048) intermediate exists.
    pooled = jnp.mean(x_nchw.astype(jnp.float32),
                      axis=(2, 3)).astype(jnp.bfloat16)         # (N, 2048) bf16

    # Batch tile: multiples of 16 (bf16 sublane packing), capped at 256 to fill
    # the 256-wide MXU on v6e/v7x.  For n_pad >= 512 this gives >= 2 grid
    # steps, letting the "parallel" axis shard across v7x's 2 TensorCores.
    bn = min(256, _round_up(max(n, 1), 16))
    n_pad = _round_up(n, bn)
    if n_pad != n:
        pooled = jnp.pad(pooled, ((0, n_pad - n), (0, 0)))      # pad in bf16
    return pooled, n, n_pad, bn


def reid_forward_both(x_nchw, w_emb, b_emb, w_cls, b_cls):
    """Returns (features, logits) from ONE fused kernel.

    x_nchw: (N, 2048, H, W) layer4 feature map (PyTorch NCHW convention).
    w_emb:  (2048, feature_dim) = embedding.weight.T
    b_emb:  (1, feature_dim)
    w_cls:  (feature_dim, 751)  = classifier.weight.T
    b_cls:  (1, 751)
    """
    pooled, n, n_pad, bn = _pool_pad_tile(x_nchw)
    grid = (n_pad // bn,)

    w_emb_b = w_emb.astype(jnp.bfloat16)
    b_emb_f = b_emb.astype(jnp.float32)
    pad_n = NUM_CLASSES_PAD - NUM_CLASSES
    w_cls_b = jnp.pad(w_cls, ((0, 0), (0, pad_n))).astype(jnp.bfloat16)
    b_cls_f = jnp.pad(b_cls.astype(jnp.float32), ((0, 0), (0, pad_n)))

    feats, logits = pl.pallas_call(
        reid_fused_kernel,
        out_shape=(
            jax.ShapeDtypeStruct((n_pad, FEATURE_DIM), jnp.bfloat16),
            jax.ShapeDtypeStruct((n_pad, NUM_CLASSES_PAD), jnp.bfloat16),
        ),
        grid_spec=pltpu.PrefetchScalarGridSpec(
            num_scalar_prefetch=0,
            grid=grid,
            in_specs=[
                pl.BlockSpec((bn, BACKBONE_C), lambda i: (i, 0)),
                # Weights/bias: constant block index -> DMA'd once, resident.
                pl.BlockSpec((BACKBONE_C, FEATURE_DIM), lambda i: (0, 0)),
                pl.BlockSpec((1, FEATURE_DIM), lambda i: (0, 0)),
                pl.BlockSpec((FEATURE_DIM, NUM_CLASSES_PAD), lambda i: (0, 0)),
                pl.BlockSpec((1, NUM_CLASSES_PAD), lambda i: (0, 0)),
            ],
            out_specs=[
                pl.BlockSpec((bn, FEATURE_DIM), lambda i: (i, 0)),
                pl.BlockSpec((bn, NUM_CLASSES_PAD), lambda i: (i, 0)),
            ],
        ),
        compiler_params=pltpu.CompilerParams(
            dimension_semantics=("parallel",)),
    )(pooled, w_emb_b, b_emb_f, w_cls_b, b_cls_f)

    return feats[:n], logits[:n, :NUM_CLASSES]


def reid_forward(x_nchw, w_emb, b_emb, w_cls, b_cls, return_features=False):
    """Mirrors ReIDFeatureExtractor.forward (module API)."""
    if not return_features:
        _, logits = reid_forward_both(x_nchw, w_emb, b_emb, w_cls, b_cls)
        return logits

    pooled, n, n_pad, bn = _pool_pad_tile(x_nchw)
    grid = (n_pad // bn,)
    w_emb_b = w_emb.astype(jnp.bfloat16)
    b_emb_f = b_emb.astype(jnp.float32)

    feats = pl.pallas_call(
        reid_feats_kernel,
        out_shape=jax.ShapeDtypeStruct((n_pad, FEATURE_DIM), jnp.bfloat16),
        grid_spec=pltpu.PrefetchScalarGridSpec(
            num_scalar_prefetch=0,
            grid=grid,
            in_specs=[
                pl.BlockSpec((bn, BACKBONE_C), lambda i: (i, 0)),
                pl.BlockSpec((BACKBONE_C, FEATURE_DIM), lambda i: (0, 0)),
                pl.BlockSpec((1, FEATURE_DIM), lambda i: (0, 0)),
            ],
            out_specs=pl.BlockSpec((bn, FEATURE_DIM), lambda i: (i, 0)),
        ),
        compiler_params=pltpu.CompilerParams(
            dimension_semantics=("parallel",)),
    )(pooled, w_emb_b, b_emb_f)
    return feats[:n]


def reid_reference(x_nchw, w_emb, b_emb, w_cls, b_cls, return_features=False):
    """Pure-JAX f32 reference of the module forward (for correctness check)."""
    pooled = jnp.mean(x_nchw.astype(jnp.float32), axis=(2, 3))
    emb = pooled @ w_emb + b_emb
    feats = emb / jnp.maximum(
        jnp.sqrt(jnp.sum(emb * emb, axis=1, keepdims=True)), EPS)
    if return_features:
        return feats
    return feats @ w_cls + b_cls


def init_params(key):
    """Deterministic synthetic parameters (shapes match the nn.Module)."""
    k1, k2, k3, k4 = jax.random.split(key, 4)
    # PyTorch Linear stores (out, in); we keep (in, out) = W.T for the kernel.
    w_emb = jax.random.normal(k1, (BACKBONE_C, FEATURE_DIM), jnp.float32) * 0.02
    b_emb = jax.random.normal(k2, (1, FEATURE_DIM), jnp.float32) * 0.02
    w_cls = jax.random.normal(k3, (FEATURE_DIM, NUM_CLASSES), jnp.float32) * 0.02
    b_cls = jax.random.normal(k4, (1, NUM_CLASSES), jnp.float32) * 0.02
    return w_emb, b_emb, w_cls, b_cls


if __name__ == "__main__":
    key = jax.random.PRNGKey(0)
    k_x, k_p = jax.random.split(key)

    # Small synthetic layer4 feature map: batch=2, C=2048, spatial 4x4 (NCHW).
    x = jax.random.normal(k_x, (2, BACKBONE_C, 4, 4), jnp.float32)
    w_emb, b_emb, w_cls, b_cls = init_params(k_p)

    fwd_both = jax.jit(reid_forward_both)
    feats, logits = fwd_both(x, w_emb, b_emb, w_cls, b_cls)   # fused kernel
    jax.block_until_ready(feats)
    jax.block_until_ready(logits)

    # Features-only path (skips classifier work entirely).
    fwd = jax.jit(reid_forward, static_argnames=("return_features",))
    feats_only = fwd(x, w_emb, b_emb, w_cls, b_cls, return_features=True)
    jax.block_until_ready(feats_only)

    assert logits.shape == (2, NUM_CLASSES)
    assert feats.shape == (2, FEATURE_DIM)
    assert feats_only.shape == (2, FEATURE_DIM)

    # Loose-tolerance check against the f32 reference (kernel uses bf16
    # weights/activations and bf16 output writeback).
    ref_logits = reid_reference(x, w_emb, b_emb, w_cls, b_cls)
    ref_feats = reid_reference(x, w_emb, b_emb, w_cls, b_cls,
                               return_features=True)
    feats_f32 = feats.astype(jnp.float32)
    feats_only_f32 = feats_only.astype(jnp.float32)
    logits_f32 = logits.astype(jnp.float32)
    assert jnp.allclose(feats_f32, ref_feats, rtol=5e-2, atol=1e-2), \
        float(jnp.max(jnp.abs(feats_f32 - ref_feats)))
    assert jnp.allclose(feats_only_f32, ref_feats, rtol=5e-2, atol=1e-2), \
        float(jnp.max(jnp.abs(feats_only_f32 - ref_feats)))
    assert jnp.allclose(logits_f32, ref_logits, rtol=5e-2, atol=1e-2), \
        float(jnp.max(jnp.abs(logits_f32 - ref_logits)))

    print("KERNEL_OK")
</pallas_src>

<mosaic_0001>
module attributes {stable_mosaic.version = 11 : i64} {
  func.func @reid_fused_kernel(%arg0: i32, %arg1: memref<16x2048xbf16, #tpu.memory_space<vmem>>, %arg2: memref<2048x512xbf16, #tpu.memory_space<vmem>>, %arg3: memref<1x512xf32, #tpu.memory_space<vmem>>, %arg4: memref<512x768xbf16, #tpu.memory_space<vmem>>, %arg5: memref<1x768xf32, #tpu.memory_space<vmem>>, %arg6: memref<16x512xbf16, #tpu.memory_space<vmem>>, %arg7: memref<16x768xbf16, #tpu.memory_space<vmem>>) attributes {dimension_semantics = [#tpu.dimension_semantics<parallel>], iteration_bounds = array<i64: 1>, scalar_prefetch = 0 : i64, scratch_operands = 0 : i64, tpu.core_type = #tpu.core_type<tc>, window_params = [{transform_indices = @transform_0, window_bounds = array<i64: 16, 2048>}, {pipeline_mode = #tpu.pipeline_mode<synchronous>, transform_indices = @transform_1, window_bounds = array<i64: 2048, 512>}, {pipeline_mode = #tpu.pipeline_mode<synchronous>, transform_indices = @transform_2, window_bounds = array<i64: 1, 512>}, {pipeline_mode = #tpu.pipeline_mode<synchronous>, transform_indices = @transform_3, window_bounds = array<i64: 512, 768>}, {pipeline_mode = #tpu.pipeline_mode<synchronous>, transform_indices = @transform_4, window_bounds = array<i64: 1, 768>}, {transform_indices = @transform_5, window_bounds = array<i64: 16, 512>}, {transform_indices = @transform_6, window_bounds = array<i64: 16, 768>}]} {
    %c0 = arith.constant 0 : index
    %c0_0 = arith.constant 0 : index
    %0 = vector.load %arg1[%c0, %c0_0] : memref<16x2048xbf16, #tpu.memory_space<vmem>>, vector<16x2048xbf16>
    %c0_1 = arith.constant 0 : index
    %c0_2 = arith.constant 0 : index
    %1 = vector.load %arg2[%c0_1, %c0_2] : memref<2048x512xbf16, #tpu.memory_space<vmem>>, vector<2048x512xbf16>
    %cst = arith.constant dense<0.000000e+00> : vector<16x512xf32>
    %2 = tpu.matmul %0, %1, %cst {dimension_numbers = #tpu.dot_dimension_numbers<[1], [0], [0], [1], [0, 0, 1, 1], [], []>} : vector<16x2048xbf16>, vector<2048x512xbf16>, vector<16x512xf32> -> vector<16x512xf32>
    %c0_3 = arith.constant 0 : index
    %c0_4 = arith.constant 0 : index
    %3 = vector.load %arg3[%c0_3, %c0_4] : memref<1x512xf32, #tpu.memory_space<vmem>>, vector<1x512xf32>
    %4 = vector.broadcast %3 : vector<1x512xf32> to vector<16x512xf32>
    %5 = arith.addf %2, %4 : vector<16x512xf32>
    %6 = arith.mulf %5, %5 : vector<16x512xf32>
    %cst_5 = arith.constant dense<0.000000e+00> : vector<16xf32>
    %7 = vector.multi_reduction <add>, %6, %cst_5 [1] : vector<16x512xf32> to vector<16xf32>
    %8 = vector.shape_cast %7 : vector<16xf32> to vector<16x1xf32>
    %cst_6 = arith.constant 1.000000e-24 : f32
    %9 = vector.broadcast %cst_6 : f32 to vector<16x1xf32>
    %10 = arith.maximumf %8, %9 : vector<16x1xf32>
    %11 = math.rsqrt %10 : vector<16x1xf32>
    %12 = vector.broadcast %11 : vector<16x1xf32> to vector<16x512xf32>
    %13 = arith.mulf %5, %12 : vector<16x512xf32>
    %14 = arith.truncf %13 : vector<16x512xf32> to vector<16x512xbf16>
    %c0_7 = arith.constant 0 : index
    %c0_8 = arith.constant 0 : index
    %15 = vector.load %arg6[%c0_7, %c0_8] : memref<16x512xbf16, #tpu.memory_space<vmem>>, vector<16x512xbf16>
    tpu.vector_store %arg6[%c0_7, %c0_8], %14 {strides = array<i32>} : memref<16x512xbf16, #tpu.memory_space<vmem>>, vector<16x512xbf16>,
    %16 = arith.truncf %13 : vector<16x512xf32> to vector<16x512xbf16>
    %c0_9 = arith.constant 0 : index
    %c0_10 = arith.constant 0 : index
    %17 = vector.load %arg4[%c0_9, %c0_10] : memref<512x768xbf16, #tpu.memory_space<vmem>>, vector<512x768xbf16>
    %cst_11 = arith.constant dense<0.000000e+00> : vector<16x768xf32>
    %18 = tpu.matmul %16, %17, %cst_11 {dimension_numbers = #tpu.dot_dimension_numbers<[1], [0], [0], [1], [0, 0, 1, 1], [], []>} : vector<16x512xbf16>, vector<512x768xbf16>, vector<16x768xf32> -> vector<16x768xf32>
    %c0_12 = arith.constant 0 : index
    %c0_13 = arith.constant 0 : index
    %19 = vector.load %arg5[%c0_12, %c0_13] : memref<1x768xf32, #tpu.memory_space<vmem>>, vector<1x768xf32>
    %20 = vector.broadcast %19 : vector<1x768xf32> to vector<16x768xf32>
    %21 = arith.addf %18, %20 : vector<16x768xf32>
    %22 = arith.truncf %21 : vector<16x768xf32> to vector<16x768xbf16>
    %c0_14 = arith.constant 0 : index
    %c0_15 = arith.constant 0 : index
    %23 = vector.load %arg7[%c0_14, %c0_15] : memref<16x768xbf16, #tpu.memory_space<vmem>>, vector<16x768xbf16>
    tpu.vector_store %arg7[%c0_14, %c0_15], %22 {strides = array<i32>} : memref<16x768xbf16, #tpu.memory_space<vmem>>, vector<16x768xbf16>,
    return
  }
  func.func @transform_0(%arg0: i32) -> (i32, i32) {
    %c0_i32 = arith.constant 0 : i32
    %c0_i32_0 = arith.constant 0 : i32
    return %arg0, %c0_i32 : i32, i32
  }
  func.func @transform_1(%arg0: i32) -> (i32, i32) {
    %c0_i32 = arith.constant 0 : i32
    %c0_i32_0 = arith.constant 0 : i32
    %c0_i32_1 = arith.constant 0 : i32
    return %c0_i32, %c0_i32_0 : i32, i32
  }
  func.func @transform_2(%arg0: i32) -> (i32, i32) {
    %c0_i32 = arith.constant 0 : i32
    %c0_i32_0 = arith.constant 0 : i32
    %c0_i32_1 = arith.constant 0 : i32
    return %c0_i32, %c0_i32_0 : i32, i32
  }
  func.func @transform_3(%arg0: i32) -> (i32, i32) {
    %c0_i32 = arith.constant 0 : i32
    %c0_i32_0 = arith.constant 0 : i32
    %c0_i32_1 = arith.constant 0 : i32
    return %c0_i32, %c0_i32_0 : i32, i32
  }
  func.func @transform_4(%arg0: i32) -> (i32, i32) {
    %c0_i32 = arith.constant 0 : i32
    %c0_i32_0 = arith.constant 0 : i32
    %c0_i32_1 = arith.constant 0 : i32
    return %c0_i32, %c0_i32_0 : i32, i32
  }
  func.func @transform_5(%arg0: i32) -> (i32, i32) {
    %c0_i32 = arith.constant 0 : i32
    %c0_i32_0 = arith.constant 0 : i32
    return %arg0, %c0_i32 : i32, i32
  }
  func.func @transform_6(%arg0: i32) -> (i32, i32) {
    %c0_i32 = arith.constant 0 : i32
    %c0_i32_0 = arith.constant 0 : i32
    return %arg0, %c0_i32 : i32, i32
  }
}

</mosaic_0001>

<llo_original>
// kernel: reid_forward_both.1
$region0: #{reid_forward_both.1}
  #allocation0 [shape = 'u32[]', space=smem, size = 0x4, offset = 0x4, fixed_abs, tag = 'smem constant byte address 0x4 - core index']
  #allocation1 [shape = 'u32[144,128]{1,0:T(1,128)}', space=vmem, size = 0x12000, scoped, tag = 'internal scratch']
  %s0 = inlined_call_operand.vmem [shape: bf16[16,2048], index: 0, kind: input, shape index: {}]
  %s1 = inlined_call_operand.vmem [shape: bf16[2048,512], index: 1, kind: input, shape index: {}]
  %s2 = inlined_call_operand.vmem [shape: f32[1,512], index: 2, kind: input, shape index: {}]
  %s3 = inlined_call_operand.vmem [shape: bf16[512,768], index: 3, kind: input, shape index: {}]
  %s4 = inlined_call_operand.vmem [shape: f32[1,768], index: 4, kind: input, shape index: {}]
  %s5 = inlined_call_operand.vmem [shape: bf16[16,512], index: 5, kind: output, shape index: {0}]
  %s6 = inlined_call_operand.vmem [shape: bf16[16,768], index: 6, kind: output, shape index: {1}]
  %7 = xla_tuple %s5, %s6
  %s8 = sld [smem:[#allocation0]]
  $region38: #{reid_forward_both.1} parent=0
    _
  %s10 = ssub.s32 1, %s8
  %s11 = scalar_select 0, %s10, %s8
  // Predicated region
  $region2: #{reid_forward_both.1} parent=0 // pred_check
    _
  $region3: #{reid_forward_both.1} parent=0 // pred_check_branch
    %13 = sbr.rel (0) target = $region5
  $region4: #{reid_forward_both.1} parent=0 // pred_region
    _
  $region5: #{reid_forward_both.1} parent=0 // pred_fallthru
    _
  // Predicated region
  $region6: #{reid_forward_both.1} parent=0 // pred_check
    _
  $region7: #{reid_forward_both.1} parent=0 // pred_check_branch
    %15 = sbr.rel (0) target = $region9
  $region8: #{reid_forward_both.1} parent=0 // pred_region
    _
  $region9: #{reid_forward_both.1} parent=0 // pred_fallthru
    _
  // Predicated region
  $region10: #{reid_forward_both.1} parent=0 // pred_check
    _
  $region11: #{reid_forward_both.1} parent=0 // pred_check_branch
    %17 = sbr.rel (0) target = $region13
  $region12: #{reid_forward_both.1} parent=0 // pred_region
    _
  $region13: #{reid_forward_both.1} parent=0 // pred_fallthru
    _
  // Predicated region
  $region14: #{reid_forward_both.1} parent=0 // pred_check
    _
  $region15: #{reid_forward_both.1} parent=0 // pred_check_branch
    %19 = sbr.rel (0) target = $region17
  $region16: #{reid_forward_both.1} parent=0 // pred_region
    _
  $region17: #{reid_forward_both.1} parent=0 // pred_fallthru
    _
  // Predicated region
  $region18: #{reid_forward_both.1} parent=0 // pred_check
    _
  $region19: #{reid_forward_both.1} parent=0 // pred_check_branch
    %21 = sbr.rel (0) target = $region21
  $region20: #{reid_forward_both.1} parent=0 // pred_region
    _
  $region21: #{reid_forward_both.1} parent=0 // pred_fallthru
    _
  %v22 = vld [vmem:[%s0] sm:$0xff]
  %v23 = vld [vmem:[%s0 + $0x8] sm:$0xff]
  %v24 = vld [vmem:[%s0 + $0x10] sm:$0xff]
  %v25 = vld [vmem:[%s0 + $0x18] sm:$0xff]
  %v26 = vld [vmem:[%s0 + $0x20] sm:$0xff]
  %v27 = vld [vmem:[%s0 + $0x28] sm:$0xff]
  %v28 = vld [vmem:[%s0 + $0x30] sm:$0xff]
  %v29 = vld [vmem:[%s0 + $0x38] sm:$0xff]
  %v30 = vld [vmem:[%s0 + $0x40] sm:$0xff]
  %v31 = vld [vmem:[%s0 + $0x48] sm:$0xff]
  %v32 = vld [vmem:[%s0 + $0x50] sm:$0xff]
  %v33 = vld [vmem:[%s0 + $0x58] sm:$0xff]
  %v34 = vld [vmem:[%s0 + $0x60] sm:$0xff]
  %v35 = vld [vmem:[%s0 + $0x68] sm:$0xff]
  %v36 = vld [vmem:[%s0 + $0x70] sm:$0xff]
  %v37 = vld [vmem:[%s0 + $0x78] sm:$0xff]
  %v38 = vld [vmem:[%s1] sm:$0xff]
  %v39 = vld [vmem:[%s1 + $0x8] sm:$0xff]
  %v40 = vld [vmem:[%s1 + $0x10] sm:$0xff]
  %v41 = vld [vmem:[%s1 + $0x18] sm:$0xff]
  %v42 = vld [vmem:[%s1 + $0x20] sm:$0xff]
  %v43 = vld [vmem:[%s1 + $0x28] sm:$0xff]
  %v44 = vld [vmem:[%s1 + $0x30] sm:$0xff]
  %v45 = vld [vmem:[%s1 + $0x38] sm:$0xff]
  %v46 = vld [vmem:[%s1 + $0x40] sm:$0xff]
  %v47 = vld [vmem:[%s1 + $0x48] sm:$0xff]
  %v48 = vld [vmem:[%s1 + $0x50] sm:$0xff]
  %v49 = vld [vmem:[%s1 + $0x58] sm:$0xff]
  %v50 = vld [vmem:[%s1 + $0x60] sm:$0xff]
  %v51 = vld [vmem:[%s1 + $0x68] sm:$0xff]
  %v52 = vld [vmem:[%s1 + $0x70] sm:$0xff]
  %v53 = vld [vmem:[%s1 + $0x78] sm:$0xff]
  %v54 = vld [vmem:[%s1 + $0x80] sm:$0xff]
  %v55 = vld [vmem:[%s1 + $0x88] sm:$0xff]
  %v56 = vld [vmem:[%s1 + $0x90] sm:$0xff]
  %v57 = vld [vmem:[%s1 + $0x98] sm:$0xff]
  %v58 = vld [vmem:[%s1 + $0xa0] sm:$0xff]
  %v59 = vld [vmem:[%s1 + $0xa8] sm:$0xff]
  %v60 = vld [vmem:[%s1 + $0xb0] sm:$0xff]
  %v61 = vld [vmem:[%s1 + $0xb8] sm:$0xff]
  %v62 = vld [vmem:[%s1 + $0xc0] sm:$0xff]
  %v63 = vld [vmem:[%s1 + $0xc8] sm:$0xff]
  %v64 = vld [vmem:[%s1 + $0xd0] sm:$0xff]
  %v65 = vld [vmem:[%s1 + $0xd8] sm:$0xff]
  %v66 = vld [vmem:[%s1 + $0xe0] sm:$0xff]
  %v67 = vld [vmem:[%s1 + $0xe8] sm:$0xff]
  %v68 = vld [vmem:[%s1 + $0xf0] sm:$0xff]
  %v69 = vld [vmem:[%s1 + $0xf8] sm:$0xff]
  %v70 = vld [vmem:[%s1 + $0x100] sm:$0xff]
  %v71 = vld [vmem:[%s1 + $0x108] sm:$0xff]
  %v72 = vld [vmem:[%s1 + $0x110] sm:$0xff]
  %v73 = vld [vmem:[%s1 + $0x118] sm:$0xff]
  %v74 = vld [vmem:[%s1 + $0x120] sm:$0xff]
  %v75 = vld [vmem:[%s1 + $0x128] sm:$0xff]
  %v76 = vld [vmem:[%s1 + $0x130] sm:$0xff]
  %v77 = vld [vmem:[%s1 + $0x138] sm:$0xff]
  %v78 = vld [vmem:[%s1 + $0x140] sm:$0xff]
  %v79 = vld [vmem:[%s1 + $0x148] sm:$0xff]
  %v80 = vld [vmem:[%s1 + $0x150] sm:$0xff]
  %v81 = vld [vmem:[%s1 + $0x158] sm:$0xff]
  %v82 = vld [vmem:[%s1 + $0x160] sm:$0xff]
  %v83 = vld [vmem:[%s1 + $0x168] sm:$0xff]
  %v84 = vld [vmem:[%s1 + $0x170] sm:$0xff]
  %v85 = vld [vmem:[%s1 + $0x178] sm:$0xff]
  %v86 = vld [vmem:[%s1 + $0x180] sm:$0xff]
  %v87 = vld [vmem:[%s1 + $0x188] sm:$0xff]
  %v88 = vld [vmem:[%s1 + $0x190] sm:$0xff]
  %v89 = vld [vmem:[%s1 + $0x198] sm:$0xff]
  %v90 = vld [vmem:[%s1 + $0x1a0] sm:$0xff]
  %v91 = vld [vmem:[%s1 + $0x1a8] sm:$0xff]
  %v92 = vld [vmem:[%s1 + $0x1b0] sm:$0xff]
  %v93 = vld [vmem:[%s1 + $0x1b8] sm:$0xff]
  %v94 = vld [vmem:[%s1 + $0x1c0] sm:$0xff]
  %v95 = vld [vmem:[%s1 + $0x1c8] sm:$0xff]
  %v96 = vld [vmem:[%s1 + $0x1d0] sm:$0xff]
  %v97 = vld [vmem:[%s1 + $0x1d8] sm:$0xff]
  %v98 = vld [vmem:[%s1 + $0x1e0] sm:$0xff]
  %v99 = vld [vmem:[%s1 + $0x1e8] sm:$0xff]
  %v100 = vld [vmem:[%s1 + $0x1f0] sm:$0xff]
  %v101 = vld [vmem:[%s1 + $0x1f8] sm:$0xff]
  %v102 = vld [vmem:[%s1 + $0x200] sm:$0xff]
  %v103 = vld [vmem:[%s1 + $0x208] sm:$0xff]
  %v104 = vld [vmem:[%s1 + $0x210] sm:$0xff]
  %v105 = vld [vmem:[%s1 + $0x218] sm:$0xff]
  %v106 = vld [vmem:[%s1 + $0x220] sm:$0xff]
  %v107 = vld [vmem:[%s1 + $0x228] sm:$0xff]
  %v108 = vld [vmem:[%s1 + $0x230] sm:$0xff]
  %v109 = vld [vmem:[%s1 + $0x238] sm:$0xff]
  %v110 = vld [vmem:[%s1 + $0x240] sm:$0xff]
  %v111 = vld [vmem:[%s1 + $0x248] sm:$0xff]
  %v112 = vld [vmem:[%s1 + $0x250] sm:$0xff]
  %v113 = vld [vmem:[%s1 + $0x258] sm:$0xff]
  %v114 = vld [vmem:[%s1 + $0x260] sm:$0xff]
  %v115 = vld [vmem:[%s1 + $0x268] sm:$0xff]
  %v116 = vld [vmem:[%s1 + $0x270] sm:$0xff]
  %v117 = vld [vmem:[%s1 + $0x278] sm:$0xff]
  %v118 = vld [vmem:[%s1 + $0x280] sm:$0xff]
  %v119 = vld [vmem:[%s1 + $0x288] sm:$0xff]
  %v120 = vld [vmem:[%s1 + $0x290] sm:$0xff]
  %v121 = vld [vmem:[%s1 + $0x298] sm:$0xff]
  %v122 = vld [vmem:[%s1 + $0x2a0] sm:$0xff]
  %v123 = vld [vmem:[%s1 + $0x2a8] sm:$0xff]
  %v124 = vld [vmem:[%s1 + $0x2b0] sm:$0xff]
  %v125 = vld [vmem:[%s1 + $0x2b8] sm:$0xff]
  %v126 = vld [vmem:[%s1 + $0x2c0] sm:$0xff]
  %v127 = vld [vmem:[%s1 + $0x2c8] sm:$0xff]
  %v128 = vld [vmem:[%s1 + $0x2d0] sm:$0xff]
  %v129 = vld [vmem:[%s1 + $0x2d8] sm:$0xff]
  %v130 = vld [vmem:[%s1 + $0x2e0] sm:$0xff]
  %v131 = vld [vmem:[%s1 + $0x2e8] sm:$0xff]
  %v132 = vld [vmem:[%s1 + $0x2f0] sm:$0xff]
  %v133 = vld [vmem:[%s1 + $0x2f8] sm:$0xff]
  %v134 = vld [vmem:[%s1 + $0x300] sm:$0xff]
  %v135 = vld [vmem:[%s1 + $0x308] sm:$0xff]
  %v136 = vld [vmem:[%s1 + $0x310] sm:$0xff]
  %v137 = vld [vmem:[%s1 + $0x318] sm:$0xff]
  %v138 = vld [vmem:[%s1 + $0x320] sm:$0xff]
  %v139 = vld [vmem:[%s1 + $0x328] sm:$0xff]
  %v140 = vld [vmem:[%s1 + $0x330] sm:$0xff]
  %v141 = vld [vmem:[%s1 + $0x338] sm:$0xff]
  %v142 = vld [vmem:[%s1 + $0x340] sm:$0xff]
  %v143 = vld [vmem:[%s1 + $0x348] sm:$0xff]
  %v144 = vld [vmem:[%s1 + $0x350] sm:$0xff]
  %v145 = vld [vmem:[%s1 + $0x358] sm:$0xff]
  %v146 = vld [vmem:[%s1 + $0x360] sm:$0xff]
  %v147 = vld [vmem:[%s1 + $0x368] sm:$0xff]
  %v148 = vld [vmem:[%s1 + $0x370] sm:$0xff]
  %v149 = vld [vmem:[%s1 + $0x378] sm:$0xff]
  %v150 = vld [vmem:[%s1 + $0x380] sm:$0xff]
  %v151 = vld [vmem:[%s1 + $0x388] sm:$0xff]
  %v152 = vld [vmem:[%s1 + $0x390] sm:$0xff]
  %v153 = vld [vmem:[%s1 + $0x398] sm:$0xff]
  %v154 = vld [vmem:[%s1 + $0x3a0] sm:$0xff]
  %v155 = vld [vmem:[%s1 + $0x3a8] sm:$0xff]
  %v156 = vld [vmem:[%s1 + $0x3b0] sm:$0xff]
  %v157 = vld [vmem:[%s1 + $0x3b8] sm:$0xff]
  %v158 = vld [vmem:[%s1 + $0x3c0] sm:$0xff]
  %v159 = vld [vmem:[%s1 + $0x3c8] sm:$0xff]
  %v160 = vld [vmem:[%s1 + $0x3d0] sm:$0xff]
  %v161 = vld [vmem:[%s1 + $0x3d8] sm:$0xff]
  %v162 = vld [vmem:[%s1 + $0x3e0] sm:$0xff]
  %v163 = vld [vmem:[%s1 + $0x3e8] sm:$0xff]
  %v164 = vld [vmem:[%s1 + $0x3f0] sm:$0xff]
  %v165 = vld [vmem:[%s1 + $0x3f8] sm:$0xff]
  %v166 = vld [vmem:[%s1 + $0x400] sm:$0xff]
  %v167 = vld [vmem:[%s1 + $0x408] sm:$0xff]
  %v168 = vld [vmem:[%s1 + $0x410] sm:$0xff]
  %v169 = vld [vmem:[%s1 + $0x418] sm:$0xff]
  %v170 = vld [vmem:[%s1 + $0x420] sm:$0xff]
  %v171 = vld [vmem:[%s1 + $0x428] sm:$0xff]
  %v172 = vld [vmem:[%s1 + $0x430] sm:$0xff]
  %v173 = vld [vmem:[%s1 + $0x438] sm:$0xff]
  %v174 = vld [vmem:[%s1 + $0x440] sm:$0xff]
  %v175 = vld [vmem:[%s1 + $0x448] sm:$0xff]
  %v176 = vld [vmem:[%s1 + $0x450] sm:$0xff]
  %v177 = vld [vmem:[%s1 + $0x458] sm:$0xff]
  %v178 = vld [vmem:[%s1 + $0x460] sm:$0xff]
  %v179 = vld [vmem:[%s1 + $0x468] sm:$0xff]
  %v180 = vld [vmem:[%s1 + $0x470] sm:$0xff]
  %v181 = vld [vmem:[%s1 + $0x478] sm:$0xff]
  %v182 = vld [vmem:[%s1 + $0x480] sm:$0xff]
  %v183 = vld [vmem:[%s1 + $0x488] sm:$0xff]
  %v184 = vld [vmem:[%s1 + $0x490] sm:$0xff]
  %v185 = vld [vmem:[%s1 + $0x498] sm:$0xff]
  %v186 = vld [vmem:[%s1 + $0x4a0] sm:$0xff]
  %v187 = vld [vmem:[%s1 + $0x4a8] sm:$0xff]
  %v188 = vld [vmem:[%s1 + $0x4b0] sm:$0xff]
  %v189 = vld [vmem:[%s1 + $0x4b8] sm:$0xff]
  %v190 = vld [vmem:[%s1 + $0x4c0] sm:$0xff]
  %v191 = vld [vmem:[%s1 + $0x4c8] sm:$0xff]
  %v192 = vld [vmem:[%s1 + $0x4d0] sm:$0xff]
  %v193 = vld [vmem:[%s1 + $0x4d8] sm:$0xff]
  %v194 = vld [vmem:[%s1 + $0x4e0] sm:$0xff]
  %v195 = vld [vmem:[%s1 + $0x4e8] sm:$0xff]
  %v196 = vld [vmem:[%s1 + $0x4f0] sm:$0xff]
  %v197 = vld [vmem:[%s1 + $0x4f8] sm:$0xff]
  %v198 = vld [vmem:[%s1 + $0x500] sm:$0xff]
  %v199 = vld [vmem:[%s1 + $0x508] sm:$0xff]
  %v200 = vld [vmem:[%s1 + $0x510] sm:$0xff]
  %v201 = vld [vmem:[%s1 + $0x518] sm:$0xff]
  %v202 = vld [vmem:[%s1 + $0x520] sm:$0xff]
  %v203 = vld [vmem:[%s1 + $0x528] sm:$0xff]
  %v204 = vld [vmem:[%s1 + $0x530] sm:$0xff]
  %v205 = vld [vmem:[%s1 + $0x538] sm:$0xff]
  %v206 = vld [vmem:[%s1 + $0x540] sm:$0xff]
  %v207 = vld [vmem:[%s1 + $0x548] sm:$0xff]
  %v208 = vld [vmem:[%s1 + $0x550] sm:$0xff]
  %v209 = vld [vmem:[%s1 + $0x558] sm:$0xff]
  %v210 = vld [vmem:[%s1 + $0x560] sm:$0xff]
  %v211 = vld [vmem:[%s1 + $0x568] sm:$0xff]
  %v212 = vld [vmem:[%s1 + $0x570] sm:$0xff]
  %v213 = vld [vmem:[%s1 + $0x578] sm:$0xff]
  %v214 = vld [vmem:[%s1 + $0x580] sm:$0xff]
  %v215 = vld [vmem:[%s1 + $0x588] sm:$0xff]
  %v216 = vld [vmem:[%s1 + $0x590] sm:$0xff]
  %v217 = vld [vmem:[%s1 + $0x598] sm:$0xff]
  %v218 = vld [vmem:[%s1 + $0x5a0] sm:$0xff]
  %v219 = vld [vmem:[%s1 + $0x5a8] sm:$0xff]
  %v220 = vld [vmem:[%s1 + $0x5b0] sm:$0xff]
  %v221 = vld [vmem:[%s1 + $0x5b8] sm:$0xff]
  %v222 = vld [vmem:[%s1 + $0x5c0] sm:$0xff]
  %v223 = vld [vmem:[%s1 + $0x5c8] sm:$0xff]
  %v224 = vld [vmem:[%s1 + $0x5d0] sm:$0xff]
  %v225 = vld [vmem:[%s1 + $0x5d8] sm:$0xff]
  %v226 = vld [vmem:[%s1 + $0x5e0] sm:$0xff]
  %v227 = vld [vmem:[%s1 + $0x5e8] sm:$0xff]
  %v228 = vld [vmem:[%s1 + $0x5f0] sm:$0xff]
  %v229 = vld [vmem:[%s1 + $0x5f8] sm:$0xff]
  %v230 = vld [vmem:[%s1 + $0x600] sm:$0xff]
  %v231 = vld [vmem:[%s1 + $0x608] sm:$0xff]
  %v232 = vld [vmem:[%s1 + $0x610] sm:$0xff]
  %v233 = vld [vmem:[%s1 + $0x618] sm:$0xff]
  %v234 = vld [vmem:[%s1 + $0x620] sm:$0xff]
  %v235 = vld [vmem:[%s1 + $0x628] sm:$0xff]
  %v236 = vld [vmem:[%s1 + $0x630] sm:$0xff]
  %v237 = vld [vmem:[%s1 + $0x638] sm:$0xff]
  %v238 = vld [vmem:[%s1 + $0x640] sm:$0xff]
  %v239 = vld [vmem:[%s1 + $0x648] sm:$0xff]
  %v240 = vld [vmem:[%s1 + $0x650] sm:$0xff]
  %v241 = vld [vmem:[%s1 + $0x658] sm:$0xff]
  %v242 = vld [vmem:[%s1 + $0x660] sm:$0xff]
  %v243 = vld [vmem:[%s1 + $0x668] sm:$0xff]
  %v244 = vld [vmem:[%s1 + $0x670] sm:$0xff]
  %v245 = vld [vmem:[%s1 + $0x678] sm:$0xff]
  %v246 = vld [vmem:[%s1 + $0x680] sm:$0xff]
  %v247 = vld [vmem:[%s1 + $0x688] sm:$0xff]
  %v248 = vld [vmem:[%s1 + $0x690] sm:$0xff]
  %v249 = vld [vmem:[%s1 + $0x698] sm:$0xff]
  %v250 = vld [vmem:[%s1 + $0x6a0] sm:$0xff]
  %v251 = vld [vmem:[%s1 + $0x6a8] sm:$0xff]
  %v252 = vld [vmem:[%s1 + $0x6b0] sm:$0xff]
  %v253 = vld [vmem:[%s1 + $0x6b8] sm:$0xff]
  %v254 = vld [vmem:[%s1 + $0x6c0] sm:$0xff]
  %v255 = vld [vmem:[%s1 + $0x6c8] sm:$0xff]
  %v256 = vld [vmem:[%s1 + $0x6d0] sm:$0xff]
  %v257 = vld [vmem:[%s1 + $0x6d8] sm:$0xff]
  %v258 = vld [vmem:[%s1 + $0x6e0] sm:$0xff]
  %v259 = vld [vmem:[%s1 + $0x6e8] sm:$0xff]
  %v260 = vld [vmem:[%s1 + $0x6f0] sm:$0xff]
  %v261 = vld [vmem:[%s1 + $0x6f8] sm:$0xff]
  %v262 = vld [vmem:[%s1 + $0x700] sm:$0xff]
  %v263 = vld [vmem:[%s1 + $0x708] sm:$0xff]
  %v264 = vld [vmem:[%s1 + $0x710] sm:$0xff]
  %v265 = vld [vmem:[%s1 + $0x718] sm:$0xff]
  %v266 = vld [vmem:[%s1 + $0x720] sm:$0xff]
  %v267 = vld [vmem:[%s1 + $0x728] sm:$0xff]
  %v268 = vld [vmem:[%s1 + $0x730] sm:$0xff]
  %v269 = vld [vmem:[%s1 + $0x738] sm:$0xff]
  %v270 = vld [vmem:[%s1 + $0x740] sm:$0xff]
  %v271 = vld [vmem:[%s1 + $0x748] sm:$0xff]
  %v272 = vld [vmem:[%s1 + $0x750] sm:$0xff]
  %v273 = vld [vmem:[%s1 + $0x758] sm:$0xff]
  %v274 = vld [vmem:[%s1 + $0x760] sm:$0xff]
  %v275 = vld [vmem:[%s1 + $0x768] sm:$0xff]
  %v276 = vld [vmem:[%s1 + $0x770] sm:$0xff]
  %v277 = vld [vmem:[%s1 + $0x778] sm:$0xff]
  %v278 = vld [vmem:[%s1 + $0x780] sm:$0xff]
  %v279 = vld [vmem:[%s1 + $0x788] sm:$0xff]
  %v280 = vld [vmem:[%s1 + $0x790] sm:$0xff]
  %v281 = vld [vmem:[%s1 + $0x798] sm:$0xff]
  %v282 = vld [vmem:[%s1 + $0x7a0] sm:$0xff]
  %v283 = vld [vmem:[%s1 + $0x7a8] sm:$0xff]
  %v284 = vld [vmem:[%s1 + $0x7b0] sm:$0xff]
  %v285 = vld [vmem:[%s1 + $0x7b8] sm:$0xff]
  %v286 = vld [vmem:[%s1 + $0x7c0] sm:$0xff]
  %v287 = vld [vmem:[%s1 + $0x7c8] sm:$0xff]
  %v288 = vld [vmem:[%s1 + $0x7d0] sm:$0xff]
  %v289 = vld [vmem:[%s1 + $0x7d8] sm:$0xff]
  %v290 = vld [vmem:[%s1 + $0x7e0] sm:$0xff]
  %v291 = vld [vmem:[%s1 + $0x7e8] sm:$0xff]
  %v292 = vld [vmem:[%s1 + $0x7f0] sm:$0xff]
  %v293 = vld [vmem:[%s1 + $0x7f8] sm:$0xff]
  %v294 = vld [vmem:[%s1 + $0x800] sm:$0xff]
  %v295 = vld [vmem:[%s1 + $0x808] sm:$0xff]
  %v296 = vld [vmem:[%s1 + $0x810] sm:$0xff]
  %v297 = vld [vmem:[%s1 + $0x818] sm:$0xff]
  %v298 = vld [vmem:[%s1 + $0x820] sm:$0xff]
  %v299 = vld [vmem:[%s1 + $0x828] sm:$0xff]
  %v300 = vld [vmem:[%s1 + $0x830] sm:$0xff]
  %v301 = vld [vmem:[%s1 + $0x838] sm:$0xff]
  %v302 = vld [vmem:[%s1 + $0x840] sm:$0xff]
  %v303 = vld [vmem:[%s1 + $0x848] sm:$0xff]
  %v304 = vld [vmem:[%s1 + $0x850] sm:$0xff]
  %v305 = vld [vmem:[%s1 + $0x858] sm:$0xff]
  %v306 = vld [vmem:[%s1 + $0x860] sm:$0xff]
  %v307 = vld [vmem:[%s1 + $0x868] sm:$0xff]
  %v308 = vld [vmem:[%s1 + $0x870] sm:$0xff]
  %v309 = vld [vmem:[%s1 + $0x878] sm:$0xff]
  %v310 = vld [vmem:[%s1 + $0x880] sm:$0xff]
  %v311 = vld [vmem:[%s1 + $0x888] sm:$0xff]
  %v312 = vld [vmem:[%s1 + $0x890] sm:$0xff]
  %v313 = vld [vmem:[%s1 + $0x898] sm:$0xff]
  %v314 = vld [vmem:[%s1 + $0x8a0] sm:$0xff]
  %v315 = vld [vmem:[%s1 + $0x8a8] sm:$0xff]
  %v316 = vld [vmem:[%s1 + $0x8b0] sm:$0xff]
  %v317 = vld [vmem:[%s1 + $0x8b8] sm:$0xff]
  %v318 = vld [vmem:[%s1 + $0x8c0] sm:$0xff]
  %v319 = vld [vmem:[%s1 + $0x8c8] sm:$0xff]
  %v320 = vld [vmem:[%s1 + $0x8d0] sm:$0xff]
  %v321 = vld [vmem:[%s1 + $0x8d8] sm:$0xff]
  %v322 = vld [vmem:[%s1 + $0x8e0] sm:$0xff]
  %v323 = vld [vmem:[%s1 + $0x8e8] sm:$0xff]
  %v324 = vld [vmem:[%s1 + $0x8f0] sm:$0xff]
  %v325 = vld [vmem:[%s1 + $0x8f8] sm:$0xff]
  %v326 = vld [vmem:[%s1 + $0x900] sm:$0xff]
  %v327 = vld [vmem:[%s1 + $0x908] sm:$0xff]
  %v328 = vld [vmem:[%s1 + $0x910] sm:$0xff]
  %v329 = vld [vmem:[%s1 + $0x918] sm:$0xff]
  %v330 = vld [vmem:[%s1 + $0x920] sm:$0xff]
  %v331 = vld [vmem:[%s1 + $0x928] sm:$0xff]
  %v332 = vld [vmem:[%s1 + $0x930] sm:$0xff]
  %v333 = vld [vmem:[%s1 + $0x938] sm:$0xff]
  %v334 = vld [vmem:[%s1 + $0x940] sm:$0xff]
  %v335 = vld [vmem:[%s1 + $0x948] sm:$0xff]
  %v336 = vld [vmem:[%s1 + $0x950] sm:$0xff]
  %v337 = vld [vmem:[%s1 + $0x958] sm:$0xff]
  %v338 = vld [vmem:[%s1 + $0x960] sm:$0xff]
  %v339 = vld [vmem:[%s1 + $0x968] sm:$0xff]
  %v340 = vld [vmem:[%s1 + $0x970] sm:$0xff]
  %v341 = vld [vmem:[%s1 + $0x978] sm:$0xff]
  %v342 = vld [vmem:[%s1 + $0x980] sm:$0xff]
  %v343 = vld [vmem:[%s1 + $0x988] sm:$0xff]
  %v344 = vld [vmem:[%s1 + $0x990] sm:$0xff]
  %v345 = vld [vmem:[%s1 + $0x998] sm:$0xff]
  %v346 = vld [vmem:[%s1 + $0x9a0] sm:$0xff]
  %v347 = vld [vmem:[%s1 + $0x9a8] sm:$0xff]
  %v348 = vld [vmem:[%s1 + $0x9b0] sm:$0xff]
  %v349 = vld [vmem:[%s1 + $0x9b8] sm:$0xff]
  %v350 = vld [vmem:[%s1 + $0x9c0] sm:$0xff]
  %v351 = vld [vmem:[%s1 + $0x9c8] sm:$0xff]
  %v352 = vld [vmem:[%s1 + $0x9d0] sm:$0xff]
  %v353 = vld [vmem:[%s1 + $0x9d8] sm:$0xff]
  %v354 = vld [vmem:[%s1 + $0x9e0] sm:$0xff]
  %v355 = vld [vmem:[%s1 + $0x9e8] sm:$0xff]
  %v356 = vld [vmem:[%s1 + $0x9f0] sm:$0xff]
  %v357 = vld [vmem:[%s1 + $0x9f8] sm:$0xff]
  %v358 = vld [vmem:[%s1 + $0xa00] sm:$0xff]
  %v359 = vld [vmem:[%s1 + $0xa08] sm:$0xff]
  %v360 = vld [vmem:[%s1 + $0xa10] sm:$0xff]
  %v361 = vld [vmem:[%s1 + $0xa18] sm:$0xff]
  %v362 = vld [vmem:[%s1 + $0xa20] sm:$0xff]
  %v363 = vld [vmem:[%s1 + $0xa28] sm:$0xff]
  %v364 = vld [vmem:[%s1 + $0xa30] sm:$0xff]
  %v365 = vld [vmem:[%s1 + $0xa38] sm:$0xff]
  %v366 = vld [vmem:[%s1 + $0xa40] sm:$0xff]
  %v367 = vld [vmem:[%s1 + $0xa48] sm:$0xff]
  %v368 = vld [vmem:[%s1 + $0xa50] sm:$0xff]
  %v369 = vld [vmem:[%s1 + $0xa58] sm:$0xff]
  %v370 = vld [vmem:[%s1 + $0xa60] sm:$0xff]
  %v371 = vld [vmem:[%s1 + $0xa68] sm:$0xff]
  %v372 = vld [vmem:[%s1 + $0xa70] sm:$0xff]
  %v373 = vld [vmem:[%s1 + $0xa78] sm:$0xff]
  %v374 = vld [vmem:[%s1 + $0xa80] sm:$0xff]
  %v375 = vld [vmem:[%s1 + $0xa88] sm:$0xff]
  %v376 = vld [vmem:[%s1 + $0xa90] sm:$0xff]
  %v377 = vld [vmem:[%s1 + $0xa98] sm:$0xff]
  %v378 = vld [vmem:[%s1 + $0xaa0] sm:$0xff]
  %v379 = vld [vmem:[%s1 + $0xaa8] sm:$0xff]
  %v380 = vld [vmem:[%s1 + $0xab0] sm:$0xff]
  %v381 = vld [vmem:[%s1 + $0xab8] sm:$0xff]
  %v382 = vld [vmem:[%s1 + $0xac0] sm:$0xff]
  %v383 = vld [vmem:[%s1 + $0xac8] sm:$0xff]
  %v384 = vld [vmem:[%s1 + $0xad0] sm:$0xff]
  %v385 = vld [vmem:[%s1 + $0xad8] sm:$0xff]
  %v386 = vld [vmem:[%s1 + $0xae0] sm:$0xff]
  %v387 = vld [vmem:[%s1 + $0xae8] sm:$0xff]
  %v388 = vld [vmem:[%s1 + $0xaf0] sm:$0xff]
  %v389 = vld [vmem:[%s1 + $0xaf8] sm:$0xff]
  %v390 = vld [vmem:[%s1 + $0xb00] sm:$0xff]
  %v391 = vld [vmem:[%s1 + $0xb08] sm:$0xff]
  %v392 = vld [vmem:[%s1 + $0xb10] sm:$0xff]
  %v393 = vld [vmem:[%s1 + $0xb18] sm:$0xff]
  %v394 = vld [vmem:[%s1 + $0xb20] sm:$0xff]
  %v395 = vld [vmem:[%s1 + $0xb28] sm:$0xff]
  %v396 = vld [vmem:[%s1 + $0xb30] sm:$0xff]
  %v397 = vld [vmem:[%s1 + $0xb38] sm:$0xff]
  %v398 = vld [vmem:[%s1 + $0xb40] sm:$0xff]
  %v399 = vld [vmem:[%s1 + $0xb48] sm:$0xff]
  %v400 = vld [vmem:[%s1 + $0xb50] sm:$0xff]
  %v401 = vld [vmem:[%s1 + $0xb58] sm:$0xff]
  %v402 = vld [vmem:[%s1 + $0xb60] sm:$0xff]
  %v403 = vld [vmem:[%s1 + $0xb68] sm:$0xff]
  %v404 = vld [vmem:[%s1 + $0xb70] sm:$0xff]
  %v405 = vld [vmem:[%s1 + $0xb78] sm:$0xff]
  %v406 = vld [vmem:[%s1 + $0xb80] sm:$0xff]
  %v407 = vld [vmem:[%s1 + $0xb88] sm:$0xff]
  %v408 = vld [vmem:[%s1 + $0xb90] sm:$0xff]
  %v409 = vld [vmem:[%s1 + $0xb98] sm:$0xff]
  %v410 = vld [vmem:[%s1 + $0xba0] sm:$0xff]
  %v411 = vld [vmem:[%s1 + $0xba8] sm:$0xff]
  %v412 = vld [vmem:[%s1 + $0xbb0] sm:$0xff]
  %v413 = vld [vmem:[%s1 + $0xbb8] sm:$0xff]
  %v414 = vld [vmem:[%s1 + $0xbc0] sm:$0xff]
  %v415 = vld [vmem:[%s1 + $0xbc8] sm:$0xff]
  %v416 = vld [vmem:[%s1 + $0xbd0] sm:$0xff]
  %v417 = vld [vmem:[%s1 + $0xbd8] sm:$0xff]
  %v418 = vld [vmem:[%s1 + $0xbe0] sm:$0xff]
  %v419 = vld [vmem:[%s1 + $0xbe8] sm:$0xff]
  %v420 = vld [vmem:[%s1 + $0xbf0] sm:$0xff]
  %v421 = vld [vmem:[%s1 + $0xbf8] sm:$0xff]
  %v422 = vld [vmem:[%s1 + $0xc00] sm:$0xff]
  %v423 = vld [vmem:[%s1 + $0xc08] sm:$0xff]
  %v424 = vld [vmem:[%s1 + $0xc10] sm:$0xff]
  %v425 = vld [vmem:[%s1 + $0xc18] sm:$0xff]
  %v426 = vld [vmem:[%s1 + $0xc20] sm:$0xff]
  %v427 = vld [vmem:[%s1 + $0xc28] sm:$0xff]
  %v428 = vld [vmem:[%s1 + $0xc30] sm:$0xff]
  %v429 = vld [vmem:[%s1 + $0xc38] sm:$0xff]
  %v430 = vld [vmem:[%s1 + $0xc40] sm:$0xff]
  %v431 = vld [vmem:[%s1 + $0xc48] sm:$0xff]
  %v432 = vld [vmem:[%s1 + $0xc50] sm:$0xff]
  %v433 = vld [vmem:[%s1 + $0xc58] sm:$0xff]
  %v434 = vld [vmem:[%s1 + $0xc60] sm:$0xff]
  %v435 = vld [vmem:[%s1 + $0xc68] sm:$0xff]
  %v436 = vld [vmem:[%s1 + $0xc70] sm:$0xff]
  %v437 = vld [vmem:[%s1 + $0xc78] sm:$0xff]
  %v438 = vld [vmem:[%s1 + $0xc80] sm:$0xff]
  %v439 = vld [vmem:[%s1 + $0xc88] sm:$0xff]
  %v440 = vld [vmem:[%s1 + $0xc90] sm:$0xff]
  %v441 = vld [vmem:[%s1 + $0xc98] sm:$0xff]
  %v442 = vld [vmem:[%s1 + $0xca0] sm:$0xff]
  %v443 = vld [vmem:[%s1 + $0xca8] sm:$0xff]
  %v444 = vld [vmem:[%s1 + $0xcb0] sm:$0xff]
  %v445 = vld [vmem:[%s1 + $0xcb8] sm:$0xff]
  %v446 = vld [vmem:[%s1 + $0xcc0] sm:$0xff]
  %v447 = vld [vmem:[%s1 + $0xcc8] sm:$0xff]
  %v448 = vld [vmem:[%s1 + $0xcd0] sm:$0xff]
  %v449 = vld [vmem:[%s1 + $0xcd8] sm:$0xff]
  %v450 = vld [vmem:[%s1 + $0xce0] sm:$0xff]
  %v451 = vld [vmem:[%s1 + $0xce8] sm:$0xff]
  %v452 = vld [vmem:[%s1 + $0xcf0] sm:$0xff]
  %v453 = vld [vmem:[%s1 + $0xcf8] sm:$0xff]
  %v454 = vld [vmem:[%s1 + $0xd00] sm:$0xff]
  %v455 = vld [vmem:[%s1 + $0xd08] sm:$0xff]
  %v456 = vld [vmem:[%s1 + $0xd10] sm:$0xff]
  %v457 = vld [vmem:[%s1 + $0xd18] sm:$0xff]
  %v458 = vld [vmem:[%s1 + $0xd20] sm:$0xff]
  %v459 = vld [vmem:[%s1 + $0xd28] sm:$0xff]
  %v460 = vld [vmem:[%s1 + $0xd30] sm:$0xff]
  %v461 = vld [vmem:[%s1 + $0xd38] sm:$0xff]
  %v462 = vld [vmem:[%s1 + $0xd40] sm:$0xff]
  %v463 = vld [vmem:[%s1 + $0xd48] sm:$0xff]
  %v464 = vld [vmem:[%s1 + $0xd50] sm:$0xff]
  %v465 = vld [vmem:[%s1 + $0xd58] sm:$0xff]
  %v466 = vld [vmem:[%s1 + $0xd60] sm:$0xff]
  %v467 = vld [vmem:[%s1 + $0xd68] sm:$0xff]
  %v468 = vld [vmem:[%s1 + $0xd70] sm:$0xff]
  %v469 = vld [vmem:[%s1 + $0xd78] sm:$0xff]
  %v470 = vld [vmem:[%s1 + $0xd80] sm:$0xff]
  %v471 = vld [vmem:[%s1 + $0xd88] sm:$0xff]
  %v472 = vld [vmem:[%s1 + $0xd90] sm:$0xff]
  %v473 = vld [vmem:[%s1 + $0xd98] sm:$0xff]
  %v474 = vld [vmem:[%s1 + $0xda0] sm:$0xff]
  %v475 = vld [vmem:[%s1 + $0xda8] sm:$0xff]
  %v476 = vld [vmem:[%s1 + $0xdb0] sm:$0xff]
  %v477 = vld [vmem:[%s1 + $0xdb8] sm:$0xff]
  %v478 = vld [vmem:[%s1 + $0xdc0] sm:$0xff]
  %v479 = vld [vmem:[%s1 + $0xdc8] sm:$0xff]
  %v480 = vld [vmem:[%s1 + $0xdd0] sm:$0xff]
  %v481 = vld [vmem:[%s1 + $0xdd8] sm:$0xff]
  %v482 = vld [vmem:[%s1 + $0xde0] sm:$0xff]
  %v483 = vld [vmem:[%s1 + $0xde8] sm:$0xff]
  %v484 = vld [vmem:[%s1 + $0xdf0] sm:$0xff]
  %v485 = vld [vmem:[%s1 + $0xdf8] sm:$0xff]
  %v486 = vld [vmem:[%s1 + $0xe00] sm:$0xff]
  %v487 = vld [vmem:[%s1 + $0xe08] sm:$0xff]
  %v488 = vld [vmem:[%s1 + $0xe10] sm:$0xff]
  %v489 = vld [vmem:[%s1 + $0xe18] sm:$0xff]
  %v490 = vld [vmem:[%s1 + $0xe20] sm:$0xff]
  %v491 = vld [vmem:[%s1 + $0xe28] sm:$0xff]
  %v492 = vld [vmem:[%s1 + $0xe30] sm:$0xff]
  %v493 = vld [vmem:[%s1 + $0xe38] sm:$0xff]
  %v494 = vld [vmem:[%s1 + $0xe40] sm:$0xff]
  %v495 = vld [vmem:[%s1 + $0xe48] sm:$0xff]
  %v496 = vld [vmem:[%s1 + $0xe50] sm:$0xff]
  %v497 = vld [vmem:[%s1 + $0xe58] sm:$0xff]
  %v498 = vld [vmem:[%s1 + $0xe60] sm:$0xff]
  %v499 = vld [vmem:[%s1 + $0xe68] sm:$0xff]
  %v500 = vld [vmem:[%s1 + $0xe70] sm:$0xff]
  %v501 = vld [vmem:[%s1 + $0xe78] sm:$0xff]
  %v502 = vld [vmem:[%s1 + $0xe80] sm:$0xff]
  %v503 = vld [vmem:[%s1 + $0xe88] sm:$0xff]
  %v504 = vld [vmem:[%s1 + $0xe90] sm:$0xff]
  %v505 = vld [vmem:[%s1 + $0xe98] sm:$0xff]
  %v506 = vld [vmem:[%s1 + $0xea0] sm:$0xff]
  %v507 = vld [vmem:[%s1 + $0xea8] sm:$0xff]
  %v508 = vld [vmem:[%s1 + $0xeb0] sm:$0xff]
  %v509 = vld [vmem:[%s1 + $0xeb8] sm:$0xff]
  %v510 = vld [vmem:[%s1 + $0xec0] sm:$0xff]
  %v511 = vld [vmem:[%s1 + $0xec8] sm:$0xff]
  %v512 = vld [vmem:[%s1 + $0xed0] sm:$0xff]
  %v513 = vld [vmem:[%s1 + $0xed8] sm:$0xff]
  %v514 = vld [vmem:[%s1 + $0xee0] sm:$0xff]
  %v515 = vld [vmem:[%s1 + $0xee8] sm:$0xff]
  %v516 = vld [vmem:[%s1 + $0xef0] sm:$0xff]
  %v517 = vld [vmem:[%s1 + $0xef8] sm:$0xff]
  %v518 = vld [vmem:[%s1 + $0xf00] sm:$0xff]
  %v519 = vld [vmem:[%s1 + $0xf08] sm:$0xff]
  %v520 = vld [vmem:[%s1 + $0xf10] sm:$0xff]
  %v521 = vld [vmem:[%s1 + $0xf18] sm:$0xff]
  %v522 = vld [vmem:[%s1 + $0xf20] sm:$0xff]
  %v523 = vld [vmem:[%s1 + $0xf28] sm:$0xff]
  %v524 = vld [vmem:[%s1 + $0xf30] sm:$0xff]
  %v525 = vld [vmem:[%s1 + $0xf38] sm:$0xff]
  %v526 = vld [vmem:[%s1 + $0xf40] sm:$0xff]
  %v527 = vld [vmem:[%s1 + $0xf48] sm:$0xff]
  %v528 = vld [vmem:[%s1 + $0xf50] sm:$0xff]
  %v529 = vld [vmem:[%s1 + $0xf58] sm:$0xff]
  %v530 = vld [vmem:[%s1 + $0xf60] sm:$0xff]
  %v531 = vld [vmem:[%s1 + $0xf68] sm:$0xff]
  %v532 = vld [vmem:[%s1 + $0xf70] sm:$0xff]
  %v533 = vld [vmem:[%s1 + $0xf78] sm:$0xff]
  %v534 = vld [vmem:[%s1 + $0xf80] sm:$0xff]
  %v535 = vld [vmem:[%s1 + $0xf88] sm:$0xff]
  %v536 = vld [vmem:[%s1 + $0xf90] sm:$0xff]
  %v537 = vld [vmem:[%s1 + $0xf98] sm:$0xff]
  %v538 = vld [vmem:[%s1 + $0xfa0] sm:$0xff]
  %v539 = vld [vmem:[%s1 + $0xfa8] sm:$0xff]
  %v540 = vld [vmem:[%s1 + $0xfb0] sm:$0xff]
  %v541 = vld [vmem:[%s1 + $0xfb8] sm:$0xff]
  %v542 = vld [vmem:[%s1 + $0xfc0] sm:$0xff]
  %v543 = vld [vmem:[%s1 + $0xfc8] sm:$0xff]
  %v544 = vld [vmem:[%s1 + $0xfd0] sm:$0xff]
  %v545 = vld [vmem:[%s1 + $0xfd8] sm:$0xff]
  %v546 = vld [vmem:[%s1 + $0xfe0] sm:$0xff]
  %v547 = vld [vmem:[%s1 + $0xfe8] sm:$0xff]
  %v548 = vld [vmem:[%s1 + $0xff0] sm:$0xff]
  %v549 = vld [vmem:[%s1 + $0xff8] sm:$0xff]
  %v550 = vld [vmem:[%s2] sm:$0xf]
  %v552 = vlaneseq
  %v553 = vshrl.u32 %v552, 7
  %v554 = vsub.s32 0, %v553
  %v555 = vrot.slane %v550, %v554
  %v556 = vlaneseq
  %v557 = vshrl.u32 %v556, 7
  %v558 = vsub.s32 1, %v557
  %v559 = vrot.slane %v550, %v558
  %v560 = vlaneseq
  %v561 = vshrl.u32 %v560, 7
  %v562 = vsub.s32 2, %v561
  %v563 = vrot.slane %v550, %v562
  %v564 = vlaneseq
  %v565 = vshrl.u32 %v564, 7
  %v566 = vsub.s32 3, %v565
  %v567 = vrot.slane %v550, %v566
  %v588 = vunpack.c.l.b16 %v22
  %v589 = vunpack.c.h.b16 %v22
  %v590 = vunpack.c.l.b16 %v23
  %v591 = vunpack.c.h.b16 %v23
  %v592 = vunpack.c.l.b16 %v24
  %v593 = vunpack.c.h.b16 %v24
  %v594 = vunpack.c.l.b16 %v25
  %v595 = vunpack.c.h.b16 %v25
  %v596 = vunpack.c.l.b16 %v26
  %v597 = vunpack.c.h.b16 %v26
  %v598 = vunpack.c.l.b16 %v27
  %v599 = vunpack.c.h.b16 %v27
  %v600 = vunpack.c.l.b16 %v28
  %v601 = vunpack.c.h.b16 %v28
  %v602 = vunpack.c.l.b16 %v29
  %v603 = vunpack.c.h.b16 %v29
  %v604 = vunpack.c.l.b16 %v30
  %v605 = vunpack.c.h.b16 %v30
  %v606 = vunpack.c.l.b16 %v31
  %v607 = vunpack.c.h.b16 %v31
  %v608 = vunpack.c.l.b16 %v32
  %v609 = vunpack.c.h.b16 %v32
  %v610 = vunpack.c.l.b16 %v33
  %v611 = vunpack.c.h.b16 %v33
  %v612 = vunpack.c.l.b16 %v34
  %v613 = vunpack.c.h.b16 %v34
  %v614 = vunpack.c.l.b16 %v35
  %v615 = vunpack.c.h.b16 %v35
  %v616 = vunpack.c.l.b16 %v36
  %v617 = vunpack.c.h.b16 %v36
  %v618 = vunpack.c.l.b16 %v37
  %v619 = vunpack.c.h.b16 %v37
  %v620 = vpack.c.b16 %v604, %v588
  %v621 = vpack.c.b16 %v605, %v589
  %v622 = vpack.c.b16 %v606, %v590
  %v623 = vpack.c.b16 %v607, %v591
  %v624 = vpack.c.b16 %v608, %v592
  %v625 = vpack.c.b16 %v609, %v593
  %v626 = vpack.c.b16 %v610, %v594
  %v627 = vpack.c.b16 %v611, %v595
  %v628 = vpack.c.b16 %v612, %v596
  %v629 = vpack.c.b16 %v613, %v597
  %v630 = vpack.c.b16 %v614, %v598
  %v631 = vpack.c.b16 %v615, %v599
  %v632 = vpack.c.b16 %v616, %v600
  %v633 = vpack.c.b16 %v617, %v601
  %v634 = vpack.c.b16 %v618, %v602
  %v635 = vpack.c.b16 %v619, %v603
  %v1164 = vunpack.c.l.b16 %v38
  %v1165 = vunpack.c.h.b16 %v38
  %v1166 = vunpack.c.l.b16 %v39
  %v1167 = vunpack.c.h.b16 %v39
  %v1168 = vunpack.c.l.b16 %v40
  %v1169 = vunpack.c.h.b16 %v40
  %v1170 = vunpack.c.l.b16 %v41
  %v1171 = vunpack.c.h.b16 %v41
  %v1172 = vunpack.c.l.b16 %v42
  %v1173 = vunpack.c.h.b16 %v42
  %v1174 = vunpack.c.l.b16 %v43
  %v1175 = vunpack.c.h.b16 %v43
  %v1176 = vunpack.c.l.b16 %v44
  %v1177 = vunpack.c.h.b16 %v44
  %v1178 = vunpack.c.l.b16 %v45
  %v1179 = vunpack.c.h.b16 %v45
  %v1180 = vunpack.c.l.b16 %v46
  %v1181 = vunpack.c.h.b16 %v46
  %v1182 = vunpack.c.l.b16 %v47
  %v1183 = vunpack.c.h.b16 %v47
  %v1184 = vunpack.c.l.b16 %v48
  %v1185 = vunpack.c.h.b16 %v48
  %v1186 = vunpack.c.l.b16 %v49
  %v1187 = vunpack.c.h.b16 %v49
  %v1188 = vunpack.c.l.b16 %v50
  %v1189 = vunpack.c.h.b16 %v50
  %v1190 = vunpack.c.l.b16 %v51
  %v1191 = vunpack.c.h.b16 %v51
  %v1192 = vunpack.c.l.b16 %v52
  %v1193 = vunpack.c.h.b16 %v52
  %v1194 = vunpack.c.l.b16 %v53
  %v1195 = vunpack.c.h.b16 %v53
  %v1196 = vunpack.c.l.b16 %v54
  %v1197 = vunpack.c.h.b16 %v54
  %v1198 = vunpack.c.l.b16 %v55
  %v1199 = vunpack.c.h.b16 %v55
  %v1200 = vunpack.c.l.b16 %v56
  %v1201 = vunpack.c.h.b16 %v56
  %v1202 = vunpack.c.l.b16 %v57
  %v1203 = vunpack.c.h.b16 %v57
  %v1204 = vunpack.c.l.b16 %v58
  %v1205 = vunpack.c.h.b16 %v58
  %v1206 = vunpack.c.l.b16 %v59
  %v1207 = vunpack.c.h.b16 %v59
  %v1208 = vunpack.c.l.b16 %v60
  %v1209 = vunpack.c.h.b16 %v60
  %v1210 = vunpack.c.l.b16 %v61
  %v1211 = vunpack.c.h.b16 %v61
  %v1212 = vunpack.c.l.b16 %v62
  %v1213 = vunpack.c.h.b16 %v62
  %v1214 = vunpack.c.l.b16 %v63
  %v1215 = vunpack.c.h.b16 %v63
  %v1216 = vunpack.c.l.b16 %v64
  %v1217 = vunpack.c.h.b16 %v64
  %v1218 = vunpack.c.l.b16 %v65
  %v1219 = vunpack.c.h.b16 %v65
  %v1220 = vunpack.c.l.b16 %v66
  %v1221 = vunpack.c.h.b16 %v66
  %v1222 = vunpack.c.l.b16 %v67
  %v1223 = vunpack.c.h.b16 %v67
  %v1224 = vunpack.c.l.b16 %v68
  %v1225 = vunpack.c.h.b16 %v68
  %v1226 = vunpack.c.l.b16 %v69
  %v1227 = vunpack.c.h.b16 %v69
  %v1228 = vunpack.c.l.b16 %v70
  %v1229 = vunpack.c.h.b16 %v70
  %v1230 = vunpack.c.l.b16 %v71
  %v1231 = vunpack.c.h.b16 %v71
  %v1232 = vunpack.c.l.b16 %v72
  %v1233 = vunpack.c.h.b16 %v72
  %v1234 = vunpack.c.l.b16 %v73
  %v1235 = vunpack.c.h.b16 %v73
  %v1236 = vunpack.c.l.b16 %v74
  %v1237 = vunpack.c.h.b16 %v74
  %v1238 = vunpack.c.l.b16 %v75
  %v1239 = vunpack.c.h.b16 %v75
  %v1240 = vunpack.c.l.b16 %v76
  %v1241 = vunpack.c.h.b16 %v76
  %v1242 = vunpack.c.l.b16 %v77
  %v1243 = vunpack.c.h.b16 %v77
  %v1244 = vunpack.c.l.b16 %v78
  %v1245 = vunpack.c.h.b16 %v78
  %v1246 = vunpack.c.l.b16 %v79
  %v1247 = vunpack.c.h.b16 %v79
  %v1248 = vunpack.c.l.b16 %v80
  %v1249 = vunpack.c.h.b16 %v80
  %v1250 = vunpack.c.l.b16 %v81
  %v1251 = vunpack.c.h.b16 %v81
  %v1252 = vunpack.c.l.b16 %v82
  %v1253 = vunpack.c.h.b16 %v82
  %v1254 = vunpack.c.l.b16 %v83
  %v1255 = vunpack.c.h.b16 %v83
  %v1256 = vunpack.c.l.b16 %v84
  %v1257 = vunpack.c.h.b16 %v84
  %v1258 = vunpack.c.l.b16 %v85
  %v1259 = vunpack.c.h.b16 %v85
  %v1260 = vunpack.c.l.b16 %v86
  %v1261 = vunpack.c.h.b16 %v86
  %v1262 = vunpack.c.l.b16 %v87
  %v1263 = vunpack.c.h.b16 %v87
  %v1264 = vunpack.c.l.b16 %v88
  %v1265 = vunpack.c.h.b16 %v88
  %v1266 = vunpack.c.l.b16 %v89
  %v1267 = vunpack.c.h.b16 %v89
  %v1268 = vunpack.c.l.b16 %v90
  %v1269 = vunpack.c.h.b16 %v90
  %v1270 = vunpack.c.l.b16 %v91
  %v1271 = vunpack.c.h.b16 %v91
  %v1272 = vunpack.c.l.b16 %v92
  %v1273 = vunpack.c.h.b16 %v92
  %v1274 = vunpack.c.l.b16 %v93
  %v1275 = vunpack.c.h.b16 %v93
  %v1276 = vunpack.c.l.b16 %v94
  %v1277 = vunpack.c.h.b16 %v94
  %v1278 = vunpack.c.l.b16 %v95
  %v1279 = vunpack.c.h.b16 %v95
  %v1280 = vunpack.c.l.b16 %v96
  %v1281 = vunpack.c.h.b16 %v96
  %v1282 = vunpack.c.l.b16 %v97
  %v1283 = vunpack.c.h.b16 %v97
  %v1284 = vunpack.c.l.b16 %v98
  %v1285 = vunpack.c.h.b16 %v98
  %v1286 = vunpack.c.l.b16 %v99
  %v1287 = vunpack.c.h.b16 %v99
  %v1288 = vunpack.c.l.b16 %v100
  %v1289 = vunpack.c.h.b16 %v100
  %v1290 = vunpack.c.l.b16 %v101
  %v1291 = vunpack.c.h.b16 %v101
  %v1292 = vunpack.c.l.b16 %v102
  %v1293 = vunpack.c.h.b16 %v102
  %v1294 = vunpack.c.l.b16 %v103
  %v1295 = vunpack.c.h.b16 %v103
  %v1296 = vunpack.c.l.b16 %v104
  %v1297 = vunpack.c.h.b16 %v104
  %v1298 = vunpack.c.l.b16 %v105
  %v1299 = vunpack.c.h.b16 %v105
  %v1300 = vunpack.c.l.b16 %v106
  %v1301 = vunpack.c.h.b16 %v106
  %v1302 = vunpack.c.l.b16 %v107
  %v1303 = vunpack.c.h.b16 %v107
  %v1304 = vunpack.c.l.b16 %v108
  %v1305 = vunpack.c.h.b16 %v108
  %v1306 = vunpack.c.l.b16 %v109
  %v1307 = vunpack.c.h.b16 %v109
  %v1308 = vunpack.c.l.b16 %v110
  %v1309 = vunpack.c.h.b16 %v110
  %v1310 = vunpack.c.l.b16 %v111
  %v1311 = vunpack.c.h.b16 %v111
  %v1312 = vunpack.c.l.b16 %v112
  %v1313 = vunpack.c.h.b16 %v112
  %v1314 = vunpack.c.l.b16 %v113
  %v1315 = vunpack.c.h.b16 %v113
  %v1316 = vunpack.c.l.b16 %v114
  %v1317 = vunpack.c.h.b16 %v114
  %v1318 = vunpack.c.l.b16 %v115
  %v1319 = vunpack.c.h.b16 %v115
  %v1320 = vunpack.c.l.b16 %v116
  %v1321 = vunpack.c.h.b16 %v116
  %v1322 = vunpack.c.l.b16 %v117
  %v1323 = vunpack.c.h.b16 %v117
  %v1324 = vunpack.c.l.b16 %v118
  %v1325 = vunpack.c.h.b16 %v118
  %v1326 = vunpack.c.l.b16 %v119
  %v1327 = vunpack.c.h.b16 %v119
  %v1328 = vunpack.c.l.b16 %v120
  %v1329 = vunpack.c.h.b16 %v120
  %v1330 = vunpack.c.l.b16 %v121
  %v1331 = vunpack.c.h.b16 %v121
  %v1332 = vunpack.c.l.b16 %v122
  %v1333 = vunpack.c.h.b16 %v122
  %v1334 = vunpack.c.l.b16 %v123
  %v1335 = vunpack.c.h.b16 %v123
  %v1336 = vunpack.c.l.b16 %v124
  %v1337 = vunpack.c.h.b16 %v124
  %v1338 = vunpack.c.l.b16 %v125
  %v1339 = vunpack.c.h.b16 %v125
  %v1340 = vunpack.c.l.b16 %v126
  %v1341 = vunpack.c.h.b16 %v126
  %v1342 = vunpack.c.l.b16 %v127
  %v1343 = vunpack.c.h.b16 %v127
  %v1344 = vunpack.c.l.b16 %v128
  %v1345 = vunpack.c.h.b16 %v128
  %v1346 = vunpack.c.l.b16 %v129
  %v1347 = vunpack.c.h.b16 %v129
  %v1348 = vunpack.c.l.b16 %v130
  %v1349 = vunpack.c.h.b16 %v130
  %v1350 = vunpack.c.l.b16 %v131
  %v1351 = vunpack.c.h.b16 %v131
  %v1352 = vunpack.c.l.b16 %v132
  %v1353 = vunpack.c.h.b16 %v132
  %v1354 = vunpack.c.l.b16 %v133
  %v1355 = vunpack.c.h.b16 %v133
  %v1356 = vunpack.c.l.b16 %v134
  %v1357 = vunpack.c.h.b16 %v134
  %v1358 = vunpack.c.l.b16 %v135
  %v1359 = vunpack.c.h.b16 %v135
  %v1360 = vunpack.c.l.b16 %v136
  %v1361 = vunpack.c.h.b16 %v136
  %v1362 = vunpack.c.l.b16 %v137
  %v1363 = vunpack.c.h.b16 %v137
  %v1364 = vunpack.c.l.b16 %v138
  %v1365 = vunpack.c.h.b16 %v138
  %v1366 = vunpack.c.l.b16 %v139
  %v1367 = vunpack.c.h.b16 %v139
  %v1368 = vunpack.c.l.b16 %v140
  %v1369 = vunpack.c.h.b16 %v140
  %v1370 = vunpack.c.l.b16 %v141
  %v1371 = vunpack.c.h.b16 %v141
  %v1372 = vunpack.c.l.b16 %v142
  %v1373 = vunpack.c.h.b16 %v142
  %v1374 = vunpack.c.l.b16 %v143
  %v1375 = vunpack.c.h.b16 %v143
  %v1376 = vunpack.c.l.b16 %v144
  %v1377 = vunpack.c.h.b16 %v144
  %v1378 = vunpack.c.l.b16 %v145
  %v1379 = vunpack.c.h.b16 %v145
  %v1380 = vunpack.c.l.b16 %v146
  %v1381 = vunpack.c.h.b16 %v146
  %v1382 = vunpack.c.l.b16 %v147
  %v1383 = vunpack.c.h.b16 %v147
  %v1384 = vunpack.c.l.b16 %v148
  %v1385 = vunpack.c.h.b16 %v148
  %v1386 = vunpack.c.l.b16 %v149
  %v1387 = vunpack.c.h.b16 %v149
  %v1388 = vunpack.c.l.b16 %v150
  %v1389 = vunpack.c.h.b16 %v150
  %v1390 = vunpack.c.l.b16 %v151
  %v1391 = vunpack.c.h.b16 %v151
  %v1392 = vunpack.c.l.b16 %v152
  %v1393 = vunpack.c.h.b16 %v152
  %v1394 = vunpack.c.l.b16 %v153
  %v1395 = vunpack.c.h.b16 %v153
  %v1396 = vunpack.c.l.b16 %v154
  %v1397 = vunpack.c.h.b16 %v154
  %v1398 = vunpack.c.l.b16 %v155
  %v1399 = vunpack.c.h.b16 %v155
  %v1400 = vunpack.c.l.b16 %v156
  %v1401 = vunpack.c.h.b16 %v156
  %v1402 = vunpack.c.l.b16 %v157
  %v1403 = vunpack.c.h.b16 %v157
  %v1404 = vunpack.c.l.b16 %v158
  %v1405 = vunpack.c.h.b16 %v158
  %v1406 = vunpack.c.l.b16 %v159
  %v1407 = vunpack.c.h.b16 %v159
  %v1408 = vunpack.c.l.b16 %v160
  %v1409 = vunpack.c.h.b16 %v160
  %v1410 = vunpack.c.l.b16 %v161
  %v1411 = vunpack.c.h.b16 %v161
  %v1412 = vunpack.c.l.b16 %v162
  %v1413 = vunpack.c.h.b16 %v162
  %v1414 = vunpack.c.l.b16 %v163
  %v1415 = vunpack.c.h.b16 %v163
  %v1416 = vunpack.c.l.b16 %v164
  %v1417 = vunpack.c.h.b16 %v164
  %v1418 = vunpack.c.l.b16 %v165
  %v1419 = vunpack.c.h.b16 %v165
  %v1420 = vunpack.c.l.b16 %v166
  %v1421 = vunpack.c.h.b16 %v166
  %v1422 = vunpack.c.l.b16 %v167
  %v1423 = vunpack.c.h.b16 %v167
  %v1424 = vunpack.c.l.b16 %v168
  %v1425 = vunpack.c.h.b16 %v168
  %v1426 = vunpack.c.l.b16 %v169
  %v1427 = vunpack.c.h.b16 %v169
  %v1428 = vunpack.c.l.b16 %v170
  %v1429 = vunpack.c.h.b16 %v170
  %v1430 = vunpack.c.l.b16 %v171
  %v1431 = vunpack.c.h.b16 %v171
  %v1432 = vunpack.c.l.b16 %v172
  %v1433 = vunpack.c.h.b16 %v172
  %v1434 = vunpack.c.l.b16 %v173
  %v1435 = vunpack.c.h.b16 %v173
  %v1436 = vunpack.c.l.b16 %v174
  %v1437 = vunpack.c.h.b16 %v174
  %v1438 = vunpack.c.l.b16 %v175
  %v1439 = vunpack.c.h.b16 %v175
  %v1440 = vunpack.c.l.b16 %v176
  %v1441 = vunpack.c.h.b16 %v176
  %v1442 = vunpack.c.l.b16 %v177
  %v1443 = vunpack.c.h.b16 %v177
  %v1444 = vunpack.c.l.b16 %v178
  %v1445 = vunpack.c.h.b16 %v178
  %v1446 = vunpack.c.l.b16 %v179
  %v1447 = vunpack.c.h.b16 %v179
  %v1448 = vunpack.c.l.b16 %v180
  %v1449 = vunpack.c.h.b16 %v180
  %v1450 = vunpack.c.l.b16 %v181
  %v1451 = vunpack.c.h.b16 %v181
  %v1452 = vunpack.c.l.b16 %v182
  %v1453 = vunpack.c.h.b16 %v182
  %v1454 = vunpack.c.l.b16 %v183
  %v1455 = vunpack.c.h.b16 %v183
  %v1456 = vunpack.c.l.b16 %v184
  %v1457 = vunpack.c.h.b16 %v184
  %v1458 = vunpack.c.l.b16 %v185
  %v1459 = vunpack.c.h.b16 %v185
  %v1460 = vunpack.c.l.b16 %v186
  %v1461 = vunpack.c.h.b16 %v186
  %v1462 = vunpack.c.l.b16 %v187
  %v1463 = vunpack.c.h.b16 %v187
  %v1464 = vunpack.c.l.b16 %v188
  %v1465 = vunpack.c.h.b16 %v188
  %v1466 = vunpack.c.l.b16 %v189
  %v1467 = vunpack.c.h.b16 %v189
  %v1468 = vunpack.c.l.b16 %v190
  %v1469 = vunpack.c.h.b16 %v190
  %v1470 = vunpack.c.l.b16 %v191
  %v1471 = vunpack.c.h.b16 %v191
  %v1472 = vunpack.c.l.b16 %v192
  %v1473 = vunpack.c.h.b16 %v192
  %v1474 = vunpack.c.l.b16 %v193
  %v1475 = vunpack.c.h.b16 %v193
  %v1476 = vunpack.c.l.b16 %v194
  %v1477 = vunpack.c.h.b16 %v194
  %v1478 = vunpack.c.l.b16 %v195
  %v1479 = vunpack.c.h.b16 %v195
  %v1480 = vunpack.c.l.b16 %v196
  %v1481 = vunpack.c.h.b16 %v196
  %v1482 = vunpack.c.l.b16 %v197
  %v1483 = vunpack.c.h.b16 %v197
  %v1484 = vunpack.c.l.b16 %v198
  %v1485 = vunpack.c.h.b16 %v198
  %v1486 = vunpack.c.l.b16 %v199
  %v1487 = vunpack.c.h.b16 %v199
  %v1488 = vunpack.c.l.b16 %v200
  %v1489 = vunpack.c.h.b16 %v200
  %v1490 = vunpack.c.l.b16 %v201
  %v1491 = vunpack.c.h.b16 %v201
  %v1492 = vunpack.c.l.b16 %v202
  %v1493 = vunpack.c.h.b16 %v202
  %v1494 = vunpack.c.l.b16 %v203
  %v1495 = vunpack.c.h.b16 %v203
  %v1496 = vunpack.c.l.b16 %v204
  %v1497 = vunpack.c.h.b16 %v204
  %v1498 = vunpack.c.l.b16 %v205
  %v1499 = vunpack.c.h.b16 %v205
  %v1500 = vunpack.c.l.b16 %v206
  %v1501 = vunpack.c.h.b16 %v206
  %v1502 = vunpack.c.l.b16 %v207
  %v1503 = vunpack.c.h.b16 %v207
  %v1504 = vunpack.c.l.b16 %v208
  %v1505 = vunpack.c.h.b16 %v208
  %v1506 = vunpack.c.l.b16 %v209
  %v1507 = vunpack.c.h.b16 %v209
  %v1508 = vunpack.c.l.b16 %v210
  %v1509 = vunpack.c.h.b16 %v210
  %v1510 = vunpack.c.l.b16 %v211
  %v1511 = vunpack.c.h.b16 %v211
  %v1512 = vunpack.c.l.b16 %v212
  %v1513 = vunpack.c.h.b16 %v212
  %v1514 = vunpack.c.l.b16 %v213
  %v1515 = vunpack.c.h.b16 %v213
  %v1516 = vunpack.c.l.b16 %v214
  %v1517 = vunpack.c.h.b16 %v214
  %v1518 = vunpack.c.l.b16 %v215
  %v1519 = vunpack.c.h.b16 %v215
  %v1520 = vunpack.c.l.b16 %v216
  %v1521 = vunpack.c.h.b16 %v216
  %v1522 = vunpack.c.l.b16 %v217
  %v1523 = vunpack.c.h.b16 %v217
  %v1524 = vunpack.c.l.b16 %v218
  %v1525 = vunpack.c.h.b16 %v218
  %v1526 = vunpack.c.l.b16 %v219
  %v1527 = vunpack.c.h.b16 %v219
  %v1528 = vunpack.c.l.b16 %v220
  %v1529 = vunpack.c.h.b16 %v220
  %v1530 = vunpack.c.l.b16 %v221
  %v1531 = vunpack.c.h.b16 %v221
  %v1532 = vunpack.c.l.b16 %v222
  %v1533 = vunpack.c.h.b16 %v222
  %v1534 = vunpack.c.l.b16 %v223
  %v1535 = vunpack.c.h.b16 %v223
  %v1536 = vunpack.c.l.b16 %v224
  %v1537 = vunpack.c.h.b16 %v224
  %v1538 = vunpack.c.l.b16 %v225
  %v1539 = vunpack.c.h.b16 %v225
  %v1540 = vunpack.c.l.b16 %v226
  %v1541 = vunpack.c.h.b16 %v226
  %v1542 = vunpack.c.l.b16 %v227
  %v1543 = vunpack.c.h.b16 %v227
  %v1544 = vunpack.c.l.b16 %v228
  %v1545 = vunpack.c.h.b16 %v228
  %v1546 = vunpack.c.l.b16 %v229
  %v1547 = vunpack.c.h.b16 %v229
  %v1548 = vunpack.c.l.b16 %v230
  %v1549 = vunpack.c.h.b16 %v230
  %v1550 = vunpack.c.l.b16 %v231
  %v1551 = vunpack.c.h.b16 %v231
  %v1552 = vunpack.c.l.b16 %v232
  %v1553 = vunpack.c.h.b16 %v232
  %v1554 = vunpack.c.l.b16 %v233
  %v1555 = vunpack.c.h.b16 %v233
  %v1556 = vunpack.c.l.b16 %v234
  %v1557 = vunpack.c.h.b16 %v234
  %v1558 = vunpack.c.l.b16 %v235
  %v1559 = vunpack.c.h.b16 %v235
  %v1560 = vunpack.c.l.b16 %v236
  %v1561 = vunpack.c.h.b16 %v236
  %v1562 = vunpack.c.l.b16 %v237
  %v1563 = vunpack.c.h.b16 %v237
  %v1564 = vunpack.c.l.b16 %v238
  %v1565 = vunpack.c.h.b16 %v238
  %v1566 = vunpack.c.l.b16 %v239
  %v1567 = vunpack.c.h.b16 %v239
  %v1568 = vunpack.c.l.b16 %v240
  %v1569 = vunpack.c.h.b16 %v240
  %v1570 = vunpack.c.l.b16 %v241
  %v1571 = vunpack.c.h.b16 %v241
  %v1572 = vunpack.c.l.b16 %v242
  %v1573 = vunpack.c.h.b16 %v242
  %v1574 = vunpack.c.l.b16 %v243
  %v1575 = vunpack.c.h.b16 %v243
  %v1576 = vunpack.c.l.b16 %v244
  %v1577 = vunpack.c.h.b16 %v244
  %v1578 = vunpack.c.l.b16 %v245
  %v1579 = vunpack.c.h.b16 %v245
  %v1580 = vunpack.c.l.b16 %v246
  %v1581 = vunpack.c.h.b16 %v246
  %v1582 = vunpack.c.l.b16 %v247
  %v1583 = vunpack.c.h.b16 %v247
  %v1584 = vunpack.c.l.b16 %v248
  %v1585 = vunpack.c.h.b16 %v248
  %v1586 = vunpack.c.l.b16 %v249
  %v1587 = vunpack.c.h.b16 %v249
  %v1588 = vunpack.c.l.b16 %v250
  %v1589 = vunpack.c.h.b16 %v250
  %v1590 = vunpack.c.l.b16 %v251
  %v1591 = vunpack.c.h.b16 %v251
  %v1592 = vunpack.c.l.b16 %v252
  %v1593 = vunpack.c.h.b16 %v252
  %v1594 = vunpack.c.l.b16 %v253
  %v1595 = vunpack.c.h.b16 %v253
  %v1596 = vunpack.c.l.b16 %v254
  %v1597 = vunpack.c.h.b16 %v254
  %v1598 = vunpack.c.l.b16 %v255
  %v1599 = vunpack.c.h.b16 %v255
  %v1600 = vunpack.c.l.b16 %v256
  %v1601 = vunpack.c.h.b16 %v256
  %v1602 = vunpack.c.l.b16 %v257
  %v1603 = vunpack.c.h.b16 %v257
  %v1604 = vunpack.c.l.b16 %v258
  %v1605 = vunpack.c.h.b16 %v258
  %v1606 = vunpack.c.l.b16 %v259
  %v1607 = vunpack.c.h.b16 %v259
  %v1608 = vunpack.c.l.b16 %v260
  %v1609 = vunpack.c.h.b16 %v260
  %v1610 = vunpack.c.l.b16 %v261
  %v1611 = vunpack.c.h.b16 %v261
  %v1612 = vunpack.c.l.b16 %v262
  %v1613 = vunpack.c.h.b16 %v262
  %v1614 = vunpack.c.l.b16 %v263
  %v1615 = vunpack.c.h.b16 %v263
  %v1616 = vunpack.c.l.b16 %v264
  %v1617 = vunpack.c.h.b16 %v264
  %v1618 = vunpack.c.l.b16 %v265
  %v1619 = vunpack.c.h.b16 %v265
  %v1620 = vunpack.c.l.b16 %v266
  %v1621 = vunpack.c.h.b16 %v266
  %v1622 = vunpack.c.l.b16 %v267
  %v1623 = vunpack.c.h.b16 %v267
  %v1624 = vunpack.c.l.b16 %v268
  %v1625 = vunpack.c.h.b16 %v268
  %v1626 = vunpack.c.l.b16 %v269
  %v1627 = vunpack.c.h.b16 %v269
  %v1628 = vunpack.c.l.b16 %v270
  %v1629 = vunpack.c.h.b16 %v270
  %v1630 = vunpack.c.l.b16 %v271
  %v1631 = vunpack.c.h.b16 %v271
  %v1632 = vunpack.c.l.b16 %v272
  %v1633 = vunpack.c.h.b16 %v272
  %v1634 = vunpack.c.l.b16 %v273
  %v1635 = vunpack.c.h.b16 %v273
  %v1636 = vunpack.c.l.b16 %v274
  %v1637 = vunpack.c.h.b16 %v274
  %v1638 = vunpack.c.l.b16 %v275
  %v1639 = vunpack.c.h.b16 %v275
  %v1640 = vunpack.c.l.b16 %v276
  %v1641 = vunpack.c.h.b16 %v276
  %v1642 = vunpack.c.l.b16 %v277
  %v1643 = vunpack.c.h.b16 %v277
  %v1644 = vunpack.c.l.b16 %v278
  %v1645 = vunpack.c.h.b16 %v278
  %v1646 = vunpack.c.l.b16 %v279
  %v1647 = vunpack.c.h.b16 %v279
  %v1648 = vunpack.c.l.b16 %v280
  %v1649 = vunpack.c.h.b16 %v280
  %v1650 = vunpack.c.l.b16 %v281
  %v1651 = vunpack.c.h.b16 %v281
  %v1652 = vunpack.c.l.b16 %v282
  %v1653 = vunpack.c.h.b16 %v282
  %v1654 = vunpack.c.l.b16 %v283
  %v1655 = vunpack.c.h.b16 %v283
  %v1656 = vunpack.c.l.b16 %v284
  %v1657 = vunpack.c.h.b16 %v284
  %v1658 = vunpack.c.l.b16 %v285
  %v1659 = vunpack.c.h.b16 %v285
  %v1660 = vunpack.c.l.b16 %v286
  %v1661 = vunpack.c.h.b16 %v286
  %v1662 = vunpack.c.l.b16 %v287
  %v1663 = vunpack.c.h.b16 %v287
  %v1664 = vunpack.c.l.b16 %v288
  %v1665 = vunpack.c.h.b16 %v288
  %v1666 = vunpack.c.l.b16 %v289
  %v1667 = vunpack.c.h.b16 %v289
  %v1668 = vunpack.c.l.b16 %v290
  %v1669 = vunpack.c.h.b16 %v290
  %v1670 = vunpack.c.l.b16 %v291
  %v1671 = vunpack.c.h.b16 %v291
  %v1672 = vunpack.c.l.b16 %v292
  %v1673 = vunpack.c.h.b16 %v292
  %v1674 = vunpack.c.l.b16 %v293
  %v1675 = vunpack.c.h.b16 %v293
  %v1676 = vunpack.c.l.b16 %v294
  %v1677 = vunpack.c.h.b16 %v294
  %v1678 = vunpack.c.l.b16 %v295
  %v1679 = vunpack.c.h.b16 %v295
  %v1680 = vunpack.c.l.b16 %v296
  %v1681 = vunpack.c.h.b16 %v296
  %v1682 = vunpack.c.l.b16 %v297
  %v1683 = vunpack.c.h.b16 %v297
  %v1684 = vunpack.c.l.b16 %v298
  %v1685 = vunpack.c.h.b16 %v298
  %v1686 = vunpack.c.l.b16 %v299
  %v1687 = vunpack.c.h.b16 %v299
  %v1688 = vunpack.c.l.b16 %v300
  %v1689 = vunpack.c.h.b16 %v300
  %v1690 = vunpack.c.l.b16 %v301
  %v1691 = vunpack.c.h.b16 %v301
  %v1692 = vunpack.c.l.b16 %v302
  %v1693 = vunpack.c.h.b16 %v302
  %v1694 = vunpack.c.l.b16 %v303
  %v1695 = vunpack.c.h.b16 %v303
  %v1696 = vunpack.c.l.b16 %v304
  %v1697 = vunpack.c.h.b16 %v304
  %v1698 = vunpack.c.l.b16 %v305
  %v1699 = vunpack.c.h.b16 %v305
  %v1700 = vunpack.c.l.b16 %v306
  %v1701 = vunpack.c.h.b16 %v306
  %v1702 = vunpack.c.l.b16 %v307
  %v1703 = vunpack.c.h.b16 %v307
  %v1704 = vunpack.c.l.b16 %v308
  %v1705 = vunpack.c.h.b16 %v308
  %v1706 = vunpack.c.l.b16 %v309
  %v1707 = vunpack.c.h.b16 %v309
  %v1708 = vunpack.c.l.b16 %v310
  %v1709 = vunpack.c.h.b16 %v310
  %v1710 = vunpack.c.l.b16 %v311
  %v1711 = vunpack.c.h.b16 %v311
  %v1712 = vunpack.c.l.b16 %v312
  %v1713 = vunpack.c.h.b16 %v312
  %v1714 = vunpack.c.l.b16 %v313
  %v1715 = vunpack.c.h.b16 %v313
  %v1716 = vunpack.c.l.b16 %v314
  %v1717 = vunpack.c.h.b16 %v314
  %v1718 = vunpack.c.l.b16 %v315
  %v1719 = vunpack.c.h.b16 %v315
  %v1720 = vunpack.c.l.b16 %v316
  %v1721 = vunpack.c.h.b16 %v316
  %v1722 = vunpack.c.l.b16 %v317
  %v1723 = vunpack.c.h.b16 %v317
  %v1724 = vunpack.c.l.b16 %v318
  %v1725 = vunpack.c.h.b16 %v318
  %v1726 = vunpack.c.l.b16 %v319
  %v1727 = vunpack.c.h.b16 %v319
  %v1728 = vunpack.c.l.b16 %v320
  %v1729 = vunpack.c.h.b16 %v320
  %v1730 = vunpack.c.l.b16 %v321
  %v1731 = vunpack.c.h.b16 %v321
  %v1732 = vunpack.c.l.b16 %v322
  %v1733 = vunpack.c.h.b16 %v322
  %v1734 = vunpack.c.l.b16 %v323
  %v1735 = vunpack.c.h.b16 %v323
  %v1736 = vunpack.c.l.b16 %v324
  %v1737 = vunpack.c.h.b16 %v324
  %v1738 = vunpack.c.l.b16 %v325
  %v1739 = vunpack.c.h.b16 %v325
  %v1740 = vunpack.c.l.b16 %v326
  %v1741 = vunpack.c.h.b16 %v326
  %v1742 = vunpack.c.l.b16 %v327
  %v1743 = vunpack.c.h.b16 %v327
  %v1744 = vunpack.c.l.b16 %v328
  %v1745 = vunpack.c.h.b16 %v328
  %v1746 = vunpack.c.l.b16 %v329
  %v1747 = vunpack.c.h.b16 %v329
  %v1748 = vunpack.c.l.b16 %v330
  %v1749 = vunpack.c.h.b16 %v330
  %v1750 = vunpack.c.l.b16 %v331
  %v1751 = vunpack.c.h.b16 %v331
  %v1752 = vunpack.c.l.b16 %v332
  %v1753 = vunpack.c.h.b16 %v332
  %v1754 = vunpack.c.l.b16 %v333
  %v1755 = vunpack.c.h.b16 %v333
  %v1756 = vunpack.c.l.b16 %v334
  %v1757 = vunpack.c.h.b16 %v334
  %v1758 = vunpack.c.l.b16 %v335
  %v1759 = vunpack.c.h.b16 %v335
  %v1760 = vunpack.c.l.b16 %v336
  %v1761 = vunpack.c.h.b16 %v336
  %v1762 = vunpack.c.l.b16 %v337
  %v1763 = vunpack.c.h.b16 %v337
  %v1764 = vunpack.c.l.b16 %v338
  %v1765 = vunpack.c.h.b16 %v338
  %v1766 = vunpack.c.l.b16 %v339
  %v1767 = vunpack.c.h.b16 %v339
  %v1768 = vunpack.c.l.b16 %v340
  %v1769 = vunpack.c.h.b16 %v340
  %v1770 = vunpack.c.l.b16 %v341
  %v1771 = vunpack.c.h.b16 %v341
  %v1772 = vunpack.c.l.b16 %v342
  %v1773 = vunpack.c.h.b16 %v342
  %v1774 = vunpack.c.l.b16 %v343
  %v1775 = vunpack.c.h.b16 %v343
  %v1776 = vunpack.c.l.b16 %v344
  %v1777 = vunpack.c.h.b16 %v344
  %v1778 = vunpack.c.l.b16 %v345
  %v1779 = vunpack.c.h.b16 %v345
  %v1780 = vunpack.c.l.b16 %v346
  %v1781 = vunpack.c.h.b16 %v346
  %v1782 = vunpack.c.l.b16 %v347
  %v1783 = vunpack.c.h.b16 %v347
  %v1784 = vunpack.c.l.b16 %v348
  %v1785 = vunpack.c.h.b16 %v348
  %v1786 = vunpack.c.l.b16 %v349
  %v1787 = vunpack.c.h.b16 %v349
  %v1788 = vunpack.c.l.b16 %v350
  %v1789 = vunpack.c.h.b16 %v350
  %v1790 = vunpack.c.l.b16 %v351
  %v1791 = vunpack.c.h.b16 %v351
  %v1792 = vunpack.c.l.b16 %v352
  %v1793 = vunpack.c.h.b16 %v352
  %v1794 = vunpack.c.l.b16 %v353
  %v1795 = vunpack.c.h.b16 %v353
  %v1796 = vunpack.c.l.b16 %v354
  %v1797 = vunpack.c.h.b16 %v354
  %v1798 = vunpack.c.l.b16 %v355
  %v1799 = vunpack.c.h.b16 %v355
  %v1800 = vunpack.c.l.b16 %v356
  %v1801 = vunpack.c.h.b16 %v356
  %v1802 = vunpack.c.l.b16 %v357
  %v1803 = vunpack.c.h.b16 %v357
  %v1804 = vunpack.c.l.b16 %v358
  %v1805 = vunpack.c.h.b16 %v358
  %v1806 = vunpack.c.l.b16 %v359
  %v1807 = vunpack.c.h.b16 %v359
  %v1808 = vunpack.c.l.b16 %v360
  %v1809 = vunpack.c.h.b16 %v360
  %v1810 = vunpack.c.l.b16 %v361
  %v1811 = vunpack.c.h.b16 %v361
  %v1812 = vunpack.c.l.b16 %v362
  %v1813 = vunpack.c.h.b16 %v362
  %v1814 = vunpack.c.l.b16 %v363
  %v1815 = vunpack.c.h.b16 %v363
  %v1816 = vunpack.c.l.b16 %v364
  %v1817 = vunpack.c.h.b16 %v364
  %v1818 = vunpack.c.l.b16 %v365
  %v1819 = vunpack.c.h.b16 %v365
  %v1820 = vunpack.c.l.b16 %v366
  %v1821 = vunpack.c.h.b16 %v366
  %v1822 = vunpack.c.l.b16 %v367
  %v1823 = vunpack.c.h.b16 %v367
  %v1824 = vunpack.c.l.b16 %v368
  %v1825 = vunpack.c.h.b16 %v368
  %v1826 = vunpack.c.l.b16 %v369
  %v1827 = vunpack.c.h.b16 %v369
  %v1828 = vunpack.c.l.b16 %v370
  %v1829 = vunpack.c.h.b16 %v370
  %v1830 = vunpack.c.l.b16 %v371
  %v1831 = vunpack.c.h.b16 %v371
  %v1832 = vunpack.c.l.b16 %v372
  %v1833 = vunpack.c.h.b16 %v372
  %v1834 = vunpack.c.l.b16 %v373
  %v1835 = vunpack.c.h.b16 %v373
  %v1836 = vunpack.c.l.b16 %v374
  %v1837 = vunpack.c.h.b16 %v374
  %v1838 = vunpack.c.l.b16 %v375
  %v1839 = vunpack.c.h.b16 %v375
  %v1840 = vunpack.c.l.b16 %v376
  %v1841 = vunpack.c.h.b16 %v376
  %v1842 = vunpack.c.l.b16 %v377
  %v1843 = vunpack.c.h.b16 %v377
  %v1844 = vunpack.c.l.b16 %v378
  %v1845 = vunpack.c.h.b16 %v378
  %v1846 = vunpack.c.l.b16 %v379
  %v1847 = vunpack.c.h.b16 %v379
  %v1848 = vunpack.c.l.b16 %v380
  %v1849 = vunpack.c.h.b16 %v380
  %v1850 = vunpack.c.l.b16 %v381
  %v1851 = vunpack.c.h.b16 %v381
  %v1852 = vunpack.c.l.b16 %v382
  %v1853 = vunpack.c.h.b16 %v382
  %v1854 = vunpack.c.l.b16 %v383
  %v1855 = vunpack.c.h.b16 %v383
  %v1856 = vunpack.c.l.b16 %v384
  %v1857 = vunpack.c.h.b16 %v384
  %v1858 = vunpack.c.l.b16 %v385
  %v1859 = vunpack.c.h.b16 %v385
  %v1860 = vunpack.c.l.b16 %v386
  %v1861 = vunpack.c.h.b16 %v386
  %v1862 = vunpack.c.l.b16 %v387
  %v1863 = vunpack.c.h.b16 %v387
  %v1864 = vunpack.c.l.b16 %v388
  %v1865 = vunpack.c.h.b16 %v388
  %v1866 = vunpack.c.l.b16 %v389
  %v1867 = vunpack.c.h.b16 %v389
  %v1868 = vunpack.c.l.b16 %v390
  %v1869 = vunpack.c.h.b16 %v390
  %v1870 = vunpack.c.l.b16 %v391
  %v1871 = vunpack.c.h.b16 %v391
  %v1872 = vunpack.c.l.b16 %v392
  %v1873 = vunpack.c.h.b16 %v392
  %v1874 = vunpack.c.l.b16 %v393
  %v1875 = vunpack.c.h.b16 %v393
  %v1876 = vunpack.c.l.b16 %v394
  %v1877 = vunpack.c.h.b16 %v394
  %v1878 = vunpack.c.l.b16 %v395
  %v1879 = vunpack.c.h.b16 %v395
  %v1880 = vunpack.c.l.b16 %v396
  %v1881 = vunpack.c.h.b16 %v396
  %v1882 = vunpack.c.l.b16 %v397
  %v1883 = vunpack.c.h.b16 %v397
  %v1884 = vunpack.c.l.b16 %v398
  %v1885 = vunpack.c.h.b16 %v398
  %v1886 = vunpack.c.l.b16 %v399
  %v1887 = vunpack.c.h.b16 %v399
  %v1888 = vunpack.c.l.b16 %v400
  %v1889 = vunpack.c.h.b16 %v400
  %v1890 = vunpack.c.l.b16 %v401
  %v1891 = vunpack.c.h.b16 %v401
  %v1892 = vunpack.c.l.b16 %v402
  %v1893 = vunpack.c.h.b16 %v402
  %v1894 = vunpack.c.l.b16 %v403
  %v1895 = vunpack.c.h.b16 %v403
  %v1896 = vunpack.c.l.b16 %v404
  %v1897 = vunpack.c.h.b16 %v404
  %v1898 = vunpack.c.l.b16 %v405
  %v1899 = vunpack.c.h.b16 %v405
  %v1900 = vunpack.c.l.b16 %v406
  %v1901 = vunpack.c.h.b16 %v406
  %v1902 = vunpack.c.l.b16 %v407
  %v1903 = vunpack.c.h.b16 %v407
  %v1904 = vunpack.c.l.b16 %v408
  %v1905 = vunpack.c.h.b16 %v408
  %v1906 = vunpack.c.l.b16 %v409
  %v1907 = vunpack.c.h.b16 %v409
  %v1908 = vunpack.c.l.b16 %v410
  %v1909 = vunpack.c.h.b16 %v410
  %v1910 = vunpack.c.l.b16 %v411
  %v1911 = vunpack.c.h.b16 %v411
  %v1912 = vunpack.c.l.b16 %v412
  %v1913 = vunpack.c.h.b16 %v412
  %v1914 = vunpack.c.l.b16 %v413
  %v1915 = vunpack.c.h.b16 %v413
  %v1916 = vunpack.c.l.b16 %v414
  %v1917 = vunpack.c.h.b16 %v414
  %v1918 = vunpack.c.l.b16 %v415
  %v1919 = vunpack.c.h.b16 %v415
  %v1920 = vunpack.c.l.b16 %v416
  %v1921 = vunpack.c.h.b16 %v416
  %v1922 = vunpack.c.l.b16 %v417
  %v1923 = vunpack.c.h.b16 %v417
  %v1924 = vunpack.c.l.b16 %v418
  %v1925 = vunpack.c.h.b16 %v418
  %v1926 = vunpack.c.l.b16 %v419
  %v1927 = vunpack.c.h.b16 %v419
  %v1928 = vunpack.c.l.b16 %v420
  %v1929 = vunpack.c.h.b16 %v420
  %v1930 = vunpack.c.l.b16 %v421
  %v1931 = vunpack.c.h.b16 %v421
  %v1932 = vunpack.c.l.b16 %v422
  %v1933 = vunpack.c.h.b16 %v422
  %v1934 = vunpack.c.l.b16 %v423
  %v1935 = vunpack.c.h.b16 %v423
  %v1936 = vunpack.c.l.b16 %v424
  %v1937 = vunpack.c.h.b16 %v424
  %v1938 = vunpack.c.l.b16 %v425
  %v1939 = vunpack.c.h.b16 %v425
  %v1940 = vunpack.c.l.b16 %v426
  %v1941 = vunpack.c.h.b16 %v426
  %v1942 = vunpack.c.l.b16 %v427
  %v1943 = vunpack.c.h.b16 %v427
  %v1944 = vunpack.c.l.b16 %v428
  %v1945 = vunpack.c.h.b16 %v428
  %v1946 = vunpack.c.l.b16 %v429
  %v1947 = vunpack.c.h.b16 %v429
  %v1948 = vunpack.c.l.b16 %v430
  %v1949 = vunpack.c.h.b16 %v430
  %v1950 = vunpack.c.l.b16 %v431
  %v1951 = vunpack.c.h.b16 %v431
  %v1952 = vunpack.c.l.b16 %v432
  %v1953 = vunpack.c.h.b16 %v432
  %v1954 = vunpack.c.l.b16 %v433
  %v1955 = vunpack.c.h.b16 %v433
  %v1956 = vunpack.c.l.b16 %v434
  %v1957 = vunpack.c.h.b16 %v434
  %v1958 = vunpack.c.l.b16 %v435
  %v1959 = vunpack.c.h.b16 %v435
  %v1960 = vunpack.c.l.b16 %v436
  %v1961 = vunpack.c.h.b16 %v436
  %v1962 = vunpack.c.l.b16 %v437
  %v1963 = vunpack.c.h.b16 %v437
  %v1964 = vunpack.c.l.b16 %v438
  %v1965 = vunpack.c.h.b16 %v438
  %v1966 = vunpack.c.l.b16 %v439
  %v1967 = vunpack.c.h.b16 %v439
  %v1968 = vunpack.c.l.b16 %v440
  %v1969 = vunpack.c.h.b16 %v440
  %v1970 = vunpack.c.l.b16 %v441
  %v1971 = vunpack.c.h.b16 %v441
  %v1972 = vunpack.c.l.b16 %v442
  %v1973 = vunpack.c.h.b16 %v442
  %v1974 = vunpack.c.l.b16 %v443
  %v1975 = vunpack.c.h.b16 %v443
  %v1976 = vunpack.c.l.b16 %v444
  %v1977 = vunpack.c.h.b16 %v444
  %v1978 = vunpack.c.l.b16 %v445
  %v1979 = vunpack.c.h.b16 %v445
  %v1980 = vunpack.c.l.b16 %v446
  %v1981 = vunpack.c.h.b16 %v446
  %v1982 = vunpack.c.l.b16 %v447
  %v1983 = vunpack.c.h.b16 %v447
  %v1984 = vunpack.c.l.b16 %v448
  %v1985 = vunpack.c.h.b16 %v448
  %v1986 = vunpack.c.l.b16 %v449
  %v1987 = vunpack.c.h.b16 %v449
  %v1988 = vunpack.c.l.b16 %v450
  %v1989 = vunpack.c.h.b16 %v450
  %v1990 = vunpack.c.l.b16 %v451
  %v1991 = vunpack.c.h.b16 %v451
  %v1992 = vunpack.c.l.b16 %v452
  %v1993 = vunpack.c.h.b16 %v452
  %v1994 = vunpack.c.l.b16 %v453
  %v1995 = vunpack.c.h.b16 %v453
  %v1996 = vunpack.c.l.b16 %v454
  %v1997 = vunpack.c.h.b16 %v454
  %v1998 = vunpack.c.l.b16 %v455
  %v1999 = vunpack.c.h.b16 %v455
  %v2000 = vunpack.c.l.b16 %v456
  %v2001 = vunpack.c.h.b16 %v456
  %v2002 = vunpack.c.l.b16 %v457
  %v2003 = vunpack.c.h.b16 %v457
  %v2004 = vunpack.c.l.b16 %v458
  %v2005 = vunpack.c.h.b16 %v458
  %v2006 = vunpack.c.l.b16 %v459
  %v2007 = vunpack.c.h.b16 %v459
  %v2008 = vunpack.c.l.b16 %v460
  %v2009 = vunpack.c.h.b16 %v460
  %v2010 = vunpack.c.l.b16 %v461
  %v2011 = vunpack.c.h.b16 %v461
  %v2012 = vunpack.c.l.b16 %v462
  %v2013 = vunpack.c.h.b16 %v462
  %v2014 = vunpack.c.l.b16 %v463
  %v2015 = vunpack.c.h.b16 %v463
  %v2016 = vunpack.c.l.b16 %v464
  %v2017 = vunpack.c.h.b16 %v464
  %v2018 = vunpack.c.l.b16 %v465
  %v2019 = vunpack.c.h.b16 %v465
  %v2020 = vunpack.c.l.b16 %v466
  %v2021 = vunpack.c.h.b16 %v466
  %v2022 = vunpack.c.l.b16 %v467
  %v2023 = vunpack.c.h.b16 %v467
  %v2024 = vunpack.c.l.b16 %v468
  %v2025 = vunpack.c.h.b16 %v468
  %v2026 = vunpack.c.l.b16 %v469
  %v2027 = vunpack.c.h.b16 %v469
  %v2028 = vunpack.c.l.b16 %v470
  %v2029 = vunpack.c.h.b16 %v470
  %v2030 = vunpack.c.l.b16 %v471
  %v2031 = vunpack.c.h.b16 %v471
  %v2032 = vunpack.c.l.b16 %v472
  %v2033 = vunpack.c.h.b16 %v472
  %v2034 = vunpack.c.l.b16 %v473
  %v2035 = vunpack.c.h.b16 %v473
  %v2036 = vunpack.c.l.b16 %v474
  %v2037 = vunpack.c.h.b16 %v474
  %v2038 = vunpack.c.l.b16 %v475
  %v2039 = vunpack.c.h.b16 %v475
  %v2040 = vunpack.c.l.b16 %v476
  %v2041 = vunpack.c.h.b16 %v476
  %v2042 = vunpack.c.l.b16 %v477
  %v2043 = vunpack.c.h.b16 %v477
  %v2044 = vunpack.c.l.b16 %v478
  %v2045 = vunpack.c.h.b16 %v478
  %v2046 = vunpack.c.l.b16 %v479
  %v2047 = vunpack.c.h.b16 %v479
  %v2048 = vunpack.c.l.b16 %v480
  %v2049 = vunpack.c.h.b16 %v480
  %v2050 = vunpack.c.l.b16 %v481
  %v2051 = vunpack.c.h.b16 %v481
  %v2052 = vunpack.c.l.b16 %v482
  %v2053 = vunpack.c.h.b16 %v482
  %v2054 = vunpack.c.l.b16 %v483
  %v2055 = vunpack.c.h.b16 %v483
  %v2056 = vunpack.c.l.b16 %v484
  %v2057 = vunpack.c.h.b16 %v484
  %v2058 = vunpack.c.l.b16 %v485
  %v2059 = vunpack.c.h.b16 %v485
  %v2060 = vunpack.c.l.b16 %v486
  %v2061 = vunpack.c.h.b16 %v486
  %v2062 = vunpack.c.l.b16 %v487
  %v2063 = vunpack.c.h.b16 %v487
  %v2064 = vunpack.c.l.b16 %v488
  %v2065 = vunpack.c.h.b16 %v488
  %v2066 = vunpack.c.l.b16 %v489
  %v2067 = vunpack.c.h.b16 %v489
  %v2068 = vunpack.c.l.b16 %v490
  %v2069 = vunpack.c.h.b16 %v490
  %v2070 = vunpack.c.l.b16 %v491
  %v2071 = vunpack.c.h.b16 %v491
  %v2072 = vunpack.c.l.b16 %v492
  %v2073 = vunpack.c.h.b16 %v492
  %v2074 = vunpack.c.l.b16 %v493
  %v2075 = vunpack.c.h.b16 %v493
  %v2076 = vunpack.c.l.b16 %v494
  %v2077 = vunpack.c.h.b16 %v494
  %v2078 = vunpack.c.l.b16 %v495
  %v2079 = vunpack.c.h.b16 %v495
  %v2080 = vunpack.c.l.b16 %v496
  %v2081 = vunpack.c.h.b16 %v496
  %v2082 = vunpack.c.l.b16 %v497
  %v2083 = vunpack.c.h.b16 %v497
  %v2084 = vunpack.c.l.b16 %v498
  %v2085 = vunpack.c.h.b16 %v498
  %v2086 = vunpack.c.l.b16 %v499
  %v2087 = vunpack.c.h.b16 %v499
  %v2088 = vunpack.c.l.b16 %v500
  %v2089 = vunpack.c.h.b16 %v500
  %v2090 = vunpack.c.l.b16 %v501
  %v2091 = vunpack.c.h.b16 %v501
  %v2092 = vunpack.c.l.b16 %v502
  %v2093 = vunpack.c.h.b16 %v502
  %v2094 = vunpack.c.l.b16 %v503
  %v2095 = vunpack.c.h.b16 %v503
  %v2096 = vunpack.c.l.b16 %v504
  %v2097 = vunpack.c.h.b16 %v504
  %v2098 = vunpack.c.l.b16 %v505
  %v2099 = vunpack.c.h.b16 %v505
  %v2100 = vunpack.c.l.b16 %v506
  %v2101 = vunpack.c.h.b16 %v506
  %v2102 = vunpack.c.l.b16 %v507
  %v2103 = vunpack.c.h.b16 %v507
  %v2104 = vunpack.c.l.b16 %v508
  %v2105 = vunpack.c.h.b16 %v508
  %v2106 = vunpack.c.l.b16 %v509
  %v2107 = vunpack.c.h.b16 %v509
  %v2108 = vunpack.c.l.b16 %v510
  %v2109 = vunpack.c.h.b16 %v510
  %v2110 = vunpack.c.l.b16 %v511
  %v2111 = vunpack.c.h.b16 %v511
  %v2112 = vunpack.c.l.b16 %v512
  %v2113 = vunpack.c.h.b16 %v512
  %v2114 = vunpack.c.l.b16 %v513
  %v2115 = vunpack.c.h.b16 %v513
  %v2116 = vunpack.c.l.b16 %v514
  %v2117 = vunpack.c.h.b16 %v514
  %v2118 = vunpack.c.l.b16 %v515
  %v2119 = vunpack.c.h.b16 %v515
  %v2120 = vunpack.c.l.b16 %v516
  %v2121 = vunpack.c.h.b16 %v516
  %v2122 = vunpack.c.l.b16 %v517
  %v2123 = vunpack.c.h.b16 %v517
  %v2124 = vunpack.c.l.b16 %v518
  %v2125 = vunpack.c.h.b16 %v518
  %v2126 = vunpack.c.l.b16 %v519
  %v2127 = vunpack.c.h.b16 %v519
  %v2128 = vunpack.c.l.b16 %v520
  %v2129 = vunpack.c.h.b16 %v520
  %v2130 = vunpack.c.l.b16 %v521
  %v2131 = vunpack.c.h.b16 %v521
  %v2132 = vunpack.c.l.b16 %v522
  %v2133 = vunpack.c.h.b16 %v522
  %v2134 = vunpack.c.l.b16 %v523
  %v2135 = vunpack.c.h.b16 %v523
  %v2136 = vunpack.c.l.b16 %v524
  %v2137 = vunpack.c.h.b16 %v524
  %v2138 = vunpack.c.l.b16 %v525
  %v2139 = vunpack.c.h.b16 %v525
  %v2140 = vunpack.c.l.b16 %v526
  %v2141 = vunpack.c.h.b16 %v526
  %v2142 = vunpack.c.l.b16 %v527
  %v2143 = vunpack.c.h.b16 %v527
  %v2144 = vunpack.c.l.b16 %v528
  %v2145 = vunpack.c.h.b16 %v528
  %v2146 = vunpack.c.l.b16 %v529
  %v2147 = vunpack.c.h.b16 %v529
  %v2148 = vunpack.c.l.b16 %v530
  %v2149 = vunpack.c.h.b16 %v530
  %v2150 = vunpack.c.l.b16 %v531
  %v2151 = vunpack.c.h.b16 %v531
  %v2152 = vunpack.c.l.b16 %v532
  %v2153 = vunpack.c.h.b16 %v532
  %v2154 = vunpack.c.l.b16 %v533
  %v2155 = vunpack.c.h.b16 %v533
  %v2156 = vunpack.c.l.b16 %v534
  %v2157 = vunpack.c.h.b16 %v534
  %v2158 = vunpack.c.l.b16 %v535
  %v2159 = vunpack.c.h.b16 %v535
  %v2160 = vunpack.c.l.b16 %v536
  %v2161 = vunpack.c.h.b16 %v536
  %v2162 = vunpack.c.l.b16 %v537
  %v2163 = vunpack.c.h.b16 %v537
  %v2164 = vunpack.c.l.b16 %v538
  %v2165 = vunpack.c.h.b16 %v538
  %v2166 = vunpack.c.l.b16 %v539
  %v2167 = vunpack.c.h.b16 %v539
  %v2168 = vunpack.c.l.b16 %v540
  %v2169 = vunpack.c.h.b16 %v540
  %v2170 = vunpack.c.l.b16 %v541
  %v2171 = vunpack.c.h.b16 %v541
  %v2172 = vunpack.c.l.b16 %v542
  %v2173 = vunpack.c.h.b16 %v542
  %v2174 = vunpack.c.l.b16 %v543
  %v2175 = vunpack.c.h.b16 %v543
  %v2176 = vunpack.c.l.b16 %v544
  %v2177 = vunpack.c.h.b16 %v544
  %v2178 = vunpack.c.l.b16 %v545
  %v2179 = vunpack.c.h.b16 %v545
  %v2180 = vunpack.c.l.b16 %v546
  %v2181 = vunpack.c.h.b16 %v546
  %v2182 = vunpack.c.l.b16 %v547
  %v2183 = vunpack.c.h.b16 %v547
  %v2184 = vunpack.c.l.b16 %v548
  %v2185 = vunpack.c.h.b16 %v548
  %v2186 = vunpack.c.l.b16 %v549
  %v2187 = vunpack.c.h.b16 %v549
  %v2188 = vpack.c.b16 %v1168, %v1164
  %v2189 = vpack.c.b16 %v1169, %v1165
  %v2190 = vpack.c.b16 %v1170, %v1166
  %v2191 = vpack.c.b16 %v1171, %v1167
  %v2192 = vpack.c.b16 %v1176, %v1172
  %v2193 = vpack.c.b16 %v1177, %v1173
  %v2194 = vpack.c.b16 %v1178, %v1174
  %v2195 = vpack.c.b16 %v1179, %v1175
  %v2196 = vpack.c.b16 %v1184, %v1180
  %v2197 = vpack.c.b16 %v1185, %v1181
  %v2198 = vpack.c.b16 %v1186, %v1182
  %v2199 = vpack.c.b16 %v1187, %v1183
  %v2200 = vpack.c.b16 %v1192, %v1188
  %v2201 = vpack.c.b16 %v1193, %v1189
  %v2202 = vpack.c.b16 %v1194, %v1190
  %v2203 = vpack.c.b16 %v1195, %v1191
  %v2204 = vpack.c.b16 %v1200, %v1196
  %v2205 = vpack.c.b16 %v1201, %v1197
  %v2206 = vpack.c.b16 %v1202, %v1198
  %v2207 = vpack.c.b16 %v1203, %v1199
  %v2208 = vpack.c.b16 %v1208, %v1204
  %v2209 = vpack.c.b16 %v1209, %v1205
  %v2210 = vpack.c.b16 %v1210, %v1206
  %v2211 = vpack.c.b16 %v1211, %v1207
  %v2212 = vpack.c.b16 %v1216, %v1212
  %v2213 = vpack.c.b16 %v1217, %v1213
  %v2214 = vpack.c.b16 %v1218, %v1214
  %v2215 = vpack.c.b16 %v1219, %v1215
  %v2216 = vpack.c.b16 %v1224, %v1220
  %v2217 = vpack.c.b16 %v1225, %v1221
  %v2218 = vpack.c.b16 %v1226, %v1222
  %v2219 = vpack.c.b16 %v1227, %v1223
  %v2220 = vpack.c.b16 %v1232, %v1228
  %v2221 = vpack.c.b16 %v1233, %v1229
  %v2222 = vpack.c.b16 %v1234, %v1230
  %v2223 = vpack.c.b16 %v1235, %v1231
  %v2224 = vpack.c.b16 %v1240, %v1236
  %v2225 = vpack.c.b16 %v1241, %v1237
  %v2226 = vpack.c.b16 %v1242, %v1238
  %v2227 = vpack.c.b16 %v1243, %v1239
  %v2228 = vpack.c.b16 %v1248, %v1244
  %v2229 = vpack.c.b16 %v1249, %v1245
  %v2230 = vpack.c.b16 %v1250, %v1246
  %v2231 = vpack.c.b16 %v1251, %v1247
  %v2232 = vpack.c.b16 %v1256, %v1252
  %v2233 = vpack.c.b16 %v1257, %v1253
  %v2234 = vpack.c.b16 %v1258, %v1254
  %v2235 = vpack.c.b16 %v1259, %v1255
  %v2236 = vpack.c.b16 %v1264, %v1260
  %v2237 = vpack.c.b16 %v1265, %v1261
  %v2238 = vpack.c.b16 %v1266, %v1262
  %v2239 = vpack.c.b16 %v1267, %v1263
  %v2240 = vpack.c.b16 %v1272, %v1268
  %v2241 = vpack.c.b16 %v1273, %v1269
  %v2242 = vpack.c.b16 %v1274, %v1270
  %v2243 = vpack.c.b16 %v1275, %v1271
  %v2244 = vpack.c.b16 %v1280, %v1276
  %v2245 = vpack.c.b16 %v1281, %v1277
  %v2246 = vpack.c.b16 %v1282, %v1278
  %v2247 = vpack.c.b16 %v1283, %v1279
  %v2248 = vpack.c.b16 %v1288, %v1284
  %v2249 = vpack.c.b16 %v1289, %v1285
  %v2250 = vpack.c.b16 %v1290, %v1286
  %v2251 = vpack.c.b16 %v1291, %v1287
  %v2252 = vpack.c.b16 %v1296, %v1292
  %v2253 = vpack.c.b16 %v1297, %v1293
  %v2254 = vpack.c.b16 %v1298, %v1294
  %v2255 = vpack.c.b16 %v1299, %v1295
  %v2256 = vpack.c.b16 %v1304, %v1300
  %v2257 = vpack.c.b16 %v1305, %v1301
  %v2258 = vpack.c.b16 %v1306, %v1302
  %v2259 = vpack.c.b16 %v1307, %v1303
  %v2260 = vpack.c.b16 %v1312, %v1308
  %v2261 = vpack.c.b16 %v1313, %v1309
  %v2262 = vpack.c.b16 %v1314, %v1310
  %v2263 = vpack.c.b16 %v1315, %v1311
  %v2264 = vpack.c.b16 %v1320, %v1316
  %v2265 = vpack.c.b16 %v1321, %v1317
  %v2266 = vpack.c.b16 %v1322, %v1318
  %v2267 = vpack.c.b16 %v1323, %v1319
  %v2268 = vpack.c.b16 %v1328, %v1324
  %v2269 = vpack.c.b16 %v1329, %v1325
  %v2270 = vpack.c.b16 %v1330, %v1326
  %v2271 = vpack.c.b16 %v1331, %v1327
  %v2272 = vpack.c.b16 %v1336, %v1332
  %v2273 = vpack.c.b16 %v1337, %v1333
  %v2274 = vpack.c.b16 %v1338, %v1334
  %v2275 = vpack.c.b16 %v1339, %v1335
  %v2276 = vpack.c.b16 %v1344, %v1340
  %v2277 = vpack.c.b16 %v1345, %v1341
  %v2278 = vpack.c.b16 %v1346, %v1342
  %v2279 = vpack.c.b16 %v1347, %v1343
  %v2280 = vpack.c.b16 %v1352, %v1348
  %v2281 = vpack.c.b16 %v1353, %v1349
  %v2282 = vpack.c.b16 %v1354, %v1350
  %v2283 = vpack.c.b16 %v1355, %v1351
  %v2284 = vpack.c.b16 %v1360, %v1356
  %v2285 = vpack.c.b16 %v1361, %v1357
  %v2286 = vpack.c.b16 %v1362, %v1358
  %v2287 = vpack.c.b16 %v1363, %v1359
  %v2288 = vpack.c.b16 %v1368, %v1364
  %v2289 = vpack.c.b16 %v1369, %v1365
  %v2290 = vpack.c.b16 %v1370, %v1366
  %v2291 = vpack.c.b16 %v1371, %v1367
  %v2292 = vpack.c.b16 %v1376, %v1372
  %v2293 = vpack.c.b16 %v1377, %v1373
  %v2294 = vpack.c.b16 %v1378, %v1374
  %v2295 = vpack.c.b16 %v1379, %v1375
  %v2296 = vpack.c.b16 %v1384, %v1380
  %v2297 = vpack.c.b16 %v1385, %v1381
  %v2298 = vpack.c.b16 %v1386, %v1382
  %v2299 = vpack.c.b16 %v1387, %v1383
  %v2300 = vpack.c.b16 %v1392, %v1388
  %v2301 = vpack.c.b16 %v1393, %v1389
  %v2302 = vpack.c.b16 %v1394, %v1390
  %v2303 = vpack.c.b16 %v1395, %v1391
  %v2304 = vpack.c.b16 %v1400, %v1396
  %v2305 = vpack.c.b16 %v1401, %v1397
  %v2306 = vpack.c.b16 %v1402, %v1398
  %v2307 = vpack.c.b16 %v1403, %v1399
  %v2308 = vpack.c.b16 %v1408, %v1404
  %v2309 = vpack.c.b16 %v1409, %v1405
  %v2310 = vpack.c.b16 %v1410, %v1406
  %v2311 = vpack.c.b16 %v1411, %v1407
  %v2312 = vpack.c.b16 %v1416, %v1412
  %v2313 = vpack.c.b16 %v1417, %v1413
  %v2314 = vpack.c.b16 %v1418, %v1414
  %v2315 = vpack.c.b16 %v1419, %v1415
  %v2316 = vpack.c.b16 %v1424, %v1420
  %v2317 = vpack.c.b16 %v1425, %v1421
  %v2318 = vpack.c.b16 %v1426, %v1422
  %v2319 = vpack.c.b16 %v1427, %v1423
  %v2320 = vpack.c.b16 %v1432, %v1428
  %v2321 = vpack.c.b16 %v1433, %v1429
  %v2322 = vpack.c.b16 %v1434, %v1430
  %v2323 = vpack.c.b16 %v1435, %v1431
  %v2324 = vpack.c.b16 %v1440, %v1436
  %v2325 = vpack.c.b16 %v1441, %v1437
  %v2326 = vpack.c.b16 %v1442, %v1438
  %v2327 = vpack.c.b16 %v1443, %v1439
  %v2328 = vpack.c.b16 %v1448, %v1444
  %v2329 = vpack.c.b16 %v1449, %v1445
  %v2330 = vpack.c.b16 %v1450, %v1446
  %v2331 = vpack.c.b16 %v1451, %v1447
  %v2332 = vpack.c.b16 %v1456, %v1452
  %v2333 = vpack.c.b16 %v1457, %v1453
  %v2334 = vpack.c.b16 %v1458, %v1454
  %v2335 = vpack.c.b16 %v1459, %v1455
  %v2336 = vpack.c.b16 %v1464, %v1460
  %v2337 = vpack.c.b16 %v1465, %v1461
  %v2338 = vpack.c.b16 %v1466, %v1462
  %v2339 = vpack.c.b16 %v1467, %v1463
  %v2340 = vpack.c.b16 %v1472, %v1468
  %v2341 = vpack.c.b16 %v1473, %v1469
  %v2342 = vpack.c.b16 %v1474, %v1470
  %v2343 = vpack.c.b16 %v1475, %v1471
  %v2344 = vpack.c.b16 %v1480, %v1476
  %v2345 = vpack.c.b16 %v1481, %v1477
  %v2346 = vpack.c.b16 %v1482, %v1478
  %v2347 = vpack.c.b16 %v1483, %v1479
  %v2348 = vpack.c.b16 %v1488, %v1484
  %v2349 = vpack.c.b16 %v1489, %v1485
  %v2350 = vpack.c.b16 %v1490, %v1486
  %v2351 = vpack.c.b16 %v1491, %v1487
  %v2352 = vpack.c.b16 %v1496, %v1492
  %v2353 = vpack.c.b16 %v1497, %v1493
  %v2354 = vpack.c.b16 %v1498, %v1494
  %v2355 = vpack.c.b16 %v1499, %v1495
  %v2356 = vpack.c.b16 %v1504, %v1500
  %v2357 = vpack.c.b16 %v1505, %v1501
  %v2358 = vpack.c.b16 %v1506, %v1502
  %v2359 = vpack.c.b16 %v1507, %v1503
  %v2360 = vpack.c.b16 %v1512, %v1508
  %v2361 = vpack.c.b16 %v1513, %v1509
  %v2362 = vpack.c.b16 %v1514, %v1510
  %v2363 = vpack.c.b16 %v1515, %v1511
  %v2364 = vpack.c.b16 %v1520, %v1516
  %v2365 = vpack.c.b16 %v1521, %v1517
  %v2366 = vpack.c.b16 %v1522, %v1518
  %v2367 = vpack.c.b16 %v1523, %v1519
  %v2368 = vpack.c.b16 %v1528, %v1524
  %v2369 = vpack.c.b16 %v1529, %v1525
  %v2370 = vpack.c.b16 %v1530, %v1526
  %v2371 = vpack.c.b16 %v1531, %v1527
  %v2372 = vpack.c.b16 %v1536, %v1532
  %v2373 = vpack.c.b16 %v1537, %v1533
  %v2374 = vpack.c.b16 %v1538, %v1534
  %v2375 = vpack.c.b16 %v1539, %v1535
  %v2376 = vpack.c.b16 %v1544, %v1540
  %v2377 = vpack.c.b16 %v1545, %v1541
  %v2378 = vpack.c.b16 %v1546, %v1542
  %v2379 = vpack.c.b16 %v1547, %v1543
  %v2380 = vpack.c.b16 %v1552, %v1548
  %v2381 = vpack.c.b16 %v1553, %v1549
  %v2382 = vpack.c.b16 %v1554, %v1550
  %v2383 = vpack.c.b16 %v1555, %v1551
  %v2384 = vpack.c.b16 %v1560, %v1556
  %v2385 = vpack.c.b16 %v1561, %v1557
  %v2386 = vpack.c.b16 %v1562, %v1558
  %v2387 = vpack.c.b16 %v1563, %v1559
  %v2388 = vpack.c.b16 %v1568, %v1564
  %v2389 = vpack.c.b16 %v1569, %v1565
  %v2390 = vpack.c.b16 %v1570, %v1566
  %v2391 = vpack.c.b16 %v1571, %v1567
  %v2392 = vpack.c.b16 %v1576, %v1572
  %v2393 = vpack.c.b16 %v1577, %v1573
  %v2394 = vpack.c.b16 %v1578, %v1574
  %v2395 = vpack.c.b16 %v1579, %v1575
  %v2396 = vpack.c.b16 %v1584, %v1580
  %v2397 = vpack.c.b16 %v1585, %v1581
  %v2398 = vpack.c.b16 %v1586, %v1582
  %v2399 = vpack.c.b16 %v1587, %v1583
  %v2400 = vpack.c.b16 %v1592, %v1588
  %v2401 = vpack.c.b16 %v1593, %v1589
  %v2402 = vpack.c.b16 %v1594, %v1590
  %v2403 = vpack.c.b16 %v1595, %v1591
  %v2404 = vpack.c.b16 %v1600, %v1596
  %v2405 = vpack.c.b16 %v1601, %v1597
  %v2406 = vpack.c.b16 %v1602, %v1598
  %v2407 = vpack.c.b16 %v1603, %v1599
  %v2408 = vpack.c.b16 %v1608, %v1604
  %v2409 = vpack.c.b16 %v1609, %v1605
  %v2410 = vpack.c.b16 %v1610, %v1606
  %v2411 = vpack.c.b16 %v1611, %v1607
  %v2412 = vpack.c.b16 %v1616, %v1612
  %v2413 = vpack.c.b16 %v1617, %v1613
  %v2414 = vpack.c.b16 %v1618, %v1614
  %v2415 = vpack.c.b16 %v1619, %v1615
  %v2416 = vpack.c.b16 %v1624, %v1620
  %v2417 = vpack.c.b16 %v1625, %v1621
  %v2418 = vpack.c.b16 %v1626, %v1622
  %v2419 = vpack.c.b16 %v1627, %v1623
  %v2420 = vpack.c.b16 %v1632, %v1628
  %v2421 = vpack.c.b16 %v1633, %v1629
  %v2422 = vpack.c.b16 %v1634, %v1630
  %v2423 = vpack.c.b16 %v1635, %v1631
  %v2424 = vpack.c.b16 %v1640, %v1636
  %v2425 = vpack.c.b16 %v1641, %v1637
  %v2426 = vpack.c.b16 %v1642, %v1638
  %v2427 = vpack.c.b16 %v1643, %v1639
  %v2428 = vpack.c.b16 %v1648, %v1644
  %v2429 = vpack.c.b16 %v1649, %v1645
  %v2430 = vpack.c.b16 %v1650, %v1646
  %v2431 = vpack.c.b16 %v1651, %v1647
  %v2432 = vpack.c.b16 %v1656, %v1652
  %v2433 = vpack.c.b16 %v1657, %v1653
  %v2434 = vpack.c.b16 %v1658, %v1654
  %v2435 = vpack.c.b16 %v1659, %v1655
  %v2436 = vpack.c.b16 %v1664, %v1660
  %v2437 = vpack.c.b16 %v1665, %v1661
  %v2438 = vpack.c.b16 %v1666, %v1662
  %v2439 = vpack.c.b16 %v1667, %v1663
  %v2440 = vpack.c.b16 %v1672, %v1668
  %v2441 = vpack.c.b16 %v1673, %v1669
  %v2442 = vpack.c.b16 %v1674, %v1670
  %v2443 = vpack.c.b16 %v1675, %v1671
  %v2444 = vpack.c.b16 %v1680, %v1676
  %v2445 = vpack.c.b16 %v1681, %v1677
  %v2446 = vpack.c.b16 %v1682, %v1678
  %v2447 = vpack.c.b16 %v1683, %v1679
  %v2448 = vpack.c.b16 %v1688, %v1684
  %v2449 = vpack.c.b16 %v1689, %v1685
  %v2450 = vpack.c.b16 %v1690, %v1686
  %v2451 = vpack.c.b16 %v1691, %v1687
  %v2452 = vpack.c.b16 %v1696, %v1692
  %v2453 = vpack.c.b16 %v1697, %v1693
  %v2454 = vpack.c.b16 %v1698, %v1694
  %v2455 = vpack.c.b16 %v1699, %v1695
  %v2456 = vpack.c.b16 %v1704, %v1700
  %v2457 = vpack.c.b16 %v1705, %v1701
  %v2458 = vpack.c.b16 %v1706, %v1702
  %v2459 = vpack.c.b16 %v1707, %v1703
  %v2460 = vpack.c.b16 %v1712, %v1708
  %v2461 = vpack.c.b16 %v1713, %v1709
  %v2462 = vpack.c.b16 %v1714, %v1710
  %v2463 = vpack.c.b16 %v1715, %v1711
  %v2464 = vpack.c.b16 %v1720, %v1716
  %v2465 = vpack.c.b16 %v1721, %v1717
  %v2466 = vpack.c.b16 %v1722, %v1718
  %v2467 = vpack.c.b16 %v1723, %v1719
  %v2468 = vpack.c.b16 %v1728, %v1724
  %v2469 = vpack.c.b16 %v1729, %v1725
  %v2470 = vpack.c.b16 %v1730, %v1726
  %v2471 = vpack.c.b16 %v1731, %v1727
  %v2472 = vpack.c.b16 %v1736, %v1732
  %v2473 = vpack.c.b16 %v1737, %v1733
  %v2474 = vpack.c.b16 %v1738, %v1734
  %v2475 = vpack.c.b16 %v1739, %v1735
  %v2476 = vpack.c.b16 %v1744, %v1740
  %v2477 = vpack.c.b16 %v1745, %v1741
  %v2478 = vpack.c.b16 %v1746, %v1742
  %v2479 = vpack.c.b16 %v1747, %v1743
  %v2480 = vpack.c.b16 %v1752, %v1748
  %v2481 = vpack.c.b16 %v1753, %v1749
  %v2482 = vpack.c.b16 %v1754, %v1750
  %v2483 = vpack.c.b16 %v1755, %v1751
  %v2484 = vpack.c.b16 %v1760, %v1756
  %v2485 = vpack.c.b16 %v1761, %v1757
  %v2486 = vpack.c.b16 %v1762, %v1758
  %v2487 = vpack.c.b16 %v1763, %v1759
  %v2488 = vpack.c.b16 %v1768, %v1764
  %v2489 = vpack.c.b16 %v1769, %v1765
  %v2490 = vpack.c.b16 %v1770, %v1766
  %v2491 = vpack.c.b16 %v1771, %v1767
  %v2492 = vpack.c.b16 %v1776, %v1772
  %v2493 = vpack.c.b16 %v1777, %v1773
  %v2494 = vpack.c.b16 %v1778, %v1774
  %v2495 = vpack.c.b16 %v1779, %v1775
  %v2496 = vpack.c.b16 %v1784, %v1780
  %v2497 = vpack.c.b16 %v1785, %v1781
  %v2498 = vpack.c.b16 %v1786, %v1782
  %v2499 = vpack.c.b16 %v1787, %v1783
  %v2500 = vpack.c.b16 %v1792, %v1788
  %v2501 = vpack.c.b16 %v1793, %v1789
  %v2502 = vpack.c.b16 %v1794, %v1790
  %v2503 = vpack.c.b16 %v1795, %v1791
  %v2504 = vpack.c.b16 %v1800, %v1796
  %v2505 = vpack.c.b16 %v1801, %v1797
  %v2506 = vpack.c.b16 %v1802, %v1798
  %v2507 = vpack.c.b16 %v1803, %v1799
  %v2508 = vpack.c.b16 %v1808, %v1804
  %v2509 = vpack.c.b16 %v1809, %v1805
  %v2510 = vpack.c.b16 %v1810, %v1806
  %v2511 = vpack.c.b16 %v1811, %v1807
  %v2512 = vpack.c.b16 %v1816, %v1812
  %v2513 = vpack.c.b16 %v1817, %v1813
  %v2514 = vpack.c.b16 %v1818, %v1814
  %v2515 = vpack.c.b16 %v1819, %v1815
  %v2516 = vpack.c.b16 %v1824, %v1820
  %v2517 = vpack.c.b16 %v1825, %v1821
  %v2518 = vpack.c.b16 %v1826, %v1822
  %v2519 = vpack.c.b16 %v1827, %v1823
  %v2520 = vpack.c.b16 %v1832, %v1828
  %v2521 = vpack.c.b16 %v1833, %v1829
  %v2522 = vpack.c.b16 %v1834, %v1830
  %v2523 = vpack.c.b16 %v1835, %v1831
  %v2524 = vpack.c.b16 %v1840, %v1836
  %v2525 = vpack.c.b16 %v1841, %v1837
  %v2526 = vpack.c.b16 %v1842, %v1838
  %v2527 = vpack.c.b16 %v1843, %v1839
  %v2528 = vpack.c.b16 %v1848, %v1844
  %v2529 = vpack.c.b16 %v1849, %v1845
  %v2530 = vpack.c.b16 %v1850, %v1846
  %v2531 = vpack.c.b16 %v1851, %v1847
  %v2532 = vpack.c.b16 %v1856, %v1852
  %v2533 = vpack.c.b16 %v1857, %v1853
  %v2534 = vpack.c.b16 %v1858, %v1854
  %v2535 = vpack.c.b16 %v1859, %v1855
  %v2536 = vpack.c.b16 %v1864, %v1860
  %v2537 = vpack.c.b16 %v1865, %v1861
  %v2538 = vpack.c.b16 %v1866, %v1862
  %v2539 = vpack.c.b16 %v1867, %v1863
  %v2540 = vpack.c.b16 %v1872, %v1868
  %v2541 = vpack.c.b16 %v1873, %v1869
  %v2542 = vpack.c.b16 %v1874, %v1870
  %v2543 = vpack.c.b16 %v1875, %v1871
  %v2544 = vpack.c.b16 %v1880, %v1876
  %v2545 = vpack.c.b16 %v1881, %v1877
  %v2546 = vpack.c.b16 %v1882, %v1878
  %v2547 = vpack.c.b16 %v1883, %v1879
  %v2548 = vpack.c.b16 %v1888, %v1884
  %v2549 = vpack.c.b16 %v1889, %v1885
  %v2550 = vpack.c.b16 %v1890, %v1886
  %v2551 = vpack.c.b16 %v1891, %v1887
  %v2552 = vpack.c.b16 %v1896, %v1892
  %v2553 = vpack.c.b16 %v1897, %v1893
  %v2554 = vpack.c.b16 %v1898, %v1894
  %v2555 = vpack.c.b16 %v1899, %v1895
  %v2556 = vpack.c.b16 %v1904, %v1900
  %v2557 = vpack.c.b16 %v1905, %v1901
  %v2558 = vpack.c.b16 %v1906, %v1902
  %v2559 = vpack.c.b16 %v1907, %v1903
  %v2560 = vpack.c.b16 %v1912, %v1908
  %v2561 = vpack.c.b16 %v1913, %v1909
  %v2562 = vpack.c.b16 %v1914, %v1910
  %v2563 = vpack.c.b16 %v1915, %v1911
  %v2564 = vpack.c.b16 %v1920, %v1916
  %v2565 = vpack.c.b16 %v1921, %v1917
  %v2566 = vpack.c.b16 %v1922, %v1918
  %v2567 = vpack.c.b16 %v1923, %v1919
  %v2568 = vpack.c.b16 %v1928, %v1924
  %v2569 = vpack.c.b16 %v1929, %v1925
  %v2570 = vpack.c.b16 %v1930, %v1926
  %v2571 = vpack.c.b16 %v1931, %v1927
  %v2572 = vpack.c.b16 %v1936, %v1932
  %v2573 = vpack.c.b16 %v1937, %v1933
  %v2574 = vpack.c.b16 %v1938, %v1934
  %v2575 = vpack.c.b16 %v1939, %v1935
  %v2576 = vpack.c.b16 %v1944, %v1940
  %v2577 = vpack.c.b16 %v1945, %v1941
  %v2578 = vpack.c.b16 %v1946, %v1942
  %v2579 = vpack.c.b16 %v1947, %v1943
  %v2580 = vpack.c.b16 %v1952, %v1948
  %v2581 = vpack.c.b16 %v1953, %v1949
  %v2582 = vpack.c.b16 %v1954, %v1950
  %v2583 = vpack.c.b16 %v1955, %v1951
  %v2584 = vpack.c.b16 %v1960, %v1956
  %v2585 = vpack.c.b16 %v1961, %v1957
  %v2586 = vpack.c.b16 %v1962, %v1958
  %v2587 = vpack.c.b16 %v1963, %v1959
  %v2588 = vpack.c.b16 %v1968, %v1964
  %v2589 = vpack.c.b16 %v1969, %v1965
  %v2590 = vpack.c.b16 %v1970, %v1966
  %v2591 = vpack.c.b16 %v1971, %v1967
  %v2592 = vpack.c.b16 %v1976, %v1972
  %v2593 = vpack.c.b16 %v1977, %v1973
  %v2594 = vpack.c.b16 %v1978, %v1974
  %v2595 = vpack.c.b16 %v1979, %v1975
  %v2596 = vpack.c.b16 %v1984, %v1980
  %v2597 = vpack.c.b16 %v1985, %v1981
  %v2598 = vpack.c.b16 %v1986, %v1982
  %v2599 = vpack.c.b16 %v1987, %v1983
  %v2600 = vpack.c.b16 %v1992, %v1988
  %v2601 = vpack.c.b16 %v1993, %v1989
  %v2602 = vpack.c.b16 %v1994, %v1990
  %v2603 = vpack.c.b16 %v1995, %v1991
  %v2604 = vpack.c.b16 %v2000, %v1996
  %v2605 = vpack.c.b16 %v2001, %v1997
  %v2606 = vpack.c.b16 %v2002, %v1998
  %v2607 = vpack.c.b16 %v2003, %v1999
  %v2608 = vpack.c.b16 %v2008, %v2004
  %v2609 = vpack.c.b16 %v2009, %v2005
  %v2610 = vpack.c.b16 %v2010, %v2006
  %v2611 = vpack.c.b16 %v2011, %v2007
  %v2612 = vpack.c.b16 %v2016, %v2012
  %v2613 = vpack.c.b16 %v2017, %v2013
  %v2614 = vpack.c.b16 %v2018, %v2014
  %v2615 = vpack.c.b16 %v2019, %v2015
  %v2616 = vpack.c.b16 %v2024, %v2020
  %v2617 = vpack.c.b16 %v2025, %v2021
  %v2618 = vpack.c.b16 %v2026, %v2022
  %v2619 = vpack.c.b16 %v2027, %v2023
  %v2620 = vpack.c.b16 %v2032, %v2028
  %v2621 = vpack.c.b16 %v2033, %v2029
  %v2622 = vpack.c.b16 %v2034, %v2030
  %v2623 = vpack.c.b16 %v2035, %v2031
  %v2624 = vpack.c.b16 %v2040, %v2036
  %v2625 = vpack.c.b16 %v2041, %v2037
  %v2626 = vpack.c.b16 %v2042, %v2038
  %v2627 = vpack.c.b16 %v2043, %v2039
  %v2628 = vpack.c.b16 %v2048, %v2044
  %v2629 = vpack.c.b16 %v2049, %v2045
  %v2630 = vpack.c.b16 %v2050, %v2046
  %v2631 = vpack.c.b16 %v2051, %v2047
  %v2632 = vpack.c.b16 %v2056, %v2052
  %v2633 = vpack.c.b16 %v2057, %v2053
  %v2634 = vpack.c.b16 %v2058, %v2054
  %v2635 = vpack.c.b16 %v2059, %v2055
  %v2636 = vpack.c.b16 %v2064, %v2060
  %v2637 = vpack.c.b16 %v2065, %v2061
  %v2638 = vpack.c.b16 %v2066, %v2062
  %v2639 = vpack.c.b16 %v2067, %v2063
  %v2640 = vpack.c.b16 %v2072, %v2068
  %v2641 = vpack.c.b16 %v2073, %v2069
  %v2642 = vpack.c.b16 %v2074, %v2070
  %v2643 = vpack.c.b16 %v2075, %v2071
  %v2644 = vpack.c.b16 %v2080, %v2076
  %v2645 = vpack.c.b16 %v2081, %v2077
  %v2646 = vpack.c.b16 %v2082, %v2078
  %v2647 = vpack.c.b16 %v2083, %v2079
  %v2648 = vpack.c.b16 %v2088, %v2084
  %v2649 = vpack.c.b16 %v2089, %v2085
  %v2650 = vpack.c.b16 %v2090, %v2086
  %v2651 = vpack.c.b16 %v2091, %v2087
  %v2652 = vpack.c.b16 %v2096, %v2092
  %v2653 = vpack.c.b16 %v2097, %v2093
  %v2654 = vpack.c.b16 %v2098, %v2094
  %v2655 = vpack.c.b16 %v2099, %v2095
  %v2656 = vpack.c.b16 %v2104, %v2100
  %v2657 = vpack.c.b16 %v2105, %v2101
  %v2658 = vpack.c.b16 %v2106, %v2102
  %v2659 = vpack.c.b16 %v2107, %v2103
  %v2660 = vpack.c.b16 %v2112, %v2108
  %v2661 = vpack.c.b16 %v2113, %v2109
  %v2662 = vpack.c.b16 %v2114, %v2110
  %v2663 = vpack.c.b16 %v2115, %v2111
  %v2664 = vpack.c.b16 %v2120, %v2116
  %v2665 = vpack.c.b16 %v2121, %v2117
  %v2666 = vpack.c.b16 %v2122, %v2118
  %v2667 = vpack.c.b16 %v2123, %v2119
  %v2668 = vpack.c.b16 %v2128, %v2124
  %v2669 = vpack.c.b16 %v2129, %v2125
  %v2670 = vpack.c.b16 %v2130, %v2126
  %v2671 = vpack.c.b16 %v2131, %v2127
  %v2672 = vpack.c.b16 %v2136, %v2132
  %v2673 = vpack.c.b16 %v2137, %v2133
  %v2674 = vpack.c.b16 %v2138, %v2134
  %v2675 = vpack.c.b16 %v2139, %v2135
  %v2676 = vpack.c.b16 %v2144, %v2140
  %v2677 = vpack.c.b16 %v2145, %v2141
  %v2678 = vpack.c.b16 %v2146, %v2142
  %v2679 = vpack.c.b16 %v2147, %v2143
  %v2680 = vpack.c.b16 %v2152, %v2148
  %v2681 = vpack.c.b16 %v2153, %v2149
  %v2682 = vpack.c.b16 %v2154, %v2150
  %v2683 = vpack.c.b16 %v2155, %v2151
  %v2684 = vpack.c.b16 %v2160, %v2156
  %v2685 = vpack.c.b16 %v2161, %v2157
  %v2686 = vpack.c.b16 %v2162, %v2158
  %v2687 = vpack.c.b16 %v2163, %v2159
  %v2688 = vpack.c.b16 %v2168, %v2164
  %v2689 = vpack.c.b16 %v2169, %v2165
  %v2690 = vpack.c.b16 %v2170, %v2166
  %v2691 = vpack.c.b16 %v2171, %v2167
  %v2692 = vpack.c.b16 %v2176, %v2172
  %v2693 = vpack.c.b16 %v2177, %v2173
  %v2694 = vpack.c.b16 %v2178, %v2174
  %v2695 = vpack.c.b16 %v2179, %v2175
  %v2696 = vpack.c.b16 %v2184, %v2180
  %v2697 = vpack.c.b16 %v2185, %v2181
  %v2698 = vpack.c.b16 %v2186, %v2182
  %v2699 = vpack.c.b16 %v2187, %v2183
  %3212 = vmatprep.subr.bf16.mxu0 %v2189
  %3213 = vmatpush1.bf16.msra.mxu0 %v2188
  %3214 = vmatprep.subr.bf16.mxu0 %v2193
  %3215 = vmatpush1.bf16.msra.mxu0 %v2192
  %3216 = vmatprep.subr.bf16.mxu0 %v2197
  %3217 = vmatpush1.bf16.msra.mxu0 %v2196
  %3218 = vmatprep.subr.bf16.mxu0 %v2201
  %3219 = vmatpush1.bf16.msra.mxu0 %v2200
  %3220 = vmatprep.subr.bf16.mxu0 %v2205
  %3221 = vmatpush1.bf16.msra.mxu0 %v2204
  %3222 = vmatprep.subr.bf16.mxu0 %v2209
  %3223 = vmatpush1.bf16.msra.mxu0 %v2208
  %3224 = vmatprep.subr.bf16.mxu0 %v2213
  %3225 = vmatpush1.bf16.msra.mxu0 %v2212
  %3226 = vmatprep.subr.bf16.mxu0 %v2217
  %3227 = vmatpush1.bf16.msra.mxu0 %v2216
  %3228 = vmatprep.subr.bf16.mxu0 %v2221
  %3229 = vmatpush1.bf16.msra.mxu0 %v2220
  %3230 = vmatprep.subr.bf16.mxu0 %v2225
  %3231 = vmatpush1.bf16.msra.mxu0 %v2224
  %3232 = vmatprep.subr.bf16.mxu0 %v2229
  %3233 = vmatpush1.bf16.msra.mxu0 %v2228
  %3234 = vmatprep.subr.bf16.mxu0 %v2233
  %3235 = vmatpush1.bf16.msra.mxu0 %v2232
  %3236 = vmatprep.subr.bf16.mxu0 %v2237
  %3237 = vmatpush1.bf16.msra.mxu0 %v2236
  %3238 = vmatprep.subr.bf16.mxu0 %v2241
  %3239 = vmatpush1.bf16.msra.mxu0 %v2240
  %3240 = vmatprep.subr.bf16.mxu0 %v2245
  %3241 = vmatpush1.bf16.msra.mxu0 %v2244
  %3242 = vmatprep.subr.bf16.mxu0 %v2249
  %3243 = vmatpush1.bf16.msra.mxu0 %v2248
  %3244 = vmatprep.mubr.bf16.mxu0 %v621
  %3245 = vmatmul.mubr.bf16.gmra.mrb[0].mxu0 %v620
  %v3246 = vpop.f32.mrb[0].mxu0
  %v3247 = vadd.f32 %v555, %v3246
  %v3248 = vpop.f32.mrb[0].mxu0
  %v3249 = vadd.f32 %v559, %v3248
  %v3250 = vpop.f32.mrb[0].mxu0
  %v3251 = vadd.f32 %v555, %v3250
  %v3252 = vpop.f32.mrb[0].mxu0
  %v3253 = vadd.f32 %v559, %v3252
  %3254 = vdwg.mxu0
  %3255 = vmatprep.subr.bf16.mxu0 %v2253
  %3256 = vmatpush1.bf16.msra.mxu0 %v2252
  %3257 = vmatprep.subr.bf16.mxu0 %v2257
  %3258 = vmatpush1.bf16.msra.mxu0 %v2256
  %3259 = vmatprep.subr.bf16.mxu0 %v2261
  %3260 = vmatpush1.bf16.msra.mxu0 %v2260
  %3261 = vmatprep.subr.bf16.mxu0 %v2265
  %3262 = vmatpush1.bf16.msra.mxu0 %v2264
  %3263 = vmatprep.subr.bf16.mxu0 %v2269
  %3264 = vmatpush1.bf16.msra.mxu0 %v2268
  %3265 = vmatprep.subr.bf16.mxu0 %v2273
  %3266 = vmatpush1.bf16.msra.mxu0 %v2272
  %3267 = vmatprep.subr.bf16.mxu0 %v2277
  %3268 = vmatpush1.bf16.msra.mxu0 %v2276
  %3269 = vmatprep.subr.bf16.mxu0 %v2281
  %3270 = vmatpush1.bf16.msra.mxu0 %v2280
  %3271 = vmatprep.subr.bf16.mxu0 %v2285
  %3272 = vmatpush1.bf16.msra.mxu0 %v2284
  %3273 = vmatprep.subr.bf16.mxu0 %v2289
  %3274 = vmatpush1.bf16.msra.mxu0 %v2288
  %3275 = vmatprep.subr.bf16.mxu0 %v2293
  %3276 = vmatpush1.bf16.msra.mxu0 %v2292
  %3277 = vmatprep.subr.bf16.mxu0 %v2297
  %3278 = vmatpush1.bf16.msra.mxu0 %v2296
  %3279 = vmatprep.subr.bf16.mxu0 %v2301
  %3280 = vmatpush1.bf16.msra.mxu0 %v2300
  %3281 = vmatprep.subr.bf16.mxu0 %v2305
  %3282 = vmatpush1.bf16.msra.mxu0 %v2304
  %3283 = vmatprep.subr.bf16.mxu0 %v2309
  %3284 = vmatpush1.bf16.msra.mxu0 %v2308
  %3285 = vmatprep.subr.bf16.mxu0 %v2313
  %3286 = vmatpush1.bf16.msra.mxu0 %v2312
  %3287 = vmatprep.mubr.bf16.mxu0 %v623
  %3288 = vmatmul.mubr.bf16.gmra.mrb[0].mxu0 %v622
  %v3289 = vpop.f32.mrb[0].mxu0
  %v3290 = vadd.f32 %v3247, %v3289
  %v3291 = vpop.f32.mrb[0].mxu0
  %v3292 = vadd.f32 %v3249, %v3291
  %v3293 = vpop.f32.mrb[0].mxu0
  %v3294 = vadd.f32 %v3251, %v3293
  %v3295 = vpop.f32.mrb[0].mxu0
  %v3296 = vadd.f32 %v3253, %v3295
  %3297 = vdwg.mxu0
  %3298 = vmatprep.subr.bf16.mxu0 %v2317
  %3299 = vmatpush1.bf16.msra.mxu0 %v2316
  %3300 = vmatprep.subr.bf16.mxu0 %v2321
  %3301 = vmatpush1.bf16.msra.mxu0 %v2320
  %3302 = vmatprep.subr.bf16.mxu0 %v2325
  %3303 = vmatpush1.bf16.msra.mxu0 %v2324
  %3304 = vmatprep.subr.bf16.mxu0 %v2329
  %3305 = vmatpush1.bf16.msra.mxu0 %v2328
  %3306 = vmatprep.subr.bf16.mxu0 %v2333
  %3307 = vmatpush1.bf16.msra.mxu0 %v2332
  %3308 = vmatprep.subr.bf16.mxu0 %v2337
  %3309 = vmatpush1.bf16.msra.mxu0 %v2336
  %3310 = vmatprep.subr.bf16.mxu0 %v2341
  %3311 = vmatpush1.bf16.msra.mxu0 %v2340
  %3312 = vmatprep.subr.bf16.mxu0 %v2345
  %3313 = vmatpush1.bf16.msra.mxu0 %v2344
  %3314 = vmatprep.subr.bf16.mxu0 %v2349
  %3315 = vmatpush1.bf16.msra.mxu0 %v2348
  %3316 = vmatprep.subr.bf16.mxu0 %v2353
  %3317 = vmatpush1.bf16.msra.mxu0 %v2352
  %3318 = vmatprep.subr.bf16.mxu0 %v2357
  %3319 = vmatpush1.bf16.msra.mxu0 %v2356
  %3320 = vmatprep.subr.bf16.mxu0 %v2361
  %3321 = vmatpush1.bf16.msra.mxu0 %v2360
  %3322 = vmatprep.subr.bf16.mxu0 %v2365
  %3323 = vmatpush1.bf16.msra.mxu0 %v2364
  %3324 = vmatprep.subr.bf16.mxu0 %v2369
  %3325 = vmatpush1.bf16.msra.mxu0 %v2368
  %3326 = vmatprep.subr.bf16.mxu0 %v2373
  %3327 = vmatpush1.bf16.msra.mxu0 %v2372
  %3328 = vmatprep.subr.bf16.mxu0 %v2377
  %3329 = vmatpush1.bf16.msra.mxu0 %v2376
  %3330 = vmatprep.mubr.bf16.mxu0 %v625
  %3331 = vmatmul.mubr.bf16.gmra.mrb[0].mxu0 %v624
  %v3332 = vpop.f32.mrb[0].mxu0
  %v3333 = vadd.f32 %v3290, %v3332
  %v3334 = vpop.f32.mrb[0].mxu0
  %v3335 = vadd.f32 %v3292, %v3334
  %v3336 = vpop.f32.mrb[0].mxu0
  %v3337 = vadd.f32 %v3294, %v3336
  %v3338 = vpop.f32.mrb[0].mxu0
  %v3339 = vadd.f32 %v3296, %v3338
  %3340 = vdwg.mxu0
  %3341 = vmatprep.subr.bf16.mxu0 %v2381
  %3342 = vmatpush1.bf16.msra.mxu0 %v2380
  %3343 = vmatprep.subr.bf16.mxu0 %v2385
  %3344 = vmatpush1.bf16.msra.mxu0 %v2384
  %3345 = vmatprep.subr.bf16.mxu0 %v2389
  %3346 = vmatpush1.bf16.msra.mxu0 %v2388
  %3347 = vmatprep.subr.bf16.mxu0 %v2393
  %3348 = vmatpush1.bf16.msra.mxu0 %v2392
  %3349 = vmatprep.subr.bf16.mxu0 %v2397
  %3350 = vmatpush1.bf16.msra.mxu0 %v2396
  %3351 = vmatprep.subr.bf16.mxu0 %v2401
  %3352 = vmatpush1.bf16.msra.mxu0 %v2400
  %3353 = vmatprep.subr.bf16.mxu0 %v2405
  %3354 = vmatpush1.bf16.msra.mxu0 %v2404
  %3355 = vmatprep.subr.bf16.mxu0 %v2409
  %3356 = vmatpush1.bf16.msra.mxu0 %v2408
  %3357 = vmatprep.subr.bf16.mxu0 %v2413
  %3358 = vmatpush1.bf16.msra.mxu0 %v2412
  %3359 = vmatprep.subr.bf16.mxu0 %v2417
  %3360 = vmatpush1.bf16.msra.mxu0 %v2416
  %3361 = vmatprep.subr.bf16.mxu0 %v2421
  %3362 = vmatpush1.bf16.msra.mxu0 %v2420
  %3363 = vmatprep.subr.bf16.mxu0 %v2425
  %3364 = vmatpush1.bf16.msra.mxu0 %v2424
  %3365 = vmatprep.subr.bf16.mxu0 %v2429
  %3366 = vmatpush1.bf16.msra.mxu0 %v2428
  %3367 = vmatprep.subr.bf16.mxu0 %v2433
  %3368 = vmatpush1.bf16.msra.mxu0 %v2432
  %3369 = vmatprep.subr.bf16.mxu0 %v2437
  %3370 = vmatpush1.bf16.msra.mxu0 %v2436
  %3371 = vmatprep.subr.bf16.mxu0 %v2441
  %3372 = vmatpush1.bf16.msra.mxu0 %v2440
  %3373 = vmatprep.mubr.bf16.mxu0 %v627
  %3374 = vmatmul.mubr.bf16.gmra.mrb[0].mxu0 %v626
  %v3375 = vpop.f32.mrb[0].mxu0
  %v3376 = vadd.f32 %v3333, %v3375
  %v3377 = vpop.f32.mrb[0].mxu0
  %v3378 = vadd.f32 %v3335, %v3377
  %v3379 = vpop.f32.mrb[0].mxu0
  %v3380 = vadd.f32 %v3337, %v3379
  %v3381 = vpop.f32.mrb[0].mxu0
  %v3382 = vadd.f32 %v3339, %v3381
  %3383 = vdwg.mxu0
  %3384 = vmatprep.subr.bf16.mxu0 %v2445
  %3385 = vmatpush1.bf16.msra.mxu0 %v2444
  %3386 = vmatprep.subr.bf16.mxu0 %v2449
  %3387 = vmatpush1.bf16.msra.mxu0 %v2448
  %3388 = vmatprep.subr.bf16.mxu0 %v2453
  %3389 = vmatpush1.bf16.msra.mxu0 %v2452
  %3390 = vmatprep.subr.bf16.mxu0 %v2457
  %3391 = vmatpush1.bf16.msra.mxu0 %v2456
  %3392 = vmatprep.subr.bf16.mxu0 %v2461
  %3393 = vmatpush1.bf16.msra.mxu0 %v2460
  %3394 = vmatprep.subr.bf16.mxu0 %v2465
  %3395 = vmatpush1.bf16.msra.mxu0 %v2464
  %3396 = vmatprep.subr.bf16.mxu0 %v2469
  %3397 = vmatpush1.bf16.msra.mxu0 %v2468
  %3398 = vmatprep.subr.bf16.mxu0 %v2473
  %3399 = vmatpush1.bf16.msra.mxu0 %v2472
  %3400 = vmatprep.subr.bf16.mxu0 %v2477
  %3401 = vmatpush1.bf16.msra.mxu0 %v2476
  %3402 = vmatprep.subr.bf16.mxu0 %v2481
  %3403 = vmatpush1.bf16.msra.mxu0 %v2480
  %3404 = vmatprep.subr.bf16.mxu0 %v2485
  %3405 = vmatpush1.bf16.msra.mxu0 %v2484
  %3406 = vmatprep.subr.bf16.mxu0 %v2489
  %3407 = vmatpush1.bf16.msra.mxu0 %v2488
  %3408 = vmatprep.subr.bf16.mxu0 %v2493
  %3409 = vmatpush1.bf16.msra.mxu0 %v2492
  %3410 = vmatprep.subr.bf16.mxu0 %v2497
  %3411 = vmatpush1.bf16.msra.mxu0 %v2496
  %3412 = vmatprep.subr.bf16.mxu0 %v2501
  %3413 = vmatpush1.bf16.msra.mxu0 %v2500
  %3414 = vmatprep.subr.bf16.mxu0 %v2505
  %3415 = vmatpush1.bf16.msra.mxu0 %v2504
  %3416 = vmatprep.mubr.bf16.mxu0 %v629
  %3417 = vmatmul.mubr.bf16.gmra.mrb[0].mxu0 %v628
  %v3418 = vpop.f32.mrb[0].mxu0
  %v3419 = vadd.f32 %v3376, %v3418
  %v3420 = vpop.f32.mrb[0].mxu0
  %v3421 = vadd.f32 %v3378, %v3420
  %v3422 = vpop.f32.mrb[0].mxu0
  %v3423 = vadd.f32 %v3380, %v3422
  %v3424 = vpop.f32.mrb[0].mxu0
  %v3425 = vadd.f32 %v3382, %v3424
  %3426 = vdwg.mxu0
  %3427 = vmatprep.subr.bf16.mxu0 %v2509
  %3428 = vmatpush1.bf16.msra.mxu0 %v2508
  %3429 = vmatprep.subr.bf16.mxu0 %v2513
  %3430 = vmatpush1.bf16.msra.mxu0 %v2512
  %3431 = vmatprep.subr.bf16.mxu0 %v2517
  %3432 = vmatpush1.bf16.msra.mxu0 %v2516
  %3433 = vmatprep.subr.bf16.mxu0 %v2521
  %3434 = vmatpush1.bf16.msra.mxu0 %v2520
  %3435 = vmatprep.subr.bf16.mxu0 %v2525
  %3436 = vmatpush1.bf16.msra.mxu0 %v2524
  %3437 = vmatprep.subr.bf16.mxu0 %v2529
  %3438 = vmatpush1.bf16.msra.mxu0 %v2528
  %3439 = vmatprep.subr.bf16.mxu0 %v2533
  %3440 = vmatpush1.bf16.msra.mxu0 %v2532
  %3441 = vmatprep.subr.bf16.mxu0 %v2537
  %3442 = vmatpush1.bf16.msra.mxu0 %v2536
  %3443 = vmatprep.subr.bf16.mxu0 %v2541
  %3444 = vmatpush1.bf16.msra.mxu0 %v2540
  %3445 = vmatprep.subr.bf16.mxu0 %v2545
  %3446 = vmatpush1.bf16.msra.mxu0 %v2544
  %3447 = vmatprep.subr.bf16.mxu0 %v2549
  %3448 = vmatpush1.bf16.msra.mxu0 %v2548
  %3449 = vmatprep.subr.bf16.mxu0 %v2553
  %3450 = vmatpush1.bf16.msra.mxu0 %v2552
  %3451 = vmatprep.subr.bf16.mxu0 %v2557
  %3452 = vmatpush1.bf16.msra.mxu0 %v2556
  %3453 = vmatprep.subr.bf16.mxu0 %v2561
  %3454 = vmatpush1.bf16.msra.mxu0 %v2560
  %3455 = vmatprep.subr.bf16.mxu0 %v2565
  %3456 = vmatpush1.bf16.msra.mxu0 %v2564
  %3457 = vmatprep.subr.bf16.mxu0 %v2569
  %3458 = vmatpush1.bf16.msra.mxu0 %v2568
  %3459 = vmatprep.mubr.bf16.mxu0 %v631
  %3460 = vmatmul.mubr.bf16.gmra.mrb[0].mxu0 %v630
  %v3461 = vpop.f32.mrb[0].mxu0
  %v3462 = vadd.f32 %v3419, %v3461
  %v3463 = vpop.f32.mrb[0].mxu0
  %v3464 = vadd.f32 %v3421, %v3463
  %v3465 = vpop.f32.mrb[0].mxu0
  %v3466 = vadd.f32 %v3423, %v3465
  %v3467 = vpop.f32.mrb[0].mxu0
  %v3468 = vadd.f32 %v3425, %v3467
  %3469 = vdwg.mxu0
  %3470 = vmatprep.subr.bf16.mxu0 %v2573
  %3471 = vmatpush1.bf16.msra.mxu0 %v2572
  %3472 = vmatprep.subr.bf16.mxu0 %v2577
  %3473 = vmatpush1.bf16.msra.mxu0 %v2576
  %3474 = vmatprep.subr.bf16.mxu0 %v2581
  %3475 = vmatpush1.bf16.msra.mxu0 %v2580
  %3476 = vmatprep.subr.bf16.mxu0 %v2585
  %3477 = vmatpush1.bf16.msra.mxu0 %v2584
  %3478 = vmatprep.subr.bf16.mxu0 %v2589
  %3479 = vmatpush1.bf16.msra.mxu0 %v2588
  %3480 = vmatprep.subr.bf16.mxu0 %v2593
  %3481 = vmatpush1.bf16.msra.mxu0 %v2592
  %3482 = vmatprep.subr.bf16.mxu0 %v2597
  %3483 = vmatpush1.bf16.msra.mxu0 %v2596
  %3484 = vmatprep.subr.bf16.mxu0 %v2601
  %3485 = vmatpush1.bf16.msra.mxu0 %v2600
  %3486 = vmatprep.subr.bf16.mxu0 %v2605
  %3487 = vmatpush1.bf16.msra.mxu0 %v2604
  %3488 = vmatprep.subr.bf16.mxu0 %v2609
  %3489 = vmatpush1.bf16.msra.mxu0 %v2608
  %3490 = vmatprep.subr.bf16.mxu0 %v2613
  %3491 = vmatpush1.bf16.msra.mxu0 %v2612
  %3492 = vmatprep.subr.bf16.mxu0 %v2617
  %3493 = vmatpush1.bf16.msra.mxu0 %v2616
  %3494 = vmatprep.subr.bf16.mxu0 %v2621
  %3495 = vmatpush1.bf16.msra.mxu0 %v2620
  %3496 = vmatprep.subr.bf16.mxu0 %v2625
  %3497 = vmatpush1.bf16.msra.mxu0 %v2624
  %3498 = vmatprep.subr.bf16.mxu0 %v2629
  %3499 = vmatpush1.bf16.msra.mxu0 %v2628
  %3500 = vmatprep.subr.bf16.mxu0 %v2633
  %3501 = vmatpush1.bf16.msra.mxu0 %v2632
  %3502 = vmatprep.mubr.bf16.mxu0 %v633
  %3503 = vmatmul.mubr.bf16.gmra.mrb[0].mxu0 %v632
  %v3504 = vpop.f32.mrb[0].mxu0
  %v3505 = vadd.f32 %v3462, %v3504
  %v3506 = vpop.f32.mrb[0].mxu0
  %v3507 = vadd.f32 %v3464, %v3506
  %v3508 = vpop.f32.mrb[0].mxu0
  %v3509 = vadd.f32 %v3466, %v3508
  %v3510 = vpop.f32.mrb[0].mxu0
  %v3511 = vadd.f32 %v3468, %v3510
  %3512 = vdwg.mxu0
  %3513 = vmatprep.subr.bf16.mxu0 %v2637
  %3514 = vmatpush1.bf16.msra.mxu0 %v2636
  %3515 = vmatprep.subr.bf16.mxu0 %v2641
  %3516 = vmatpush1.bf16.msra.mxu0 %v2640
  %3517 = vmatprep.subr.bf16.mxu0 %v2645
  %3518 = vmatpush1.bf16.msra.mxu0 %v2644
  %3519 = vmatprep.subr.bf16.mxu0 %v2649
  %3520 = vmatpush1.bf16.msra.mxu0 %v2648
  %3521 = vmatprep.subr.bf16.mxu0 %v2653
  %3522 = vmatpush1.bf16.msra.mxu0 %v2652
  %3523 = vmatprep.subr.bf16.mxu0 %v2657
  %3524 = vmatpush1.bf16.msra.mxu0 %v2656
  %3525 = vmatprep.subr.bf16.mxu0 %v2661
  %3526 = vmatpush1.bf16.msra.mxu0 %v2660
  %3527 = vmatprep.subr.bf16.mxu0 %v2665
  %3528 = vmatpush1.bf16.msra.mxu0 %v2664
  %3529 = vmatprep.subr.bf16.mxu0 %v2669
  %3530 = vmatpush1.bf16.msra.mxu0 %v2668
  %3531 = vmatprep.subr.bf16.mxu0 %v2673
  %3532 = vmatpush1.bf16.msra.mxu0 %v2672
  %3533 = vmatprep.subr.bf16.mxu0 %v2677
  %3534 = vmatpush1.bf16.msra.mxu0 %v2676
  %3535 = vmatprep.subr.bf16.mxu0 %v2681
  %3536 = vmatpush1.bf16.msra.mxu0 %v2680
  %3537 = vmatprep.subr.bf16.mxu0 %v2685
  %3538 = vmatpush1.bf16.msra.mxu0 %v2684
  %3539 = vmatprep.subr.bf16.mxu0 %v2689
  %3540 = vmatpush1.bf16.msra.mxu0 %v2688
  %3541 = vmatprep.subr.bf16.mxu0 %v2693
  %3542 = vmatpush1.bf16.msra.mxu0 %v2692
  %3543 = vmatprep.subr.bf16.mxu0 %v2697
  %3544 = vmatpush1.bf16.msra.mxu0 %v2696
  %3545 = vmatprep.mubr.bf16.mxu0 %v635
  %3546 = vmatmul.mubr.bf16.gmra.mrb[0].mxu0 %v634
  %v3547 = vpop.f32.mrb[0].mxu0
  %v3548 = vadd.f32 %v3505, %v3547
  %v3549 = vpop.f32.mrb[0].mxu0
  %v3550 = vadd.f32 %v3507, %v3549
  %v3551 = vpop.f32.mrb[0].mxu0
  %v3552 = vadd.f32 %v3509, %v3551
  %v3553 = vpop.f32.mrb[0].mxu0
  %v3554 = vadd.f32 %v3511, %v3553
  %3555 = vdwg.mxu0
  %3556 = vmatprep.subr.bf16.mxu0 %v2191
  %3557 = vmatpush1.bf16.msra.mxu0 %v2190
  %3558 = vmatprep.subr.bf16.mxu0 %v2195
  %3559 = vmatpush1.bf16.msra.mxu0 %v2194
  %3560 = vmatprep.subr.bf16.mxu0 %v2199
  %3561 = vmatpush1.bf16.msra.mxu0 %v2198
  %3562 = vmatprep.subr.bf16.mxu0 %v2203
  %3563 = vmatpush1.bf16.msra.mxu0 %v2202
  %3564 = vmatprep.subr.bf16.mxu0 %v2207
  %3565 = vmatpush1.bf16.msra.mxu0 %v2206
  %3566 = vmatprep.subr.bf16.mxu0 %v2211
  %3567 = vmatpush1.bf16.msra.mxu0 %v2210
  %3568 = vmatprep.subr.bf16.mxu0 %v2215
  %3569 = vmatpush1.bf16.msra.mxu0 %v2214
  %3570 = vmatprep.subr.bf16.mxu0 %v2219
  %3571 = vmatpush1.bf16.msra.mxu0 %v2218
  %3572 = vmatprep.subr.bf16.mxu0 %v2223
  %3573 = vmatpush1.bf16.msra.mxu0 %v2222
  %3574 = vmatprep.subr.bf16.mxu0 %v2227
  %3575 = vmatpush1.bf16.msra.mxu0 %v2226
  %3576 = vmatprep.subr.bf16.mxu0 %v2231
  %3577 = vmatpush1.bf16.msra.mxu0 %v2230
  %3578 = vmatprep.subr.bf16.mxu0 %v2235
  %3579 = vmatpush1.bf16.msra.mxu0 %v2234
  %3580 = vmatprep.subr.bf16.mxu0 %v2239
  %3581 = vmatpush1.bf16.msra.mxu0 %v2238
  %3582 = vmatprep.subr.bf16.mxu0 %v2243
  %3583 = vmatpush1.bf16.msra.mxu0 %v2242
  %3584 = vmatprep.subr.bf16.mxu0 %v2247
  %3585 = vmatpush1.bf16.msra.mxu0 %v2246
  %3586 = vmatprep.subr.bf16.mxu0 %v2251
  %3587 = vmatpush1.bf16.msra.mxu0 %v2250
  %3588 = vmatprep.mubr.bf16.mxu0 %v621
  %3589 = vmatmul.mubr.bf16.gmra.mrb[0].mxu0 %v620
  %v3590 = vpop.f32.mrb[0].mxu0
  %v3591 = vadd.f32 %v563, %v3590
  %v3592 = vpop.f32.mrb[0].mxu0
  %v3593 = vadd.f32 %v567, %v3592
  %v3594 = vpop.f32.mrb[0].mxu0
  %v3595 = vadd.f32 %v563, %v3594
  %v3596 = vpop.f32.mrb[0].mxu0
  %v3597 = vadd.f32 %v567, %v3596
  %3598 = vdwg.mxu0
  %3599 = vmatprep.subr.bf16.mxu0 %v2255
  %3600 = vmatpush1.bf16.msra.mxu0 %v2254
  %3601 = vmatprep.subr.bf16.mxu0 %v2259
  %3602 = vmatpush1.bf16.msra.mxu0 %v2258
  %3603 = vmatprep.subr.bf16.mxu0 %v2263
  %3604 = vmatpush1.bf16.msra.mxu0 %v2262
  %3605 = vmatprep.subr.bf16.mxu0 %v2267
  %3606 = vmatpush1.bf16.msra.mxu0 %v2266
  %3607 = vmatprep.subr.bf16.mxu0 %v2271
  %3608 = vmatpush1.bf16.msra.mxu0 %v2270
  %3609 = vmatprep.subr.bf16.mxu0 %v2275
  %3610 = vmatpush1.bf16.msra.mxu0 %v2274
  %3611 = vmatprep.subr.bf16.mxu0 %v2279
  %3612 = vmatpush1.bf16.msra.mxu0 %v2278
  %3613 = vmatprep.subr.bf16.mxu0 %v2283
  %3614 = vmatpush1.bf16.msra.mxu0 %v2282
  %3615 = vmatprep.subr.bf16.mxu0 %v2287
  %3616 = vmatpush1.bf16.msra.mxu0 %v2286
  %3617 = vmatprep.subr.bf16.mxu0 %v2291
  %3618 = vmatpush1.bf16.msra.mxu0 %v2290
  %3619 = vmatprep.subr.bf16.mxu0 %v2295
  %3620 = vmatpush1.bf16.msra.mxu0 %v2294
  %3621 = vmatprep.subr.bf16.mxu0 %v2299
  %3622 = vmatpush1.bf16.msra.mxu0 %v2298
  %3623 = vmatprep.subr.bf16.mxu0 %v2303
  %3624 = vmatpush1.bf16.msra.mxu0 %v2302
  %3625 = vmatprep.subr.bf16.mxu0 %v2307
  %3626 = vmatpush1.bf16.msra.mxu0 %v2306
  %3627 = vmatprep.subr.bf16.mxu0 %v2311
  %3628 = vmatpush1.bf16.msra.mxu0 %v2310
  %3629 = vmatprep.subr.bf16.mxu0 %v2315
  %3630 = vmatpush1.bf16.msra.mxu0 %v2314
  %3631 = vmatprep.mubr.bf16.mxu0 %v623
  %3632 = vmatmul.mubr.bf16.gmra.mrb[0].mxu0 %v622
  %v3633 = vpop.f32.mrb[0].mxu0
  %v3634 = vadd.f32 %v3591, %v3633
  %v3635 = vpop.f32.mrb[0].mxu0
  %v3636 = vadd.f32 %v3593, %v3635
  %v3637 = vpop.f32.mrb[0].mxu0
  %v3638 = vadd.f32 %v3595, %v3637
  %v3639 = vpop.f32.mrb[0].mxu0
  %v3640 = vadd.f32 %v3597, %v3639
  %3641 = vdwg.mxu0
  %3642 = vmatprep.subr.bf16.mxu0 %v2319
  %3643 = vmatpush1.bf16.msra.mxu0 %v2318
  %3644 = vmatprep.subr.bf16.mxu0 %v2323
  %3645 = vmatpush1.bf16.msra.mxu0 %v2322
  %3646 = vmatprep.subr.bf16.mxu0 %v2327
  %3647 = vmatpush1.bf16.msra.mxu0 %v2326
  %3648 = vmatprep.subr.bf16.mxu0 %v2331
  %3649 = vmatpush1.bf16.msra.mxu0 %v2330
  %3650 = vmatprep.subr.bf16.mxu0 %v2335
  %3651 = vmatpush1.bf16.msra.mxu0 %v2334
  %3652 = vmatprep.subr.bf16.mxu0 %v2339
  %3653 = vmatpush1.bf16.msra.mxu0 %v2338
  %3654 = vmatprep.subr.bf16.mxu0 %v2343
  %3655 = vmatpush1.bf16.msra.mxu0 %v2342
  %3656 = vmatprep.subr.bf16.mxu0 %v2347
  %3657 = vmatpush1.bf16.msra.mxu0 %v2346
  %3658 = vmatprep.subr.bf16.mxu0 %v2351
  %3659 = vmatpush1.bf16.msra.mxu0 %v2350
  %3660 = vmatprep.subr.bf16.mxu0 %v2355
  %3661 = vmatpush1.bf16.msra.mxu0 %v2354
  %3662 = vmatprep.subr.bf16.mxu0 %v2359
  %3663 = vmatpush1.bf16.msra.mxu0 %v2358
  %3664 = vmatprep.subr.bf16.mxu0 %v2363
  %3665 = vmatpush1.bf16.msra.mxu0 %v2362
  %3666 = vmatprep.subr.bf16.mxu0 %v2367
  %3667 = vmatpush1.bf16.msra.mxu0 %v2366
  %3668 = vmatprep.subr.bf16.mxu0 %v2371
  %3669 = vmatpush1.bf16.msra.mxu0 %v2370
  %3670 = vmatprep.subr.bf16.mxu0 %v2375
  %3671 = vmatpush1.bf16.msra.mxu0 %v2374
  %3672 = vmatprep.subr.bf16.mxu0 %v2379
  %3673 = vmatpush1.bf16.msra.mxu0 %v2378
  %3674 = vmatprep.mubr.bf16.mxu0 %v625
  %3675 = vmatmul.mubr.bf16.gmra.mrb[0].mxu0 %v624
  %v3676 = vpop.f32.mrb[0].mxu0
  %v3677 = vadd.f32 %v3634, %v3676
  %v3678 = vpop.f32.mrb[0].mxu0
  %v3679 = vadd.f32 %v3636, %v3678
  %v3680 = vpop.f32.mrb[0].mxu0
  %v3681 = vadd.f32 %v3638, %v3680
  %v3682 = vpop.f32.mrb[0].mxu0
  %v3683 = vadd.f32 %v3640, %v3682
  %3684 = vdwg.mxu0
  %3685 = vmatprep.subr.bf16.mxu0 %v2383
  %3686 = vmatpush1.bf16.msra.mxu0 %v2382
  %3687 = vmatprep.subr.bf16.mxu0 %v2387
  %3688 = vmatpush1.bf16.msra.mxu0 %v2386
  %3689 = vmatprep.subr.bf16.mxu0 %v2391
  %3690 = vmatpush1.bf16.msra.mxu0 %v2390
  %3691 = vmatprep.subr.bf16.mxu0 %v2395
  %3692 = vmatpush1.bf16.msra.mxu0 %v2394
  %3693 = vmatprep.subr.bf16.mxu0 %v2399
  %3694 = vmatpush1.bf16.msra.mxu0 %v2398
  %3695 = vmatprep.subr.bf16.mxu0 %v2403
  %3696 = vmatpush1.bf16.msra.mxu0 %v2402
  %3697 = vmatprep.subr.bf16.mxu0 %v2407
  %3698 = vmatpush1.bf16.msra.mxu0 %v2406
  %3699 = vmatprep.subr.bf16.mxu0 %v2411
  %3700 = vmatpush1.bf16.msra.mxu0 %v2410
  %3701 = vmatprep.subr.bf16.mxu0 %v2415
  %3702 = vmatpush1.bf16.msra.mxu0 %v2414
  %3703 = vmatprep.subr.bf16.mxu0 %v2419
  %3704 = vmatpush1.bf16.msra.mxu0 %v2418
  %3705 = vmatprep.subr.bf16.mxu0 %v2423
  %3706 = vmatpush1.bf16.msra.mxu0 %v2422
  %3707 = vmatprep.subr.bf16.mxu0 %v2427
  %3708 = vmatpush1.bf16.msra.mxu0 %v2426
  %3709 = vmatprep.subr.bf16.mxu0 %v2431
  %3710 = vmatpush1.bf16.msra.mxu0 %v2430
  %3711 = vmatprep.subr.bf16.mxu0 %v2435
  %3712 = vmatpush1.bf16.msra.mxu0 %v2434
  %3713 = vmatprep.subr.bf16.mxu0 %v2439
  %3714 = vmatpush1.bf16.msra.mxu0 %v2438
  %3715 = vmatprep.subr.bf16.mxu0 %v2443
  %3716 = vmatpush1.bf16.msra.mxu0 %v2442
  %3717 = vmatprep.mubr.bf16.mxu0 %v627
  %3718 = vmatmul.mubr.bf16.gmra.mrb[0].mxu0 %v626
  %v3719 = vpop.f32.mrb[0].mxu0
  %v3720 = vadd.f32 %v3677, %v3719
  %v3721 = vpop.f32.mrb[0].mxu0
  %v3722 = vadd.f32 %v3679, %v3721
  %v3723 = vpop.f32.mrb[0].mxu0
  %v3724 = vadd.f32 %v3681, %v3723
  %v3725 = vpop.f32.mrb[0].mxu0
  %v3726 = vadd.f32 %v3683, %v3725
  %3727 = vdwg.mxu0
  %3728 = vmatprep.subr.bf16.mxu0 %v2447
  %3729 = vmatpush1.bf16.msra.mxu0 %v2446
  %3730 = vmatprep.subr.bf16.mxu0 %v2451
  %3731 = vmatpush1.bf16.msra.mxu0 %v2450
  %3732 = vmatprep.subr.bf16.mxu0 %v2455
  %3733 = vmatpush1.bf16.msra.mxu0 %v2454
  %3734 = vmatprep.subr.bf16.mxu0 %v2459
  %3735 = vmatpush1.bf16.msra.mxu0 %v2458
  %3736 = vmatprep.subr.bf16.mxu0 %v2463
  %3737 = vmatpush1.bf16.msra.mxu0 %v2462
  %3738 = vmatprep.subr.bf16.mxu0 %v2467
  %3739 = vmatpush1.bf16.msra.mxu0 %v2466
  %3740 = vmatprep.subr.bf16.mxu0 %v2471
  %3741 = vmatpush1.bf16.msra.mxu0 %v2470
  %3742 = vmatprep.subr.bf16.mxu0 %v2475
  %3743 = vmatpush1.bf16.msra.mxu0 %v2474
  %3744 = vmatprep.subr.bf16.mxu0 %v2479
  %3745 = vmatpush1.bf16.msra.mxu0 %v2478
  %3746 = vmatprep.subr.bf16.mxu0 %v2483
  %3747 = vmatpush1.bf16.msra.mxu0 %v2482
  %3748 = vmatprep.subr.bf16.mxu0 %v2487
  %3749 = vmatpush1.bf16.msra.mxu0 %v2486
  %3750 = vmatprep.subr.bf16.mxu0 %v2491
  %3751 = vmatpush1.bf16.msra.mxu0 %v2490
  %3752 = vmatprep.subr.bf16.mxu0 %v2495
  %3753 = vmatpush1.bf16.msra.mxu0 %v2494
  %3754 = vmatprep.subr.bf16.mxu0 %v2499
  %3755 = vmatpush1.bf16.msra.mxu0 %v2498
  %3756 = vmatprep.subr.bf16.mxu0 %v2503
  %3757 = vmatpush1.bf16.msra.mxu0 %v2502
  %3758 = vmatprep.subr.bf16.mxu0 %v2507
  %3759 = vmatpush1.bf16.msra.mxu0 %v2506
  %3760 = vmatprep.mubr.bf16.mxu0 %v629
  %3761 = vmatmul.mubr.bf16.gmra.mrb[0].mxu0 %v628
  %v3762 = vpop.f32.mrb[0].mxu0
  %v3763 = vadd.f32 %v3720, %v3762
  %v3764 = vpop.f32.mrb[0].mxu0
  %v3765 = vadd.f32 %v3722, %v3764
  %v3766 = vpop.f32.mrb[0].mxu0
  %v3767 = vadd.f32 %v3724, %v3766
  %v3768 = vpop.f32.mrb[0].mxu0
  %v3769 = vadd.f32 %v3726, %v3768
  %3770 = vdwg.mxu0
  %3771 = vmatprep.subr.bf16.mxu0 %v2511
  %3772 = vmatpush1.bf16.msra.mxu0 %v2510
  %3773 = vmatprep.subr.bf16.mxu0 %v2515
  %3774 = vmatpush1.bf16.msra.mxu0 %v2514
  %3775 = vmatprep.subr.bf16.mxu0 %v2519
  %3776 = vmatpush1.bf16.msra.mxu0 %v2518
  %3777 = vmatprep.subr.bf16.mxu0 %v2523
  %3778 = vmatpush1.bf16.msra.mxu0 %v2522
  %3779 = vmatprep.subr.bf16.mxu0 %v2527
  %3780 = vmatpush1.bf16.msra.mxu0 %v2526
  %3781 = vmatprep.subr.bf16.mxu0 %v2531
  %3782 = vmatpush1.bf16.msra.mxu0 %v2530
  %3783 = vmatprep.subr.bf16.mxu0 %v2535
  %3784 = vmatpush1.bf16.msra.mxu0 %v2534
  %3785 = vmatprep.subr.bf16.mxu0 %v2539
  %3786 = vmatpush1.bf16.msra.mxu0 %v2538
  %3787 = vmatprep.subr.bf16.mxu0 %v2543
  %3788 = vmatpush1.bf16.msra.mxu0 %v2542
  %3789 = vmatprep.subr.bf16.mxu0 %v2547
  %3790 = vmatpush1.bf16.msra.mxu0 %v2546
  %3791 = vmatprep.subr.bf16.mxu0 %v2551
  %3792 = vmatpush1.bf16.msra.mxu0 %v2550
  %3793 = vmatprep.subr.bf16.mxu0 %v2555
  %3794 = vmatpush1.bf16.msra.mxu0 %v2554
  %3795 = vmatprep.subr.bf16.mxu0 %v2559
  %3796 = vmatpush1.bf16.msra.mxu0 %v2558
  %3797 = vmatprep.subr.bf16.mxu0 %v2563
  %3798 = vmatpush1.bf16.msra.mxu0 %v2562
  %3799 = vmatprep.subr.bf16.mxu0 %v2567
  %3800 = vmatpush1.bf16.msra.mxu0 %v2566
  %3801 = vmatprep.subr.bf16.mxu0 %v2571
  %3802 = vmatpush1.bf16.msra.mxu0 %v2570
  %3803 = vmatprep.mubr.bf16.mxu0 %v631
  %3804 = vmatmul.mubr.bf16.gmra.mrb[0].mxu0 %v630
  %v3805 = vpop.f32.mrb[0].mxu0
  %v3806 = vadd.f32 %v3763, %v3805
  %v3807 = vpop.f32.mrb[0].mxu0
  %v3808 = vadd.f32 %v3765, %v3807
  %v3809 = vpop.f32.mrb[0].mxu0
  %v3810 = vadd.f32 %v3767, %v3809
  %v3811 = vpop.f32.mrb[0].mxu0
  %v3812 = vadd.f32 %v3769, %v3811
  %3813 = vdwg.mxu0
  %3814 = vmatprep.subr.bf16.mxu0 %v2575
  %3815 = vmatpush1.bf16.msra.mxu0 %v2574
  %3816 = vmatprep.subr.bf16.mxu0 %v2579
  %3817 = vmatpush1.bf16.msra.mxu0 %v2578
  %3818 = vmatprep.subr.bf16.mxu0 %v2583
  %3819 = vmatpush1.bf16.msra.mxu0 %v2582
  %3820 = vmatprep.subr.bf16.mxu0 %v2587
  %3821 = vmatpush1.bf16.msra.mxu0 %v2586
  %3822 = vmatprep.subr.bf16.mxu0 %v2591
  %3823 = vmatpush1.bf16.msra.mxu0 %v2590
  %3824 = vmatprep.subr.bf16.mxu0 %v2595
  %3825 = vmatpush1.bf16.msra.mxu0 %v2594
  %3826 = vmatprep.subr.bf16.mxu0 %v2599
  %3827 = vmatpush1.bf16.msra.mxu0 %v2598
  %3828 = vmatprep.subr.bf16.mxu0 %v2603
  %3829 = vmatpush1.bf16.msra.mxu0 %v2602
  %3830 = vmatprep.subr.bf16.mxu0 %v2607
  %3831 = vmatpush1.bf16.msra.mxu0 %v2606
  %3832 = vmatprep.subr.bf16.mxu0 %v2611
  %3833 = vmatpush1.bf16.msra.mxu0 %v2610
  %3834 = vmatprep.subr.bf16.mxu0 %v2615
  %3835 = vmatpush1.bf16.msra.mxu0 %v2614
  %3836 = vmatprep.subr.bf16.mxu0 %v2619
  %3837 = vmatpush1.bf16.msra.mxu0 %v2618
  %3838 = vmatprep.subr.bf16.mxu0 %v2623
  %3839 = vmatpush1.bf16.msra.mxu0 %v2622
  %3840 = vmatprep.subr.bf16.mxu0 %v2627
  %3841 = vmatpush1.bf16.msra.mxu0 %v2626
  %3842 = vmatprep.subr.bf16.mxu0 %v2631
  %3843 = vmatpush1.bf16.msra.mxu0 %v2630
  %3844 = vmatprep.subr.bf16.mxu0 %v2635
  %3845 = vmatpush1.bf16.msra.mxu0 %v2634
  %3846 = vmatprep.mubr.bf16.mxu0 %v633
  %3847 = vmatmul.mubr.bf16.gmra.mrb[0].mxu0 %v632
  %v3848 = vpop.f32.mrb[0].mxu0
  %v3849 = vadd.f32 %v3806, %v3848
  %v3850 = vpop.f32.mrb[0].mxu0
  %v3851 = vadd.f32 %v3808, %v3850
  %v3852 = vpop.f32.mrb[0].mxu0
  %v3853 = vadd.f32 %v3810, %v3852
  %v3854 = vpop.f32.mrb[0].mxu0
  %v3855 = vadd.f32 %v3812, %v3854
  %3856 = vdwg.mxu0
  %3857 = vmatprep.subr.bf16.mxu0 %v2639
  %3858 = vmatpush1.bf16.msra.mxu0 %v2638
  %3859 = vmatprep.subr.bf16.mxu0 %v2643
  %3860 = vmatpush1.bf16.msra.mxu0 %v2642
  %3861 = vmatprep.subr.bf16.mxu0 %v2647
  %3862 = vmatpush1.bf16.msra.mxu0 %v2646
  %3863 = vmatprep.subr.bf16.mxu0 %v2651
  %3864 = vmatpush1.bf16.msra.mxu0 %v2650
  %3865 = vmatprep.subr.bf16.mxu0 %v2655
  %3866 = vmatpush1.bf16.msra.mxu0 %v2654
  %3867 = vmatprep.subr.bf16.mxu0 %v2659
  %3868 = vmatpush1.bf16.msra.mxu0 %v2658
  %3869 = vmatprep.subr.bf16.mxu0 %v2663
  %3870 = vmatpush1.bf16.msra.mxu0 %v2662
  %3871 = vmatprep.subr.bf16.mxu0 %v2667
  %3872 = vmatpush1.bf16.msra.mxu0 %v2666
  %3873 = vmatprep.subr.bf16.mxu0 %v2671
  %3874 = vmatpush1.bf16.msra.mxu0 %v2670
  %3875 = vmatprep.subr.bf16.mxu0 %v2675
  %3876 = vmatpush1.bf16.msra.mxu0 %v2674
  %3877 = vmatprep.subr.bf16.mxu0 %v2679
  %3878 = vmatpush1.bf16.msra.mxu0 %v2678
  %3879 = vmatprep.subr.bf16.mxu0 %v2683
  %3880 = vmatpush1.bf16.msra.mxu0 %v2682
  %3881 = vmatprep.subr.bf16.mxu0 %v2687
  %3882 = vmatpush1.bf16.msra.mxu0 %v2686
  %3883 = vmatprep.subr.bf16.mxu0 %v2691
  %3884 = vmatpush1.bf16.msra.mxu0 %v2690
  %3885 = vmatprep.subr.bf16.mxu0 %v2695
  %3886 = vmatpush1.bf16.msra.mxu0 %v2694
  %3887 = vmatprep.subr.bf16.mxu0 %v2699
  %3888 = vmatpush1.bf16.msra.mxu0 %v2698
  %3889 = vmatprep.mubr.bf16.mxu0 %v635
  %3890 = vmatmul.mubr.bf16.gmra.mrb[0].mxu0 %v634
  %v3891 = vpop.f32.mrb[0].mxu0
  %v3892 = vadd.f32 %v3849, %v3891
  %v3893 = vpop.f32.mrb[0].mxu0
  %v3894 = vadd.f32 %v3851, %v3893
  %v3895 = vpop.f32.mrb[0].mxu0
  %v3896 = vadd.f32 %v3853, %v3895
  %v3897 = vpop.f32.mrb[0].mxu0
  %v3898 = vadd.f32 %v3855, %v3897
  %3899 = vdwg.mxu0
  %v3900 = vmul.f32 %v3548, %v3548
  %v3901 = vmul.f32 %v3550, %v3550
  %v3902 = vmul.f32 %v3892, %v3892
  %v3903 = vmul.f32 %v3894, %v3894
  %v3904 = vmul.f32 %v3552, %v3552
  %v3905 = vmul.f32 %v3554, %v3554
  %v3906 = vmul.f32 %v3896, %v3896
  %v3907 = vmul.f32 %v3898, %v3898
  %v3908 = vadd.f32 %v3900, %v3901
  %v3909 = vadd.f32 %v3908, %v3902
  %v3910 = vadd.f32 %v3909, %v3903
  %3911 = vadd.xlane.f32.xlu0 %v3910
  %v3912 = vpop.xlane.xlu0 %3911
  %v3913 = vadd.f32 %v3904, %v3905
  %v3914 = vadd.f32 %v3913, %v3906
  %v3915 = vadd.f32 %v3914, %v3907
  %3916 = vadd.xlane.f32.xlu0 %v3915
  %v3917 = vpop.xlane.xlu0 %3916
  %v3918 = vmax.f32 %v3912, 1e-24
  %v3919 = vmax.f32 %v3917, 1e-24
  %v3920 = vrsqrt.pop %v3918
  %v3921 = vrsqrt.pop %v3919
  %v3922 = vmul.f32 %v3548, %v3920
  %v3923 = vmul.f32 %v3550, %v3920
  %v3924 = vmul.f32 %v3892, %v3920
  %v3925 = vmul.f32 %v3894, %v3920
  %v3926 = vmul.f32 %v3552, %v3921
  %v3927 = vmul.f32 %v3554, %v3921
  %v3928 = vmul.f32 %v3896, %v3921
  %v3929 = vmul.f32 %v3898, %v3921
  %v3930 = vpack.c.bf16 %v3926, %v3922
  %v3931 = vpack.c.bf16 %v3927, %v3923
  %v3932 = vpack.c.bf16 %v3928, %v3924
  %v3933 = vpack.c.bf16 %v3929, %v3925
  %v3938 = vunpack.c.l.b16 %v3930
  %v3939 = vunpack.c.l.b16 %v3931
  %v3940 = vunpack.c.l.b16 %v3932
  %v3941 = vunpack.c.l.b16 %v3933
  %v3942 = vunpack.c.h.b16 %v3930
  %v3943 = vunpack.c.h.b16 %v3931
  %v3944 = vunpack.c.h.b16 %v3932
  %v3945 = vunpack.c.h.b16 %v3933
  %v3946 = vpack.c.b16 %v3939, %v3938
  %v3947 = vpack.c.b16 %v3941, %v3940
  %v3948 = vpack.c.b16 %v3943, %v3942
  %v3949 = vpack.c.b16 %v3945, %v3944
  %3954 = vst [vmem:[%s5] sm:$0xff] %v3946
  %3955 = vst [vmem:[%s5 + $0x8] sm:$0xff] %v3947
  %3956 = vst [vmem:[%s5 + $0x10] sm:$0xff] %v3948
  %3957 = vst [vmem:[%s5 + $0x18] sm:$0xff] %v3949
  %v3958 = vld [vmem:[%s3] sm:$0xff]
  %v3959 = vld [vmem:[%s3 + $0x8] sm:$0xff]
  %v3960 = vld [vmem:[%s3 + $0x10] sm:$0xff]
  %v3961 = vld [vmem:[%s3 + $0x18] sm:$0xff]
  %v3962 = vld [vmem:[%s3 + $0x20] sm:$0xff]
  %v3963 = vld [vmem:[%s3 + $0x28] sm:$0xff]
  %v3964 = vld [vmem:[%s3 + $0x30] sm:$0xff]
  %v3965 = vld [vmem:[%s3 + $0x38] sm:$0xff]
  %v3966 = vld [vmem:[%s3 + $0x40] sm:$0xff]
  %v3967 = vld [vmem:[%s3 + $0x48] sm:$0xff]
  %v3968 = vld [vmem:[%s3 + $0x50] sm:$0xff]
  %v3969 = vld [vmem:[%s3 + $0x58] sm:$0xff]
  %v3970 = vld [vmem:[%s3 + $0x60] sm:$0xff]
  %v3971 = vld [vmem:[%s3 + $0x68] sm:$0xff]
  %v3972 = vld [vmem:[%s3 + $0x70] sm:$0xff]
  %v3973 = vld [vmem:[%s3 + $0x78] sm:$0xff]
  %v3974 = vld [vmem:[%s3 + $0x80] sm:$0xff]
  %v3975 = vld [vmem:[%s3 + $0x88] sm:$0xff]
  %v3976 = vld [vmem:[%s3 + $0x90] sm:$0xff]
  %v3977 = vld [vmem:[%s3 + $0x98] sm:$0xff]
  %v3978 = vld [vmem:[%s3 + $0xa0] sm:$0xff]
  %v3979 = vld [vmem:[%s3 + $0xa8] sm:$0xff]
  %v3980 = vld [vmem:[%s3 + $0xb0] sm:$0xff]
  %v3981 = vld [vmem:[%s3 + $0xb8] sm:$0xff]
  %v3982 = vld [vmem:[%s3 + $0xc0] sm:$0xff]
  %v3983 = vld [vmem:[%s3 + $0xc8] sm:$0xff]
  %v3984 = vld [vmem:[%s3 + $0xd0] sm:$0xff]
  %v3985 = vld [vmem:[%s3 + $0xd8] sm:$0xff]
  %v3986 = vld [vmem:[%s3 + $0xe0] sm:$0xff]
  %v3987 = vld [vmem:[%s3 + $0xe8] sm:$0xff]
  %v3988 = vld [vmem:[%s3 + $0xf0] sm:$0xff]
  %v3989 = vld [vmem:[%s3 + $0xf8] sm:$0xff]
  %v3990 = vld [vmem:[%s3 + $0x100] sm:$0xff]
  %v3991 = vld [vmem:[%s3 + $0x108] sm:$0xff]
  %v3992 = vld [vmem:[%s3 + $0x110] sm:$0xff]
  %v3993 = vld [vmem:[%s3 + $0x118] sm:$0xff]
  %v3994 = vld [vmem:[%s3 + $0x120] sm:$0xff]
  %v3995 = vld [vmem:[%s3 + $0x128] sm:$0xff]
  %v3996 = vld [vmem:[%s3 + $0x130] sm:$0xff]
  %v3997 = vld [vmem:[%s3 + $0x138] sm:$0xff]
  %v3998 = vld [vmem:[%s3 + $0x140] sm:$0xff]
  %v3999 = vld [vmem:[%s3 + $0x148] sm:$0xff]
  %v4000 = vld [vmem:[%s3 + $0x150] sm:$0xff]
  %v4001 = vld [vmem:[%s3 + $0x158] sm:$0xff]
  %v4002 = vld [vmem:[%s3 + $0x160] sm:$0xff]
  %v4003 = vld [vmem:[%s3 + $0x168] sm:$0xff]
  %v4004 = vld [vmem:[%s3 + $0x170] sm:$0xff]
  %v4005 = vld [vmem:[%s3 + $0x178] sm:$0xff]
  %v4006 = vld [vmem:[%s3 + $0x180] sm:$0xff]
  %v4007 = vld [vmem:[%s3 + $0x188] sm:$0xff]
  %v4008 = vld [vmem:[%s3 + $0x190] sm:$0xff]
  %v4009 = vld [vmem:[%s3 + $0x198] sm:$0xff]
  %v4010 = vld [vmem:[%s3 + $0x1a0] sm:$0xff]
  %v4011 = vld [vmem:[%s3 + $0x1a8] sm:$0xff]
  %v4012 = vld [vmem:[%s3 + $0x1b0] sm:$0xff]
  %v4013 = vld [vmem:[%s3 + $0x1b8] sm:$0xff]
  %v4014 = vld [vmem:[%s3 + $0x1c0] sm:$0xff]
  %v4015 = vld [vmem:[%s3 + $0x1c8] sm:$0xff]
  %v4016 = vld [vmem:[%s3 + $0x1d0] sm:$0xff]
  %v4017 = vld [vmem:[%s3 + $0x1d8] sm:$0xff]
  %v4018 = vld [vmem:[%s3 + $0x1e0] sm:$0xff]
  %v4019 = vld [vmem:[%s3 + $0x1e8] sm:$0xff]
  %v4020 = vld [vmem:[%s3 + $0x1f0] sm:$0xff]
  %v4021 = vld [vmem:[%s3 + $0x1f8] sm:$0xff]
  %v4022 = vld [vmem:[%s3 + $0x200] sm:$0xff]
  %v4023 = vld [vmem:[%s3 + $0x208] sm:$0xff]
  %v4024 = vld [vmem:[%s3 + $0x210] sm:$0xff]
  %v4025 = vld [vmem:[%s3 + $0x218] sm:$0xff]
  %v4026 = vld [vmem:[%s3 + $0x220] sm:$0xff]
  %v4027 = vld [vmem:[%s3 + $0x228] sm:$0xff]
  %v4028 = vld [vmem:[%s3 + $0x230] sm:$0xff]
  %v4029 = vld [vmem:[%s3 + $0x238] sm:$0xff]
  %v4030 = vld [vmem:[%s3 + $0x240] sm:$0xff]
  %v4031 = vld [vmem:[%s3 + $0x248] sm:$0xff]
  %v4032 = vld [vmem:[%s3 + $0x250] sm:$0xff]
  %v4033 = vld [vmem:[%s3 + $0x258] sm:$0xff]
  %v4034 = vld [vmem:[%s3 + $0x260] sm:$0xff]
  %v4035 = vld [vmem:[%s3 + $0x268] sm:$0xff]
  %v4036 = vld [vmem:[%s3 + $0x270] sm:$0xff]
  %v4037 = vld [vmem:[%s3 + $0x278] sm:$0xff]
  %v4038 = vld [vmem:[%s3 + $0x280] sm:$0xff]
  %v4039 = vld [vmem:[%s3 + $0x288] sm:$0xff]
  %v4040 = vld [vmem:[%s3 + $0x290] sm:$0xff]
  %v4041 = vld [vmem:[%s3 + $0x298] sm:$0xff]
  %v4042 = vld [vmem:[%s3 + $0x2a0] sm:$0xff]
  %v4043 = vld [vmem:[%s3 + $0x2a8] sm:$0xff]
  %v4044 = vld [vmem:[%s3 + $0x2b0] sm:$0xff]
  %v4045 = vld [vmem:[%s3 + $0x2b8] sm:$0xff]
  %v4046 = vld [vmem:[%s3 + $0x2c0] sm:$0xff]
  %v4047 = vld [vmem:[%s3 + $0x2c8] sm:$0xff]
  %v4048 = vld [vmem:[%s3 + $0x2d0] sm:$0xff]
  %v4049 = vld [vmem:[%s3 + $0x2d8] sm:$0xff]
  %v4050 = vld [vmem:[%s3 + $0x2e0] sm:$0xff]
  %v4051 = vld [vmem:[%s3 + $0x2e8] sm:$0xff]
  %v4052 = vld [vmem:[%s3 + $0x2f0] sm:$0xff]
  %v4053 = vld [vmem:[%s3 + $0x2f8] sm:$0xff]
  %v4054 = vld [vmem:[%s3 + $0x300] sm:$0xff]
  %v4055 = vld [vmem:[%s3 + $0x308] sm:$0xff]
  %v4056 = vld [vmem:[%s3 + $0x310] sm:$0xff]
  %v4057 = vld [vmem:[%s3 + $0x318] sm:$0xff]
  %v4058 = vld [vmem:[%s3 + $0x320] sm:$0xff]
  %v4059 = vld [vmem:[%s3 + $0x328] sm:$0xff]
  %v4060 = vld [vmem:[%s3 + $0x330] sm:$0xff]
  %v4061 = vld [vmem:[%s3 + $0x338] sm:$0xff]
  %v4062 = vld [vmem:[%s3 + $0x340] sm:$0xff]
  %v4063 = vld [vmem:[%s3 + $0x348] sm:$0xff]
  %v4064 = vld [vmem:[%s3 + $0x350] sm:$0xff]
  %v4065 = vld [vmem:[%s3 + $0x358] sm:$0xff]
  %v4066 = vld [vmem:[%s3 + $0x360] sm:$0xff]
  %v4067 = vld [vmem:[%s3 + $0x368] sm:$0xff]
  %v4068 = vld [vmem:[%s3 + $0x370] sm:$0xff]
  %v4069 = vld [vmem:[%s3 + $0x378] sm:$0xff]
  %v4070 = vld [vmem:[%s3 + $0x380] sm:$0xff]
  %v4071 = vld [vmem:[%s3 + $0x388] sm:$0xff]
  %v4072 = vld [vmem:[%s3 + $0x390] sm:$0xff]
  %v4073 = vld [vmem:[%s3 + $0x398] sm:$0xff]
  %v4074 = vld [vmem:[%s3 + $0x3a0] sm:$0xff]
  %v4075 = vld [vmem:[%s3 + $0x3a8] sm:$0xff]
  %v4076 = vld [vmem:[%s3 + $0x3b0] sm:$0xff]
  %v4077 = vld [vmem:[%s3 + $0x3b8] sm:$0xff]
  %v4078 = vld [vmem:[%s3 + $0x3c0] sm:$0xff]
  %v4079 = vld [vmem:[%s3 + $0x3c8] sm:$0xff]
  %v4080 = vld [vmem:[%s3 + $0x3d0] sm:$0xff]
  %v4081 = vld [vmem:[%s3 + $0x3d8] sm:$0xff]
  %v4082 = vld [vmem:[%s3 + $0x3e0] sm:$0xff]
  %v4083 = vld [vmem:[%s3 + $0x3e8] sm:$0xff]
  %v4084 = vld [vmem:[%s3 + $0x3f0] sm:$0xff]
  %v4085 = vld [vmem:[%s3 + $0x3f8] sm:$0xff]
  %v4086 = vld [vmem:[%s3 + $0x400] sm:$0xff]
  %v4087 = vld [vmem:[%s3 + $0x408] sm:$0xff]
  %v4088 = vld [vmem:[%s3 + $0x410] sm:$0xff]
  %v4089 = vld [vmem:[%s3 + $0x418] sm:$0xff]
  %v4090 = vld [vmem:[%s3 + $0x420] sm:$0xff]
  %v4091 = vld [vmem:[%s3 + $0x428] sm:$0xff]
  %v4092 = vld [vmem:[%s3 + $0x430] sm:$0xff]
  %v4093 = vld [vmem:[%s3 + $0x438] sm:$0xff]
  %v4094 = vld [vmem:[%s3 + $0x440] sm:$0xff]
  %v4095 = vld [vmem:[%s3 + $0x448] sm:$0xff]
  %v4096 = vld [vmem:[%s3 + $0x450] sm:$0xff]
  %v4097 = vld [vmem:[%s3 + $0x458] sm:$0xff]
  %v4098 = vld [vmem:[%s3 + $0x460] sm:$0xff]
  %v4099 = vld [vmem:[%s3 + $0x468] sm:$0xff]
  %v4100 = vld [vmem:[%s3 + $0x470] sm:$0xff]
  %v4101 = vld [vmem:[%s3 + $0x478] sm:$0xff]
  %v4102 = vld [vmem:[%s3 + $0x480] sm:$0xff]
  %v4103 = vld [vmem:[%s3 + $0x488] sm:$0xff]
  %v4104 = vld [vmem:[%s3 + $0x490] sm:$0xff]
  %v4105 = vld [vmem:[%s3 + $0x498] sm:$0xff]
  %v4106 = vld [vmem:[%s3 + $0x4a0] sm:$0xff]
  %v4107 = vld [vmem:[%s3 + $0x4a8] sm:$0xff]
  %v4108 = vld [vmem:[%s3 + $0x4b0] sm:$0xff]
  %v4109 = vld [vmem:[%s3 + $0x4b8] sm:$0xff]
  %v4110 = vld [vmem:[%s3 + $0x4c0] sm:$0xff]
  %v4111 = vld [vmem:[%s3 + $0x4c8] sm:$0xff]
  %v4112 = vld [vmem:[%s3 + $0x4d0] sm:$0xff]
  %v4113 = vld [vmem:[%s3 + $0x4d8] sm:$0xff]
  %v4114 = vld [vmem:[%s3 + $0x4e0] sm:$0xff]
  %v4115 = vld [vmem:[%s3 + $0x4e8] sm:$0xff]
  %v4116 = vld [vmem:[%s3 + $0x4f0] sm:$0xff]
  %v4117 = vld [vmem:[%s3 + $0x4f8] sm:$0xff]
  %v4118 = vld [vmem:[%s3 + $0x500] sm:$0xff]
  %v4119 = vld [vmem:[%s3 + $0x508] sm:$0xff]
  %v4120 = vld [vmem:[%s3 + $0x510] sm:$0xff]
  %v4121 = vld [vmem:[%s3 + $0x518] sm:$0xff]
  %v4122 = vld [vmem:[%s3 + $0x520] sm:$0xff]
  %v4123 = vld [vmem:[%s3 + $0x528] sm:$0xff]
  %v4124 = vld [vmem:[%s3 + $0x530] sm:$0xff]
  %v4125 = vld [vmem:[%s3 + $0x538] sm:$0xff]
  %v4126 = vld [vmem:[%s3 + $0x540] sm:$0xff]
  %v4127 = vld [vmem:[%s3 + $0x548] sm:$0xff]
  %v4128 = vld [vmem:[%s3 + $0x550] sm:$0xff]
  %v4129 = vld [vmem:[%s3 + $0x558] sm:$0xff]
  %v4130 = vld [vmem:[%s3 + $0x560] sm:$0xff]
  %v4131 = vld [vmem:[%s3 + $0x568] sm:$0xff]
  %v4132 = vld [vmem:[%s3 + $0x570] sm:$0xff]
  %v4133 = vld [vmem:[%s3 + $0x578] sm:$0xff]
  %v4134 = vld [vmem:[%s3 + $0x580] sm:$0xff]
  %v4135 = vld [vmem:[%s3 + $0x588] sm:$0xff]
  %v4136 = vld [vmem:[%s3 + $0x590] sm:$0xff]
  %v4137 = vld [vmem:[%s3 + $0x598] sm:$0xff]
  %v4138 = vld [vmem:[%s3 + $0x5a0] sm:$0xff]
  %v4139 = vld [vmem:[%s3 + $0x5a8] sm:$0xff]
  %v4140 = vld [vmem:[%s3 + $0x5b0] sm:$0xff]
  %v4141 = vld [vmem:[%s3 + $0x5b8] sm:$0xff]
  %v4142 = vld [vmem:[%s3 + $0x5c0] sm:$0xff]
  %v4143 = vld [vmem:[%s3 + $0x5c8] sm:$0xff]
  %v4144 = vld [vmem:[%s3 + $0x5d0] sm:$0xff]
  %v4145 = vld [vmem:[%s3 + $0x5d8] sm:$0xff]
  %v4146 = vld [vmem:[%s3 + $0x5e0] sm:$0xff]
  %v4147 = vld [vmem:[%s3 + $0x5e8] sm:$0xff]
  %v4148 = vld [vmem:[%s3 + $0x5f0] sm:$0xff]
  %v4149 = vld [vmem:[%s3 + $0x5f8] sm:$0xff]
  %v4150 = vld [vmem:[%s4] sm:$0x3f]
  %v4152 = vlaneseq
  %v4153 = vshrl.u32 %v4152, 7
  %v4154 = vsub.s32 0, %v4153
  %v4155 = vrot.slane %v4150, %v4154
  %v4156 = vlaneseq
  %v4157 = vshrl.u32 %v4156, 7
  %v4158 = vsub.s32 1, %v4157
  %v4159 = vrot.slane %v4150, %v4158
  %v4160 = vlaneseq
  %v4161 = vshrl.u32 %v4160, 7
  %v4162 = vsub.s32 2, %v4161
  %v4163 = vrot.slane %v4150, %v4162
  %v4164 = vlaneseq
  %v4165 = vshrl.u32 %v4164, 7
  %v4166 = vsub.s32 3, %v4165
  %v4167 = vrot.slane %v4150, %v4166
  %v4168 = vlaneseq
  %v4169 = vshrl.u32 %v4168, 7
  %v4170 = vsub.s32 4, %v4169
  %v4171 = vrot.slane %v4150, %v4170
  %v4172 = vlaneseq
  %v4173 = vshrl.u32 %v4172, 7
  %v4174 = vsub.s32 5, %v4173
  %v4175 = vrot.slane %v4150, %v4174
  %v4374 = vunpack.c.l.b16 %v3958
  %v4375 = vunpack.c.h.b16 %v3958
  %v4376 = vunpack.c.l.b16 %v3959
  %v4377 = vunpack.c.h.b16 %v3959
  %v4378 = vunpack.c.l.b16 %v3960
  %v4379 = vunpack.c.h.b16 %v3960
  %v4380 = vunpack.c.l.b16 %v3961
  %v4381 = vunpack.c.h.b16 %v3961
  %v4382 = vunpack.c.l.b16 %v3962
  %v4383 = vunpack.c.h.b16 %v3962
  %v4384 = vunpack.c.l.b16 %v3963
  %v4385 = vunpack.c.h.b16 %v3963
  %v4386 = vunpack.c.l.b16 %v3964
  %v4387 = vunpack.c.h.b16 %v3964
  %v4388 = vunpack.c.l.b16 %v3965
  %v4389 = vunpack.c.h.b16 %v3965
  %v4390 = vunpack.c.l.b16 %v3966
  %v4391 = vunpack.c.h.b16 %v3966
  %v4392 = vunpack.c.l.b16 %v3967
  %v4393 = vunpack.c.h.b16 %v3967
  %v4394 = vunpack.c.l.b16 %v3968
  %v4395 = vunpack.c.h.b16 %v3968
  %v4396 = vunpack.c.l.b16 %v3969
  %v4397 = vunpack.c.h.b16 %v3969
  %v4398 = vunpack.c.l.b16 %v3970
  %v4399 = vunpack.c.h.b16 %v3970
  %v4400 = vunpack.c.l.b16 %v3971
  %v4401 = vunpack.c.h.b16 %v3971
  %v4402 = vunpack.c.l.b16 %v3972
  %v4403 = vunpack.c.h.b16 %v3972
  %v4404 = vunpack.c.l.b16 %v3973
  %v4405 = vunpack.c.h.b16 %v3973
  %v4406 = vunpack.c.l.b16 %v3974
  %v4407 = vunpack.c.h.b16 %v3974
  %v4408 = vunpack.c.l.b16 %v3975
  %v4409 = vunpack.c.h.b16 %v3975
  %v4410 = vunpack.c.l.b16 %v3976
  %v4411 = vunpack.c.h.b16 %v3976
  %v4412 = vunpack.c.l.b16 %v3977
  %v4413 = vunpack.c.h.b16 %v3977
  %v4414 = vunpack.c.l.b16 %v3978
  %v4415 = vunpack.c.h.b16 %v3978
  %v4416 = vunpack.c.l.b16 %v3979
  %v4417 = vunpack.c.h.b16 %v3979
  %v4418 = vunpack.c.l.b16 %v3980
  %v4419 = vunpack.c.h.b16 %v3980
  %v4420 = vunpack.c.l.b16 %v3981
  %v4421 = vunpack.c.h.b16 %v3981
  %v4422 = vunpack.c.l.b16 %v3982
  %v4423 = vunpack.c.h.b16 %v3982
  %v4424 = vunpack.c.l.b16 %v3983
  %v4425 = vunpack.c.h.b16 %v3983
  %v4426 = vunpack.c.l.b16 %v3984
  %v4427 = vunpack.c.h.b16 %v3984
  %v4428 = vunpack.c.l.b16 %v3985
  %v4429 = vunpack.c.h.b16 %v3985
  %v4430 = vunpack.c.l.b16 %v3986
  %v4431 = vunpack.c.h.b16 %v3986
  %v4432 = vunpack.c.l.b16 %v3987
  %v4433 = vunpack.c.h.b16 %v3987
  %v4434 = vunpack.c.l.b16 %v3988
  %v4435 = vunpack.c.h.b16 %v3988
  %v4436 = vunpack.c.l.b16 %v3989
  %v4437 = vunpack.c.h.b16 %v3989
  %v4438 = vunpack.c.l.b16 %v3990
  %v4439 = vunpack.c.h.b16 %v3990
  %v4440 = vunpack.c.l.b16 %v3991
  %v4441 = vunpack.c.h.b16 %v3991
  %v4442 = vunpack.c.l.b16 %v3992
  %v4443 = vunpack.c.h.b16 %v3992
  %v4444 = vunpack.c.l.b16 %v3993
  %v4445 = vunpack.c.h.b16 %v3993
  %v4446 = vunpack.c.l.b16 %v3994
  %v4447 = vunpack.c.h.b16 %v3994
  %v4448 = vunpack.c.l.b16 %v3995
  %v4449 = vunpack.c.h.b16 %v3995
  %v4450 = vunpack.c.l.b16 %v3996
  %v4451 = vunpack.c.h.b16 %v3996
  %v4452 = vunpack.c.l.b16 %v3997
  %v4453 = vunpack.c.h.b16 %v3997
  %v4454 = vunpack.c.l.b16 %v3998
  %v4455 = vunpack.c.h.b16 %v3998
  %v4456 = vunpack.c.l.b16 %v3999
  %v4457 = vunpack.c.h.b16 %v3999
  %v4458 = vunpack.c.l.b16 %v4000
  %v4459 = vunpack.c.h.b16 %v4000
  %v4460 = vunpack.c.l.b16 %v4001
  %v4461 = vunpack.c.h.b16 %v4001
  %v4462 = vunpack.c.l.b16 %v4002
  %v4463 = vunpack.c.h.b16 %v4002
  %v4464 = vunpack.c.l.b16 %v4003
  %v4465 = vunpack.c.h.b16 %v4003
  %v4466 = vunpack.c.l.b16 %v4004
  %v4467 = vunpack.c.h.b16 %v4004
  %v4468 = vunpack.c.l.b16 %v4005
  %v4469 = vunpack.c.h.b16 %v4005
  %v4470 = vunpack.c.l.b16 %v4006
  %v4471 = vunpack.c.h.b16 %v4006
  %v4472 = vunpack.c.l.b16 %v4007
  %v4473 = vunpack.c.h.b16 %v4007
  %v4474 = vunpack.c.l.b16 %v4008
  %v4475 = vunpack.c.h.b16 %v4008
  %v4476 = vunpack.c.l.b16 %v4009
  %v4477 = vunpack.c.h.b16 %v4009
  %v4478 = vunpack.c.l.b16 %v4010
  %v4479 = vunpack.c.h.b16 %v4010
  %v4480 = vunpack.c.l.b16 %v4011
  %v4481 = vunpack.c.h.b16 %v4011
  %v4482 = vunpack.c.l.b16 %v4012
  %v4483 = vunpack.c.h.b16 %v4012
  %v4484 = vunpack.c.l.b16 %v4013
  %v4485 = vunpack.c.h.b16 %v4013
  %v4486 = vunpack.c.l.b16 %v4014
  %v4487 = vunpack.c.h.b16 %v4014
  %v4488 = vunpack.c.l.b16 %v4015
  %v4489 = vunpack.c.h.b16 %v4015
  %v4490 = vunpack.c.l.b16 %v4016
  %v4491 = vunpack.c.h.b16 %v4016
  %v4492 = vunpack.c.l.b16 %v4017
  %v4493 = vunpack.c.h.b16 %v4017
  %v4494 = vunpack.c.l.b16 %v4018
  %v4495 = vunpack.c.h.b16 %v4018
  %v4496 = vunpack.c.l.b16 %v4019
  %v4497 = vunpack.c.h.b16 %v4019
  %v4498 = vunpack.c.l.b16 %v4020
  %v4499 = vunpack.c.h.b16 %v4020
  %v4500 = vunpack.c.l.b16 %v4021
  %v4501 = vunpack.c.h.b16 %v4021
  %v4502 = vunpack.c.l.b16 %v4022
  %v4503 = vunpack.c.h.b16 %v4022
  %v4504 = vunpack.c.l.b16 %v4023
  %v4505 = vunpack.c.h.b16 %v4023
  %v4506 = vunpack.c.l.b16 %v4024
  %v4507 = vunpack.c.h.b16 %v4024
  %v4508 = vunpack.c.l.b16 %v4025
  %v4509 = vunpack.c.h.b16 %v4025
  %v4510 = vunpack.c.l.b16 %v4026
  %v4511 = vunpack.c.h.b16 %v4026
  %v4512 = vunpack.c.l.b16 %v4027
  %v4513 = vunpack.c.h.b16 %v4027
  %v4514 = vunpack.c.l.b16 %v4028
  %v4515 = vunpack.c.h.b16 %v4028
  %v4516 = vunpack.c.l.b16 %v4029
  %v4517 = vunpack.c.h.b16 %v4029
  %v4518 = vunpack.c.l.b16 %v4030
  %v4519 = vunpack.c.h.b16 %v4030
  %v4520 = vunpack.c.l.b16 %v4031
  %v4521 = vunpack.c.h.b16 %v4031
  %v4522 = vunpack.c.l.b16 %v4032
  %v4523 = vunpack.c.h.b16 %v4032
  %v4524 = vunpack.c.l.b16 %v4033
  %v4525 = vunpack.c.h.b16 %v4033
  %v4526 = vunpack.c.l.b16 %v4034
  %v4527 = vunpack.c.h.b16 %v4034
  %v4528 = vunpack.c.l.b16 %v4035
  %v4529 = vunpack.c.h.b16 %v4035
  %v4530 = vunpack.c.l.b16 %v4036
  %v4531 = vunpack.c.h.b16 %v4036
  %v4532 = vunpack.c.l.b16 %v4037
  %v4533 = vunpack.c.h.b16 %v4037
  %v4534 = vunpack.c.l.b16 %v4038
  %v4535 = vunpack.c.h.b16 %v4038
  %v4536 = vunpack.c.l.b16 %v4039
  %v4537 = vunpack.c.h.b16 %v4039
  %v4538 = vunpack.c.l.b16 %v4040
  %v4539 = vunpack.c.h.b16 %v4040
  %v4540 = vunpack.c.l.b16 %v4041
  %v4541 = vunpack.c.h.b16 %v4041
  %v4542 = vunpack.c.l.b16 %v4042
  %v4543 = vunpack.c.h.b16 %v4042
  %v4544 = vunpack.c.l.b16 %v4043
  %v4545 = vunpack.c.h.b16 %v4043
  %v4546 = vunpack.c.l.b16 %v4044
  %v4547 = vunpack.c.h.b16 %v4044
  %v4548 = vunpack.c.l.b16 %v4045
  %v4549 = vunpack.c.h.b16 %v4045
  %v4550 = vunpack.c.l.b16 %v4046
  %v4551 = vunpack.c.h.b16 %v4046
  %v4552 = vunpack.c.l.b16 %v4047
  %v4553 = vunpack.c.h.b16 %v4047
  %v4554 = vunpack.c.l.b16 %v4048
  %v4555 = vunpack.c.h.b16 %v4048
  %v4556 = vunpack.c.l.b16 %v4049
  %v4557 = vunpack.c.h.b16 %v4049
  %v4558 = vunpack.c.l.b16 %v4050
  %v4559 = vunpack.c.h.b16 %v4050
  %v4560 = vunpack.c.l.b16 %v4051
  %v4561 = vunpack.c.h.b16 %v4051
  %v4562 = vunpack.c.l.b16 %v4052
  %v4563 = vunpack.c.h.b16 %v4052
  %v4564 = vunpack.c.l.b16 %v4053
  %v4565 = vunpack.c.h.b16 %v4053
  %v4566 = vunpack.c.l.b16 %v4054
  %v4567 = vunpack.c.h.b16 %v4054
  %v4568 = vunpack.c.l.b16 %v4055
  %v4569 = vunpack.c.h.b16 %v4055
  %v4570 = vunpack.c.l.b16 %v4056
  %v4571 = vunpack.c.h.b16 %v4056
  %v4572 = vunpack.c.l.b16 %v4057
  %v4573 = vunpack.c.h.b16 %v4057
  %v4574 = vunpack.c.l.b16 %v4058
  %v4575 = vunpack.c.h.b16 %v4058
  %v4576 = vunpack.c.l.b16 %v4059
  %v4577 = vunpack.c.h.b16 %v4059
  %v4578 = vunpack.c.l.b16 %v4060
  %v4579 = vunpack.c.h.b16 %v4060
  %v4580 = vunpack.c.l.b16 %v4061
  %v4581 = vunpack.c.h.b16 %v4061
  %v4582 = vunpack.c.l.b16 %v4062
  %v4583 = vunpack.c.h.b16 %v4062
  %v4584 = vunpack.c.l.b16 %v4063
  %v4585 = vunpack.c.h.b16 %v4063
  %v4586 = vunpack.c.l.b16 %v4064
  %v4587 = vunpack.c.h.b16 %v4064
  %v4588 = vunpack.c.l.b16 %v4065
  %v4589 = vunpack.c.h.b16 %v4065
  %v4590 = vunpack.c.l.b16 %v4066
  %v4591 = vunpack.c.h.b16 %v4066
  %v4592 = vunpack.c.l.b16 %v4067
  %v4593 = vunpack.c.h.b16 %v4067
  %v4594 = vunpack.c.l.b16 %v4068
  %v4595 = vunpack.c.h.b16 %v4068
  %v4596 = vunpack.c.l.b16 %v4069
  %v4597 = vunpack.c.h.b16 %v4069
  %v4598 = vunpack.c.l.b16 %v4070
  %v4599 = vunpack.c.h.b16 %v4070
  %v4600 = vunpack.c.l.b16 %v4071
  %v4601 = vunpack.c.h.b16 %v4071
  %v4602 = vunpack.c.l.b16 %v4072
  %v4603 = vunpack.c.h.b16 %v4072
  %v4604 = vunpack.c.l.b16 %v4073
  %v4605 = vunpack.c.h.b16 %v4073
  %v4606 = vunpack.c.l.b16 %v4074
  %v4607 = vunpack.c.h.b16 %v4074
  %v4608 = vunpack.c.l.b16 %v4075
  %v4609 = vunpack.c.h.b16 %v4075
  %v4610 = vunpack.c.l.b16 %v4076
  %v4611 = vunpack.c.h.b16 %v4076
  %v4612 = vunpack.c.l.b16 %v4077
  %v4613 = vunpack.c.h.b16 %v4077
  %v4614 = vunpack.c.l.b16 %v4078
  %v4615 = vunpack.c.h.b16 %v4078
  %v4616 = vunpack.c.l.b16 %v4079
  %v4617 = vunpack.c.h.b16 %v4079
  %v4618 = vunpack.c.l.b16 %v4080
  %v4619 = vunpack.c.h.b16 %v4080
  %v4620 = vunpack.c.l.b16 %v4081
  %v4621 = vunpack.c.h.b16 %v4081
  %v4622 = vunpack.c.l.b16 %v4082
  %v4623 = vunpack.c.h.b16 %v4082
  %v4624 = vunpack.c.l.b16 %v4083
  %v4625 = vunpack.c.h.b16 %v4083
  %v4626 = vunpack.c.l.b16 %v4084
  %v4627 = vunpack.c.h.b16 %v4084
  %v4628 = vunpack.c.l.b16 %v4085
  %v4629 = vunpack.c.h.b16 %v4085
  %v4630 = vunpack.c.l.b16 %v4086
  %v4631 = vunpack.c.h.b16 %v4086
  %v4632 = vunpack.c.l.b16 %v4087
  %v4633 = vunpack.c.h.b16 %v4087
  %v4634 = vunpack.c.l.b16 %v4088
  %v4635 = vunpack.c.h.b16 %v4088
  %v4636 = vunpack.c.l.b16 %v4089
  %v4637 = vunpack.c.h.b16 %v4089
  %v4638 = vunpack.c.l.b16 %v4090
  %v4639 = vunpack.c.h.b16 %v4090
  %v4640 = vunpack.c.l.b16 %v4091
  %v4641 = vunpack.c.h.b16 %v4091
  %v4642 = vunpack.c.l.b16 %v4092
  %v4643 = vunpack.c.h.b16 %v4092
  %v4644 = vunpack.c.l.b16 %v4093
  %v4645 = vunpack.c.h.b16 %v4093
  %v4646 = vunpack.c.l.b16 %v4094
  %v4647 = vunpack.c.h.b16 %v4094
  %v4648 = vunpack.c.l.b16 %v4095
  %v4649 = vunpack.c.h.b16 %v4095
  %v4650 = vunpack.c.l.b16 %v4096
  %v4651 = vunpack.c.h.b16 %v4096
  %v4652 = vunpack.c.l.b16 %v4097
  %v4653 = vunpack.c.h.b16 %v4097
  %v4654 = vunpack.c.l.b16 %v4098
  %v4655 = vunpack.c.h.b16 %v4098
  %v4656 = vunpack.c.l.b16 %v4099
  %v4657 = vunpack.c.h.b16 %v4099
  %v4658 = vunpack.c.l.b16 %v4100
  %v4659 = vunpack.c.h.b16 %v4100
  %v4660 = vunpack.c.l.b16 %v4101
  %v4661 = vunpack.c.h.b16 %v4101
  %v4662 = vunpack.c.l.b16 %v4102
  %v4663 = vunpack.c.h.b16 %v4102
  %v4664 = vunpack.c.l.b16 %v4103
  %v4665 = vunpack.c.h.b16 %v4103
  %v4666 = vunpack.c.l.b16 %v4104
  %v4667 = vunpack.c.h.b16 %v4104
  %v4668 = vunpack.c.l.b16 %v4105
  %v4669 = vunpack.c.h.b16 %v4105
  %v4670 = vunpack.c.l.b16 %v4106
  %v4671 = vunpack.c.h.b16 %v4106
  %v4672 = vunpack.c.l.b16 %v4107
  %v4673 = vunpack.c.h.b16 %v4107
  %v4674 = vunpack.c.l.b16 %v4108
  %v4675 = vunpack.c.h.b16 %v4108
  %v4676 = vunpack.c.l.b16 %v4109
  %v4677 = vunpack.c.h.b16 %v4109
  %v4678 = vunpack.c.l.b16 %v4110
  %v4679 = vunpack.c.h.b16 %v4110
  %v4680 = vunpack.c.l.b16 %v4111
  %v4681 = vunpack.c.h.b16 %v4111
  %v4682 = vunpack.c.l.b16 %v4112
  %v4683 = vunpack.c.h.b16 %v4112
  %v4684 = vunpack.c.l.b16 %v4113
  %v4685 = vunpack.c.h.b16 %v4113
  %v4686 = vunpack.c.l.b16 %v4114
  %v4687 = vunpack.c.h.b16 %v4114
  %v4688 = vunpack.c.l.b16 %v4115
  %v4689 = vunpack.c.h.b16 %v4115
  %v4690 = vunpack.c.l.b16 %v4116
  %v4691 = vunpack.c.h.b16 %v4116
  %v4692 = vunpack.c.l.b16 %v4117
  %v4693 = vunpack.c.h.b16 %v4117
  %v4694 = vunpack.c.l.b16 %v4118
  %v4695 = vunpack.c.h.b16 %v4118
  %v4696 = vunpack.c.l.b16 %v4119
  %v4697 = vunpack.c.h.b16 %v4119
  %v4698 = vunpack.c.l.b16 %v4120
  %v4699 = vunpack.c.h.b16 %v4120
  %v4700 = vunpack.c.l.b16 %v4121
  %v4701 = vunpack.c.h.b16 %v4121
  %v4702 = vunpack.c.l.b16 %v4122
  %v4703 = vunpack.c.h.b16 %v4122
  %v4704 = vunpack.c.l.b16 %v4123
  %v4705 = vunpack.c.h.b16 %v4123
  %v4706 = vunpack.c.l.b16 %v4124
  %v4707 = vunpack.c.h.b16 %v4124
  %v4708 = vunpack.c.l.b16 %v4125
  %v4709 = vunpack.c.h.b16 %v4125
  %v4710 = vunpack.c.l.b16 %v4126
  %v4711 = vunpack.c.h.b16 %v4126
  %v4712 = vunpack.c.l.b16 %v4127
  %v4713 = vunpack.c.h.b16 %v4127
  %v4714 = vunpack.c.l.b16 %v4128
  %v4715 = vunpack.c.h.b16 %v4128
  %v4716 = vunpack.c.l.b16 %v4129
  %v4717 = vunpack.c.h.b16 %v4129
  %v4718 = vunpack.c.l.b16 %v4130
  %v4719 = vunpack.c.h.b16 %v4130
  %v4720 = vunpack.c.l.b16 %v4131
  %v4721 = vunpack.c.h.b16 %v4131
  %v4722 = vunpack.c.l.b16 %v4132
  %v4723 = vunpack.c.h.b16 %v4132
  %v4724 = vunpack.c.l.b16 %v4133
  %v4725 = vunpack.c.h.b16 %v4133
  %v4726 = vunpack.c.l.b16 %v4134
  %v4727 = vunpack.c.h.b16 %v4134
  %v4728 = vunpack.c.l.b16 %v4135
  %v4729 = vunpack.c.h.b16 %v4135
  %v4730 = vunpack.c.l.b16 %v4136
  %v4731 = vunpack.c.h.b16 %v4136
  %v4732 = vunpack.c.l.b16 %v4137
  %v4733 = vunpack.c.h.b16 %v4137
  %v4734 = vunpack.c.l.b16 %v4138
  %v4735 = vunpack.c.h.b16 %v4138
  %v4736 = vunpack.c.l.b16 %v4139
  %v4737 = vunpack.c.h.b16 %v4139
  %v4738 = vunpack.c.l.b16 %v4140
  %v4739 = vunpack.c.h.b16 %v4140
  %v4740 = vunpack.c.l.b16 %v4141
  %v4741 = vunpack.c.h.b16 %v4141
  %v4742 = vunpack.c.l.b16 %v4142
  %v4743 = vunpack.c.h.b16 %v4142
  %v4744 = vunpack.c.l.b16 %v4143
  %v4745 = vunpack.c.h.b16 %v4143
  %v4746 = vunpack.c.l.b16 %v4144
  %v4747 = vunpack.c.h.b16 %v4144
  %v4748 = vunpack.c.l.b16 %v4145
  %v4749 = vunpack.c.h.b16 %v4145
  %v4750 = vunpack.c.l.b16 %v4146
  %v4751 = vunpack.c.h.b16 %v4146
  %v4752 = vunpack.c.l.b16 %v4147
  %v4753 = vunpack.c.h.b16 %v4147
  %v4754 = vunpack.c.l.b16 %v4148
  %v4755 = vunpack.c.h.b16 %v4148
  %v4756 = vunpack.c.l.b16 %v4149
  %v4757 = vunpack.c.h.b16 %v4149
  %v4758 = vpack.c.b16 %v4380, %v4374
  %v4759 = vpack.c.b16 %v4381, %v4375
  %v4760 = vpack.c.b16 %v4382, %v4376
  %v4761 = vpack.c.b16 %v4383, %v4377
  %v4762 = vpack.c.b16 %v4384, %v4378
  %v4763 = vpack.c.b16 %v4385, %v4379
  %v4764 = vpack.c.b16 %v4392, %v4386
  %v4765 = vpack.c.b16 %v4393, %v4387
  %v4766 = vpack.c.b16 %v4394, %v4388
  %v4767 = vpack.c.b16 %v4395, %v4389
  %v4768 = vpack.c.b16 %v4396, %v4390
  %v4769 = vpack.c.b16 %v4397, %v4391
  %v4770 = vpack.c.b16 %v4404, %v4398
  %v4771 = vpack.c.b16 %v4405, %v4399
  %v4772 = vpack.c.b16 %v4406, %v4400
  %v4773 = vpack.c.b16 %v4407, %v4401
  %v4774 = vpack.c.b16 %v4408, %v4402
  %v4775 = vpack.c.b16 %v4409, %v4403
  %v4776 = vpack.c.b16 %v4416, %v4410
  %v4777 = vpack.c.b16 %v4417, %v4411
  %v4778 = vpack.c.b16 %v4418, %v4412
  %v4779 = vpack.c.b16 %v4419, %v4413
  %v4780 = vpack.c.b16 %v4420, %v4414
  %v4781 = vpack.c.b16 %v4421, %v4415
  %v4782 = vpack.c.b16 %v4428, %v4422
  %v4783 = vpack.c.b16 %v4429, %v4423
  %v4784 = vpack.c.b16 %v4430, %v4424
  %v4785 = vpack.c.b16 %v4431, %v4425
  %v4786 = vpack.c.b16 %v4432, %v4426
  %v4787 = vpack.c.b16 %v4433, %v4427
  %v4788 = vpack.c.b16 %v4440, %v4434
  %v4789 = vpack.c.b16 %v4441, %v4435
  %v4790 = vpack.c.b16 %v4442, %v4436
  %v4791 = vpack.c.b16 %v4443, %v4437
  %v4792 = vpack.c.b16 %v4444, %v4438
  %v4793 = vpack.c.b16 %v4445, %v4439
  %v4794 = vpack.c.b16 %v4452, %v4446
  %v4795 = vpack.c.b16 %v4453, %v4447
  %v4796 = vpack.c.b16 %v4454, %v4448
  %v4797 = vpack.c.b16 %v4455, %v4449
  %v4798 = vpack.c.b16 %v4456, %v4450
  %v4799 = vpack.c.b16 %v4457, %v4451
  %v4800 = vpack.c.b16 %v4464, %v4458
  %v4801 = vpack.c.b16 %v4465, %v4459
  %v4802 = vpack.c.b16 %v4466, %v4460
  %v4803 = vpack.c.b16 %v4467, %v4461
  %v4804 = vpack.c.b16 %v4468, %v4462
  %v4805 = vpack.c.b16 %v4469, %v4463
  %v4806 = vpack.c.b16 %v4476, %v4470
  %v4807 = vpack.c.b16 %v4477, %v4471
  %v4808 = vpack.c.b16 %v4478, %v4472
  %v4809 = vpack.c.b16 %v4479, %v4473
  %v4810 = vpack.c.b16 %v4480, %v4474
  %v4811 = vpack.c.b16 %v4481, %v4475
  %v4812 = vpack.c.b16 %v4488, %v4482
  %v4813 = vpack.c.b16 %v4489, %v4483
  %v4814 = vpack.c.b16 %v4490, %v4484
  %v4815 = vpack.c.b16 %v4491, %v4485
  %v4816 = vpack.c.b16 %v4492, %v4486
  %v4817 = vpack.c.b16 %v4493, %v4487
  %v4818 = vpack.c.b16 %v4500, %v4494
  %v4819 = vpack.c.b16 %v4501, %v4495
  %v4820 = vpack.c.b16 %v4502, %v4496
  %v4821 = vpack.c.b16 %v4503, %v4497
  %v4822 = vpack.c.b16 %v4504, %v4498
  %v4823 = vpack.c.b16 %v4505, %v4499
  %v4824 = vpack.c.b16 %v4512, %v4506
  %v4825 = vpack.c.b16 %v4513, %v4507
  %v4826 = vpack.c.b16 %v4514, %v4508
  %v4827 = vpack.c.b16 %v4515, %v4509
  %v4828 = vpack.c.b16 %v4516, %v4510
  %v4829 = vpack.c.b16 %v4517, %v4511
  %v4830 = vpack.c.b16 %v4524, %v4518
  %v4831 = vpack.c.b16 %v4525, %v4519
  %v4832 = vpack.c.b16 %v4526, %v4520
  %v4833 = vpack.c.b16 %v4527, %v4521
  %v4834 = vpack.c.b16 %v4528, %v4522
  %v4835 = vpack.c.b16 %v4529, %v4523
  %v4836 = vpack.c.b16 %v4536, %v4530
  %v4837 = vpack.c.b16 %v4537, %v4531
  %v4838 = vpack.c.b16 %v4538, %v4532
  %v4839 = vpack.c.b16 %v4539, %v4533
  %v4840 = vpack.c.b16 %v4540, %v4534
  %v4841 = vpack.c.b16 %v4541, %v4535
  %v4842 = vpack.c.b16 %v4548, %v4542
  %v4843 = vpack.c.b16 %v4549, %v4543
  %v4844 = vpack.c.b16 %v4550, %v4544
  %v4845 = vpack.c.b16 %v4551, %v4545
  %v4846 = vpack.c.b16 %v4552, %v4546
  %v4847 = vpack.c.b16 %v4553, %v4547
  %v4848 = vpack.c.b16 %v4560, %v4554
  %v4849 = vpack.c.b16 %v4561, %v4555
  %v4850 = vpack.c.b16 %v4562, %v4556
  %v4851 = vpack.c.b16 %v4563, %v4557
  %v4852 = vpack.c.b16 %v4564, %v4558
  %v4853 = vpack.c.b16 %v4565, %v4559
  %v4854 = vpack.c.b16 %v4572, %v4566
  %v4855 = vpack.c.b16 %v4573, %v4567
  %v4856 = vpack.c.b16 %v4574, %v4568
  %v4857 = vpack.c.b16 %v4575, %v4569
  %v4858 = vpack.c.b16 %v4576, %v4570
  %v4859 = vpack.c.b16 %v4577, %v4571
  %v4860 = vpack.c.b16 %v4584, %v4578
  %v4861 = vpack.c.b16 %v4585, %v4579
  %v4862 = vpack.c.b16 %v4586, %v4580
  %v4863 = vpack.c.b16 %v4587, %v4581
  %v4864 = vpack.c.b16 %v4588, %v4582
  %v4865 = vpack.c.b16 %v4589, %v4583
  %v4866 = vpack.c.b16 %v4596, %v4590
  %v4867 = vpack.c.b16 %v4597, %v4591
  %v4868 = vpack.c.b16 %v4598, %v4592
  %v4869 = vpack.c.b16 %v4599, %v4593
  %v4870 = vpack.c.b16 %v4600, %v4594
  %v4871 = vpack.c.b16 %v4601, %v4595
  %v4872 = vpack.c.b16 %v4608, %v4602
  %v4873 = vpack.c.b16 %v4609, %v4603
  %v4874 = vpack.c.b16 %v4610, %v4604
  %v4875 = vpack.c.b16 %v4611, %v4605
  %v4876 = vpack.c.b16 %v4612, %v4606
  %v4877 = vpack.c.b16 %v4613, %v4607
  %v4878 = vpack.c.b16 %v4620, %v4614
  %v4879 = vpack.c.b16 %v4621, %v4615
  %v4880 = vpack.c.b16 %v4622, %v4616
  %v4881 = vpack.c.b16 %v4623, %v4617
  %v4882 = vpack.c.b16 %v4624, %v4618
  %v4883 = vpack.c.b16 %v4625, %v4619
  %v4884 = vpack.c.b16 %v4632, %v4626
  %v4885 = vpack.c.b16 %v4633, %v4627
  %v4886 = vpack.c.b16 %v4634, %v4628
  %v4887 = vpack.c.b16 %v4635, %v4629
  %v4888 = vpack.c.b16 %v4636, %v4630
  %v4889 = vpack.c.b16 %v4637, %v4631
  %v4890 = vpack.c.b16 %v4644, %v4638
  %v4891 = vpack.c.b16 %v4645, %v4639
  %v4892 = vpack.c.b16 %v4646, %v4640
  %v4893 = vpack.c.b16 %v4647, %v4641
  %v4894 = vpack.c.b16 %v4648, %v4642
  %v4895 = vpack.c.b16 %v4649, %v4643
  %v4896 = vpack.c.b16 %v4656, %v4650
  %v4897 = vpack.c.b16 %v4657, %v4651
  %v4898 = vpack.c.b16 %v4658, %v4652
  %v4899 = vpack.c.b16 %v4659, %v4653
  %v4900 = vpack.c.b16 %v4660, %v4654
  %v4901 = vpack.c.b16 %v4661, %v4655
  %v4902 = vpack.c.b16 %v4668, %v4662
  %v4903 = vpack.c.b16 %v4669, %v4663
  %v4904 = vpack.c.b16 %v4670, %v4664
  %v4905 = vpack.c.b16 %v4671, %v4665
  %v4906 = vpack.c.b16 %v4672, %v4666
  %v4907 = vpack.c.b16 %v4673, %v4667
  %v4908 = vpack.c.b16 %v4680, %v4674
  %v4909 = vpack.c.b16 %v4681, %v4675
  %v4910 = vpack.c.b16 %v4682, %v4676
  %v4911 = vpack.c.b16 %v4683, %v4677
  %v4912 = vpack.c.b16 %v4684, %v4678
  %v4913 = vpack.c.b16 %v4685, %v4679
  %v4914 = vpack.c.b16 %v4692, %v4686
  %v4915 = vpack.c.b16 %v4693, %v4687
  %v4916 = vpack.c.b16 %v4694, %v4688
  %v4917 = vpack.c.b16 %v4695, %v4689
  %v4918 = vpack.c.b16 %v4696, %v4690
  %v4919 = vpack.c.b16 %v4697, %v4691
  %v4920 = vpack.c.b16 %v4704, %v4698
  %v4921 = vpack.c.b16 %v4705, %v4699
  %v4922 = vpack.c.b16 %v4706, %v4700
  %v4923 = vpack.c.b16 %v4707, %v4701
  %v4924 = vpack.c.b16 %v4708, %v4702
  %v4925 = vpack.c.b16 %v4709, %v4703
  %v4926 = vpack.c.b16 %v4716, %v4710
  %v4927 = vpack.c.b16 %v4717, %v4711
  %v4928 = vpack.c.b16 %v4718, %v4712
  %v4929 = vpack.c.b16 %v4719, %v4713
  %v4930 = vpack.c.b16 %v4720, %v4714
  %v4931 = vpack.c.b16 %v4721, %v4715
  %v4932 = vpack.c.b16 %v4728, %v4722
  %v4933 = vpack.c.b16 %v4729, %v4723
  %v4934 = vpack.c.b16 %v4730, %v4724
  %v4935 = vpack.c.b16 %v4731, %v4725
  %v4936 = vpack.c.b16 %v4732, %v4726
  %v4937 = vpack.c.b16 %v4733, %v4727
  %v4938 = vpack.c.b16 %v4740, %v4734
  %v4939 = vpack.c.b16 %v4741, %v4735
  %v4940 = vpack.c.b16 %v4742, %v4736
  %v4941 = vpack.c.b16 %v4743, %v4737
  %v4942 = vpack.c.b16 %v4744, %v4738
  %v4943 = vpack.c.b16 %v4745, %v4739
  %v4944 = vpack.c.b16 %v4752, %v4746
  %v4945 = vpack.c.b16 %v4753, %v4747
  %v4946 = vpack.c.b16 %v4754, %v4748
  %v4947 = vpack.c.b16 %v4755, %v4749
  %v4948 = vpack.c.b16 %v4756, %v4750
  %v4949 = vpack.c.b16 %v4757, %v4751
  %5142 = vmatprep.subr.bf16.mxu0 %v4759
  %5143 = vmatpush1.bf16.msra.mxu0 %v4758
  %5144 = vmatprep.subr.bf16.mxu0 %v4765
  %5145 = vmatpush1.bf16.msra.mxu0 %v4764
  %5146 = vmatprep.subr.bf16.mxu0 %v4771
  %5147 = vmatpush1.bf16.msra.mxu0 %v4770
  %5148 = vmatprep.subr.bf16.mxu0 %v4777
  %5149 = vmatpush1.bf16.msra.mxu0 %v4776
  %5150 = vmatprep.subr.bf16.mxu0 %v4783
  %5151 = vmatpush1.bf16.msra.mxu0 %v4782
  %5152 = vmatprep.subr.bf16.mxu0 %v4789
  %5153 = vmatpush1.bf16.msra.mxu0 %v4788
  %5154 = vmatprep.subr.bf16.mxu0 %v4795
  %5155 = vmatpush1.bf16.msra.mxu0 %v4794
  %5156 = vmatprep.subr.bf16.mxu0 %v4801
  %5157 = vmatpush1.bf16.msra.mxu0 %v4800
  %5158 = vmatprep.subr.bf16.mxu0 %v4807
  %5159 = vmatpush1.bf16.msra.mxu0 %v4806
  %5160 = vmatprep.subr.bf16.mxu0 %v4813
  %5161 = vmatpush1.bf16.msra.mxu0 %v4812
  %5162 = vmatprep.subr.bf16.mxu0 %v4819
  %5163 = vmatpush1.bf16.msra.mxu0 %v4818
  %5164 = vmatprep.subr.bf16.mxu0 %v4825
  %5165 = vmatpush1.bf16.msra.mxu0 %v4824
  %5166 = vmatprep.subr.bf16.mxu0 %v4831
  %5167 = vmatpush1.bf16.msra.mxu0 %v4830
  %5168 = vmatprep.subr.bf16.mxu0 %v4837
  %5169 = vmatpush1.bf16.msra.mxu0 %v4836
  %5170 = vmatprep.subr.bf16.mxu0 %v4843
  %5171 = vmatpush1.bf16.msra.mxu0 %v4842
  %5172 = vmatprep.subr.bf16.mxu0 %v4849
  %5173 = vmatpush1.bf16.msra.mxu0 %v4848
  %5174 = vmatprep.mubr.bf16.mxu0 %v3931
  %5175 = vmatmul.mubr.bf16.gmra.mrb[0].mxu0 %v3930
  %v5176 = vpop.f32.mrb[0].mxu0
  %v5177 = vadd.f32 %v4155, %v5176
  %v5178 = vpop.f32.mrb[0].mxu0
  %v5179 = vadd.f32 %v4159, %v5178
  %v5180 = vpop.f32.mrb[0].mxu0
  %v5181 = vadd.f32 %v4155, %v5180
  %v5182 = vpop.f32.mrb[0].mxu0
  %v5183 = vadd.f32 %v4159, %v5182
  %5184 = vdwg.mxu0
  %5185 = vmatprep.subr.bf16.mxu0 %v4855
  %5186 = vmatpush1.bf16.msra.mxu0 %v4854
  %5187 = vmatprep.subr.bf16.mxu0 %v4861
  %5188 = vmatpush1.bf16.msra.mxu0 %v4860
  %5189 = vmatprep.subr.bf16.mxu0 %v4867
  %5190 = vmatpush1.bf16.msra.mxu0 %v4866
  %5191 = vmatprep.subr.bf16.mxu0 %v4873
  %5192 = vmatpush1.bf16.msra.mxu0 %v4872
  %5193 = vmatprep.subr.bf16.mxu0 %v4879
  %5194 = vmatpush1.bf16.msra.mxu0 %v4878
  %5195 = vmatprep.subr.bf16.mxu0 %v4885
  %5196 = vmatpush1.bf16.msra.mxu0 %v4884
  %5197 = vmatprep.subr.bf16.mxu0 %v4891
  %5198 = vmatpush1.bf16.msra.mxu0 %v4890
  %5199 = vmatprep.subr.bf16.mxu0 %v4897
  %5200 = vmatpush1.bf16.msra.mxu0 %v4896
  %5201 = vmatprep.subr.bf16.mxu0 %v4903
  %5202 = vmatpush1.bf16.msra.mxu0 %v4902
  %5203 = vmatprep.subr.bf16.mxu0 %v4909
  %5204 = vmatpush1.bf16.msra.mxu0 %v4908
  %5205 = vmatprep.subr.bf16.mxu0 %v4915
  %5206 = vmatpush1.bf16.msra.mxu0 %v4914
  %5207 = vmatprep.subr.bf16.mxu0 %v4921
  %5208 = vmatpush1.bf16.msra.mxu0 %v4920
  %5209 = vmatprep.subr.bf16.mxu0 %v4927
  %5210 = vmatpush1.bf16.msra.mxu0 %v4926
  %5211 = vmatprep.subr.bf16.mxu0 %v4933
  %5212 = vmatpush1.bf16.msra.mxu0 %v4932
  %5213 = vmatprep.subr.bf16.mxu0 %v4939
  %5214 = vmatpush1.bf16.msra.mxu0 %v4938
  %5215 = vmatprep.subr.bf16.mxu0 %v4945
  %5216 = vmatpush1.bf16.msra.mxu0 %v4944
  %5217 = vmatprep.mubr.bf16.mxu0 %v3933
  %5218 = vmatmul.mubr.bf16.gmra.mrb[0].mxu0 %v3932
  %v5219 = vpop.f32.mrb[0].mxu0
  %v5220 = vadd.f32 %v5177, %v5219
  %v5221 = vpop.f32.mrb[0].mxu0
  %v5222 = vadd.f32 %v5179, %v5221
  %v5223 = vpop.f32.mrb[0].mxu0
  %v5224 = vadd.f32 %v5181, %v5223
  %v5225 = vpop.f32.mrb[0].mxu0
  %v5226 = vadd.f32 %v5183, %v5225
  %5227 = vdwg.mxu0
  %5228 = vmatprep.subr.bf16.mxu0 %v4761
  %5229 = vmatpush1.bf16.msra.mxu0 %v4760
  %5230 = vmatprep.subr.bf16.mxu0 %v4767
  %5231 = vmatpush1.bf16.msra.mxu0 %v4766
  %5232 = vmatprep.subr.bf16.mxu0 %v4773
  %5233 = vmatpush1.bf16.msra.mxu0 %v4772
  %5234 = vmatprep.subr.bf16.mxu0 %v4779
  %5235 = vmatpush1.bf16.msra.mxu0 %v4778
  %5236 = vmatprep.subr.bf16.mxu0 %v4785
  %5237 = vmatpush1.bf16.msra.mxu0 %v4784
  %5238 = vmatprep.subr.bf16.mxu0 %v4791
  %5239 = vmatpush1.bf16.msra.mxu0 %v4790
  %5240 = vmatprep.subr.bf16.mxu0 %v4797
  %5241 = vmatpush1.bf16.msra.mxu0 %v4796
  %5242 = vmatprep.subr.bf16.mxu0 %v4803
  %5243 = vmatpush1.bf16.msra.mxu0 %v4802
  %5244 = vmatprep.subr.bf16.mxu0 %v4809
  %5245 = vmatpush1.bf16.msra.mxu0 %v4808
  %5246 = vmatprep.subr.bf16.mxu0 %v4815
  %5247 = vmatpush1.bf16.msra.mxu0 %v4814
  %5248 = vmatprep.subr.bf16.mxu0 %v4821
  %5249 = vmatpush1.bf16.msra.mxu0 %v4820
  %5250 = vmatprep.subr.bf16.mxu0 %v4827
  %5251 = vmatpush1.bf16.msra.mxu0 %v4826
  %5252 = vmatprep.subr.bf16.mxu0 %v4833
  %5253 = vmatpush1.bf16.msra.mxu0 %v4832
  %5254 = vmatprep.subr.bf16.mxu0 %v4839
  %5255 = vmatpush1.bf16.msra.mxu0 %v4838
  %5256 = vmatprep.subr.bf16.mxu0 %v4845
  %5257 = vmatpush1.bf16.msra.mxu0 %v4844
  %5258 = vmatprep.subr.bf16.mxu0 %v4851
  %5259 = vmatpush1.bf16.msra.mxu0 %v4850
  %5260 = vmatprep.mubr.bf16.mxu0 %v3931
  %5261 = vmatmul.mubr.bf16.gmra.mrb[0].mxu0 %v3930
  %v5262 = vpop.f32.mrb[0].mxu0
  %v5263 = vadd.f32 %v4163, %v5262
  %v5264 = vpop.f32.mrb[0].mxu0
  %v5265 = vadd.f32 %v4167, %v5264
  %v5266 = vpop.f32.mrb[0].mxu0
  %v5267 = vadd.f32 %v4163, %v5266
  %v5268 = vpop.f32.mrb[0].mxu0
  %v5269 = vadd.f32 %v4167, %v5268
  %5270 = vdwg.mxu0
  %5271 = vmatprep.subr.bf16.mxu0 %v4857
  %5272 = vmatpush1.bf16.msra.mxu0 %v4856
  %5273 = vmatprep.subr.bf16.mxu0 %v4863
  %5274 = vmatpush1.bf16.msra.mxu0 %v4862
  %5275 = vmatprep.subr.bf16.mxu0 %v4869
  %5276 = vmatpush1.bf16.msra.mxu0 %v4868
  %5277 = vmatprep.subr.bf16.mxu0 %v4875
  %5278 = vmatpush1.bf16.msra.mxu0 %v4874
  %5279 = vmatprep.subr.bf16.mxu0 %v4881
  %5280 = vmatpush1.bf16.msra.mxu0 %v4880
  %5281 = vmatprep.subr.bf16.mxu0 %v4887
  %5282 = vmatpush1.bf16.msra.mxu0 %v4886
  %5283 = vmatprep.subr.bf16.mxu0 %v4893
  %5284 = vmatpush1.bf16.msra.mxu0 %v4892
  %5285 = vmatprep.subr.bf16.mxu0 %v4899
  %5286 = vmatpush1.bf16.msra.mxu0 %v4898
  %5287 = vmatprep.subr.bf16.mxu0 %v4905
  %5288 = vmatpush1.bf16.msra.mxu0 %v4904
  %5289 = vmatprep.subr.bf16.mxu0 %v4911
  %5290 = vmatpush1.bf16.msra.mxu0 %v4910
  %5291 = vmatprep.subr.bf16.mxu0 %v4917
  %5292 = vmatpush1.bf16.msra.mxu0 %v4916
  %5293 = vmatprep.subr.bf16.mxu0 %v4923
  %5294 = vmatpush1.bf16.msra.mxu0 %v4922
  %5295 = vmatprep.subr.bf16.mxu0 %v4929
  %5296 = vmatpush1.bf16.msra.mxu0 %v4928
  %5297 = vmatprep.subr.bf16.mxu0 %v4935
  %5298 = vmatpush1.bf16.msra.mxu0 %v4934
  %5299 = vmatprep.subr.bf16.mxu0 %v4941
  %5300 = vmatpush1.bf16.msra.mxu0 %v4940
  %5301 = vmatprep.subr.bf16.mxu0 %v4947
  %5302 = vmatpush1.bf16.msra.mxu0 %v4946
  %5303 = vmatprep.mubr.bf16.mxu0 %v3933
  %5304 = vmatmul.mubr.bf16.gmra.mrb[0].mxu0 %v3932
  %v5305 = vpop.f32.mrb[0].mxu0
  %v5306 = vadd.f32 %v5263, %v5305
  %v5307 = vpop.f32.mrb[0].mxu0
  %v5308 = vadd.f32 %v5265, %v5307
  %v5309 = vpop.f32.mrb[0].mxu0
  %v5310 = vadd.f32 %v5267, %v5309
  %v5311 = vpop.f32.mrb[0].mxu0
  %v5312 = vadd.f32 %v5269, %v5311
  %5313 = vdwg.mxu0
  %5314 = vmatprep.subr.bf16.mxu0 %v4763
  %5315 = vmatpush1.bf16.msra.mxu0 %v4762
  %5316 = vmatprep.subr.bf16.mxu0 %v4769
  %5317 = vmatpush1.bf16.msra.mxu0 %v4768
  %5318 = vmatprep.subr.bf16.mxu0 %v4775
  %5319 = vmatpush1.bf16.msra.mxu0 %v4774
  %5320 = vmatprep.subr.bf16.mxu0 %v4781
  %5321 = vmatpush1.bf16.msra.mxu0 %v4780
  %5322 = vmatprep.subr.bf16.mxu0 %v4787
  %5323 = vmatpush1.bf16.msra.mxu0 %v4786
  %5324 = vmatprep.subr.bf16.mxu0 %v4793
  %5325 = vmatpush1.bf16.msra.mxu0 %v4792
  %5326 = vmatprep.subr.bf16.mxu0 %v4799
  %5327 = vmatpush1.bf16.msra.mxu0 %v4798
  %5328 = vmatprep.subr.bf16.mxu0 %v4805
  %5329 = vmatpush1.bf16.msra.mxu0 %v4804
  %5330 = vmatprep.subr.bf16.mxu0 %v4811
  %5331 = vmatpush1.bf16.msra.mxu0 %v4810
  %5332 = vmatprep.subr.bf16.mxu0 %v4817
  %5333 = vmatpush1.bf16.msra.mxu0 %v4816
  %5334 = vmatprep.subr.bf16.mxu0 %v4823
  %5335 = vmatpush1.bf16.msra.mxu0 %v4822
  %5336 = vmatprep.subr.bf16.mxu0 %v4829
  %5337 = vmatpush1.bf16.msra.mxu0 %v4828
  %5338 = vmatprep.subr.bf16.mxu0 %v4835
  %5339 = vmatpush1.bf16.msra.mxu0 %v4834
  %5340 = vmatprep.subr.bf16.mxu0 %v4841
  %5341 = vmatpush1.bf16.msra.mxu0 %v4840
  %5342 = vmatprep.subr.bf16.mxu0 %v4847
  %5343 = vmatpush1.bf16.msra.mxu0 %v4846
  %5344 = vmatprep.subr.bf16.mxu0 %v4853
  %5345 = vmatpush1.bf16.msra.mxu0 %v4852
  %5346 = vmatprep.mubr.bf16.mxu0 %v3931
  %5347 = vmatmul.mubr.bf16.gmra.mrb[0].mxu0 %v3930
  %v5348 = vpop.f32.mrb[0].mxu0
  %v5349 = vadd.f32 %v4171, %v5348
  %v5350 = vpop.f32.mrb[0].mxu0
  %v5351 = vadd.f32 %v4175, %v5350
  %v5352 = vpop.f32.mrb[0].mxu0
  %v5353 = vadd.f32 %v4171, %v5352
  %v5354 = vpop.f32.mrb[0].mxu0
  %v5355 = vadd.f32 %v4175, %v5354
  %5356 = vdwg.mxu0
  %5357 = vmatprep.subr.bf16.mxu0 %v4859
  %5358 = vmatpush1.bf16.msra.mxu0 %v4858
  %5359 = vmatprep.subr.bf16.mxu0 %v4865
  %5360 = vmatpush1.bf16.msra.mxu0 %v4864
  %5361 = vmatprep.subr.bf16.mxu0 %v4871
  %5362 = vmatpush1.bf16.msra.mxu0 %v4870
  %5363 = vmatprep.subr.bf16.mxu0 %v4877
  %5364 = vmatpush1.bf16.msra.mxu0 %v4876
  %5365 = vmatprep.subr.bf16.mxu0 %v4883
  %5366 = vmatpush1.bf16.msra.mxu0 %v4882
  %5367 = vmatprep.subr.bf16.mxu0 %v4889
  %5368 = vmatpush1.bf16.msra.mxu0 %v4888
  %5369 = vmatprep.subr.bf16.mxu0 %v4895
  %5370 = vmatpush1.bf16.msra.mxu0 %v4894
  %5371 = vmatprep.subr.bf16.mxu0 %v4901
  %5372 = vmatpush1.bf16.msra.mxu0 %v4900
  %5373 = vmatprep.subr.bf16.mxu0 %v4907
  %5374 = vmatpush1.bf16.msra.mxu0 %v4906
  %5375 = vmatprep.subr.bf16.mxu0 %v4913
  %5376 = vmatpush1.bf16.msra.mxu0 %v4912
  %5377 = vmatprep.subr.bf16.mxu0 %v4919
  %5378 = vmatpush1.bf16.msra.mxu0 %v4918
  %5379 = vmatprep.subr.bf16.mxu0 %v4925
  %5380 = vmatpush1.bf16.msra.mxu0 %v4924
  %5381 = vmatprep.subr.bf16.mxu0 %v4931
  %5382 = vmatpush1.bf16.msra.mxu0 %v4930
  %5383 = vmatprep.subr.bf16.mxu0 %v4937
  %5384 = vmatpush1.bf16.msra.mxu0 %v4936
  %5385 = vmatprep.subr.bf16.mxu0 %v4943
  %5386 = vmatpush1.bf16.msra.mxu0 %v4942
  %5387 = vmatprep.subr.bf16.mxu0 %v4949
  %5388 = vmatpush1.bf16.msra.mxu0 %v4948
  %5389 = vmatprep.mubr.bf16.mxu0 %v3933
  %5390 = vmatmul.mubr.bf16.gmra.mrb[0].mxu0 %v3932
  %v5391 = vpop.f32.mrb[0].mxu0
  %v5392 = vadd.f32 %v5349, %v5391
  %v5393 = vpop.f32.mrb[0].mxu0
  %v5394 = vadd.f32 %v5351, %v5393
  %v5395 = vpop.f32.mrb[0].mxu0
  %v5396 = vadd.f32 %v5353, %v5395
  %v5397 = vpop.f32.mrb[0].mxu0
  %v5398 = vadd.f32 %v5355, %v5397
  %5399 = vdwg.mxu0
  %v5400 = vpack.c.bf16 %v5224, %v5220
  %v5401 = vpack.c.bf16 %v5226, %v5222
  %v5402 = vpack.c.bf16 %v5310, %v5306
  %v5403 = vpack.c.bf16 %v5312, %v5308
  %v5404 = vpack.c.bf16 %v5396, %v5392
  %v5405 = vpack.c.bf16 %v5398, %v5394
  %v5412 = vunpack.c.l.b16 %v5400
  %v5413 = vunpack.c.l.b16 %v5401
  %v5414 = vunpack.c.l.b16 %v5402
  %v5415 = vunpack.c.l.b16 %v5403
  %v5416 = vunpack.c.l.b16 %v5404
  %v5417 = vunpack.c.l.b16 %v5405
  %v5418 = vunpack.c.h.b16 %v5400
  %v5419 = vunpack.c.h.b16 %v5401
  %v5420 = vunpack.c.h.b16 %v5402
  %v5421 = vunpack.c.h.b16 %v5403
  %v5422 = vunpack.c.h.b16 %v5404
  %v5423 = vunpack.c.h.b16 %v5405
  %v5424 = vpack.c.b16 %v5413, %v5412
  %v5425 = vpack.c.b16 %v5415, %v5414
  %v5426 = vpack.c.b16 %v5417, %v5416
  %v5427 = vpack.c.b16 %v5419, %v5418
  %v5428 = vpack.c.b16 %v5421, %v5420
  %v5429 = vpack.c.b16 %v5423, %v5422
  %5436 = vst [vmem:[%s6] sm:$0xff] %v5424
  %5437 = vst [vmem:[%s6 + $0x8] sm:$0xff] %v5425
  %5438 = vst [vmem:[%s6 + $0x10] sm:$0xff] %v5426
  %5439 = vst [vmem:[%s6 + $0x18] sm:$0xff] %v5427
  %5440 = vst [vmem:[%s6 + $0x20] sm:$0xff] %v5428
  %5441 = vst [vmem:[%s6 + $0x28] sm:$0xff] %v5429
  // Predicated region
  $region22: #{reid_forward_both.1} parent=0 // pred_check
    _
  $region23: #{reid_forward_both.1} parent=0 // pred_check_branch
    %5443 = sbr.rel (0) target = $region25
  $region24: #{reid_forward_both.1} parent=0 // pred_region
    _
  $region25: #{reid_forward_both.1} parent=0 // pred_fallthru
    _
  // Predicated region
  $region26: #{reid_forward_both.1} parent=0 // pred_check
    _
  $region27: #{reid_forward_both.1} parent=0 // pred_check_branch
    %5445 = sbr.rel (0) target = $region29
  $region28: #{reid_forward_both.1} parent=0 // pred_region
    _
  $region29: #{reid_forward_both.1} parent=0 // pred_fallthru
    _
  // Predicated region
  $region30: #{reid_forward_both.1} parent=0 // pred_check
    _
  $region31: #{reid_forward_both.1} parent=0 // pred_check_branch
    %5447 = sbr.rel (0) target = $region33
  $region32: #{reid_forward_both.1} parent=0 // pred_region
    _
  $region33: #{reid_forward_both.1} parent=0 // pred_fallthru
    _
  // Predicated region
  $region34: #{reid_forward_both.1} parent=0 // pred_check
    _
  $region35: #{reid_forward_both.1} parent=0 // pred_check_branch
    %5449 = sbr.rel (0) target = $region37
  $region36: #{reid_forward_both.1} parent=0 // pred_region
    _
  $region37: #{reid_forward_both.1} parent=0 // pred_fallthru
    _

</llo_original>
